<compile_context>
chip_gen: v7x
topology: tpu7x:2x2x1
jax: 0.10.0
libtpu: 0.0.40
codegen_flags: <defaults>
</compile_context>

<pallas_src>
import numpy as np
import jax
import jax.numpy as jnp
from jax.experimental import pallas as pl
from jax.experimental.pallas import tpu as pltpu

IMG = 224
PATCH = 16
P_GRID = IMG // PATCH            # 14
NUM_PATCH = P_GRID * P_GRID      # 196
PATCH_DIM = 3 * PATCH * PATCH    # 768
ENC_C = 128                      # widened 64->128 so matmul-1 N fills MXU lanes
LATENT = 128
DEC_H = 256
NPTS = 256                       # points per view (kept small for the demo)
PTS_DIM = 3 * NPTS               # 768, xyz-major: column = coord * NPTS + point
TM_MAX = 8                       # max images per encoder grid step


# --------------------------------------------------------------------------
# Kernel 1: fused encoder (patch-embed + ReLU + mean-pool + FC) and
#           DecoderPoint MLP, TM images per grid step.
# --------------------------------------------------------------------------
def _enc_dec_kernel(x_ref, w1_ref, b1_ref, w2_ref, b2_ref,
                    dw1_ref, db1_ref, dw2_ref, db2_ref,
                    lat_ref, pts_ref):
    tm = x_ref.shape[0]
    w1 = w1_ref[...]                                             # (D, C) bf16
    b1 = b1_ref[...]                                             # (1, C) f32
    pooled_rows = []
    for i in range(tm):                                          # static unroll
        x = x_ref[i]                                             # (P, D) bf16
        h = jnp.dot(x, w1, preferred_element_type=jnp.float32) + b1
        h = jnp.maximum(h, 0.0)                                  # (P, C) f32
        pooled_rows.append(jnp.mean(h, axis=0, keepdims=True))   # (1, C)
    pooled = jnp.concatenate(pooled_rows, axis=0)                # (tm, C)
    lat = jnp.dot(pooled, w2_ref[...],
                  preferred_element_type=jnp.float32) + b2_ref[...]
    lat_ref[...] = lat.astype(lat_ref.dtype)                     # (tm, L)

    hd = jnp.dot(lat, dw1_ref[...],
                 preferred_element_type=jnp.float32) + db1_ref[...]
    hd = jnp.maximum(hd, 0.0)                                    # (tm, H)
    pts = jnp.dot(hd, dw2_ref[...],
                  preferred_element_type=jnp.float32) + db2_ref[...]
    pts_ref[...] = pts.astype(pts_ref.dtype)                     # (tm, 3*N)


def encode_decode_pallas(patches_bf16, p):
    M = patches_bf16.shape[0]
    tm = min(TM_MAX, M)                       # adaptive tile: no padding at M<=8
    Mp = -(-M // tm) * tm
    if Mp != M:
        patches_bf16 = jnp.pad(patches_bf16, ((0, Mp - M), (0, 0), (0, 0)))
    w1b = p["enc_w1"].astype(jnp.bfloat16)

    lat, pts = pl.pallas_call(
        _enc_dec_kernel,
        out_shape=(jax.ShapeDtypeStruct((Mp, LATENT), jnp.float32),
                   jax.ShapeDtypeStruct((Mp, PTS_DIM), jnp.float32)),
        grid_spec=pltpu.PrefetchScalarGridSpec(
            num_scalar_prefetch=0,
            grid=(Mp // tm,),
            in_specs=[
                pl.BlockSpec((tm, NUM_PATCH, PATCH_DIM), lambda m: (m, 0, 0)),
                pl.BlockSpec((PATCH_DIM, ENC_C), lambda m: (0, 0)),
                pl.BlockSpec((1, ENC_C), lambda m: (0, 0)),
                pl.BlockSpec((ENC_C, LATENT), lambda m: (0, 0)),
                pl.BlockSpec((1, LATENT), lambda m: (0, 0)),
                pl.BlockSpec((LATENT, DEC_H), lambda m: (0, 0)),
                pl.BlockSpec((1, DEC_H), lambda m: (0, 0)),
                pl.BlockSpec((DEC_H, PTS_DIM), lambda m: (0, 0)),
                pl.BlockSpec((1, PTS_DIM), lambda m: (0, 0)),
            ],
            out_specs=[
                pl.BlockSpec((tm, LATENT), lambda m: (m, 0)),
                pl.BlockSpec((tm, PTS_DIM), lambda m: (m, 0)),
            ],
        ),
        compiler_params=pltpu.CompilerParams(
            dimension_semantics=("parallel",)),
    )(patches_bf16, w1b, p["enc_b1"], p["enc_w2"], p["enc_b2"],
      p["dec_w1"], p["dec_b1"], p["dec_w2"], p["dec_b2"])
    return lat[:M], pts[:M]


# --------------------------------------------------------------------------
# Kernel 2: fused (camera_trans_inv + camera_trans(main)) + view/batch
#           centering, lane-dense (.., 3, N) layout, one batch element / step.
# --------------------------------------------------------------------------
def _cam_center_kernel(pts_ref, A_ref, t_ref, allv_ref, cent_ref):
    V = pts_ref.shape[1]
    cur = []
    for v in range(V):
        p = pts_ref[0, v]                                        # (3, N)
        A = A_ref[0, v]                                          # (3, 3)
        t = t_ref[0, v]                                          # (3, 1)
        # p_cur = A @ p + t, expanded on the VPU (avoids a K=3 MXU contraction).
        pc = (A[:, 0:1] * p[0:1, :]
              + A[:, 1:2] * p[1:2, :]
              + A[:, 2:3] * p[2:3, :]) + t
        allv_ref[0, v] = pc.astype(allv_ref.dtype)
        cur.append(pc)
    pcs = jnp.stack(cur, axis=0)                                 # (V, 3, N)
    view_mean = jnp.mean(pcs, axis=2, keepdims=True)             # (V, 3, 1)
    batch_mean = jnp.mean(view_mean, axis=0, keepdims=True)      # (1, 3, 1)
    cent_ref[0] = (pcs - view_mean + batch_mean).astype(cent_ref.dtype)


def cam_center_pallas(pts_cmaj, A, t):
    B, V, _, N = pts_cmaj.shape
    return pl.pallas_call(
        _cam_center_kernel,
        out_shape=(jax.ShapeDtypeStruct((B, V, 3, N), jnp.float32),
                   jax.ShapeDtypeStruct((B, V, 3, N), jnp.float32)),
        grid_spec=pltpu.PrefetchScalarGridSpec(
            num_scalar_prefetch=0,
            grid=(B,),
            in_specs=[
                pl.BlockSpec((1, V, 3, N), lambda b: (b, 0, 0, 0)),
                pl.BlockSpec((1, V, 3, 3), lambda b: (b, 0, 0, 0)),
                pl.BlockSpec((1, V, 3, 1), lambda b: (b, 0, 0, 0)),
            ],
            out_specs=[
                pl.BlockSpec((1, V, 3, N), lambda b: (b, 0, 0, 0)),
                pl.BlockSpec((1, V, 3, N), lambda b: (b, 0, 0, 0)),
            ],
        ),
        compiler_params=pltpu.CompilerParams(
            dimension_semantics=("parallel",)),
    )(pts_cmaj, A, t)


# --------------------------------------------------------------------------
# Plain-JAX glue: patchify, camera matrices, parameter init, full forward
# --------------------------------------------------------------------------
def images_to_patches(x):
    # x: (M, 3, 224, 224) NCHW -> (M, P, C*kh*kw)
    M = x.shape[0]
    x = x.reshape(M, 3, P_GRID, PATCH, P_GRID, PATCH)
    x = jnp.transpose(x, (0, 2, 4, 1, 3, 5))        # (M, ph, pw, C, kh, kw)
    return x.reshape(M, NUM_PATCH, PATCH_DIM)


def camera_mat(param):
    # Pixel2Mesh 5-param camera: [azimuth_deg, elevation_deg, _, distance, _]
    theta = param[0] * (jnp.pi / 180.0)
    phi = param[1] * (jnp.pi / 180.0)
    camy = param[3] * jnp.sin(phi)
    lens = param[3] * jnp.cos(phi)
    camx = lens * jnp.cos(theta)
    camz = lens * jnp.sin(theta)
    Z = jnp.stack([camx, camy, camz])
    x = camy * jnp.cos(theta + jnp.pi)
    z = camy * jnp.sin(theta + jnp.pi)
    Y = jnp.stack([x, lens, z])
    X = jnp.cross(Y, Z)
    unit = lambda v: v / (jnp.linalg.norm(v) + 1e-12)
    cm = jnp.stack([unit(X), unit(Y), unit(Z)])     # (3, 3) orthonormal rotation
    return cm, Z                                    # rotation, camera position


def init_params(key):
    ks = jax.random.split(key, 8)
    s = 0.05
    return {
        "enc_w1": s * jax.random.normal(ks[0], (PATCH_DIM, ENC_C), jnp.float32),
        "enc_b1": s * jax.random.normal(ks[1], (1, ENC_C), jnp.float32),
        "enc_w2": s * jax.random.normal(ks[2], (ENC_C, LATENT), jnp.float32),
        "enc_b2": s * jax.random.normal(ks[3], (1, LATENT), jnp.float32),
        "dec_w1": s * jax.random.normal(ks[4], (LATENT, DEC_H), jnp.float32),
        "dec_b1": s * jax.random.normal(ks[5], (1, DEC_H), jnp.float32),
        # dec_w2/dec_b2 emit points xyz-major: column = coord*NPTS + point_idx
        "dec_w2": s * jax.random.normal(ks[6], (DEC_H, PTS_DIM), jnp.float32),
        "dec_b2": s * jax.random.normal(ks[7], (1, PTS_DIM), jnp.float32),
    }


def _camera_compose(cameras):
    """A = C_main @ C_v^T, t = C_main @ (pos_v - pos_main); inv(rot)==transpose."""
    B, V = cameras.shape[0], cameras.shape[1]
    cams_flat = cameras.reshape(-1, 5)
    cm_v, pos_v = jax.vmap(camera_mat)(cams_flat)                # (M,3,3),(M,3)
    cm_v = cm_v.reshape(B, V, 3, 3)
    pos_v = pos_v.reshape(B, V, 3)
    cm_main, pos_main = jax.vmap(camera_mat)(cameras[:, 0, :])   # (B,3,3),(B,3)
    A = jnp.einsum("bij,bvkj->bvik", cm_main, cm_v)              # (B,V,3,3)
    t = jnp.einsum("bij,bvj->bvi", cm_main,
                   pos_v - pos_main[:, None, :])[..., None]      # (B,V,3,1)
    return A, t


def psgn_forward(params, imgs, cameras):
    B = imgs.shape[0]
    V = cameras.shape[1]
    imgs_flat = imgs.reshape(-1, 3, IMG, IMG)

    # bf16 patches: halves HBM traffic on the memory-bound encoder path.
    patches = images_to_patches(imgs_flat.astype(jnp.bfloat16))

    latent, pts_flat = encode_decode_pallas(patches, params)     # (M,L),(M,3N)
    pts_cmaj = pts_flat.reshape(B, V, 3, NPTS)                   # lane-dense

    A, t = _camera_compose(cameras)
    allv, cent = cam_center_pallas(pts_cmaj, A, t)               # (B,V,3,N) x2

    # back to the module's (.., N, 3) convention (tiny transposes).
    points_all_views = jnp.transpose(allv, (0, 1, 3, 2)).reshape(B * V, NPTS, 3)
    points = jnp.transpose(cent, (0, 1, 3, 2)).reshape(B, V * NPTS, 3)
    return {
        "img_feat": {"latent_code": latent},
        "points": points,
        "points_all_views": points_all_views,
    }


def psgn_forward_ref(params, imgs, cameras):
    # pure-jnp reference for validation (same math, standard layouts)
    B = imgs.shape[0]
    V = cameras.shape[1]
    imgs_flat = imgs.reshape(-1, 3, IMG, IMG)
    patches = images_to_patches(imgs_flat.astype(jnp.bfloat16))
    w1b = params["enc_w1"].astype(jnp.bfloat16)
    h = jnp.maximum(jnp.dot(patches, w1b, preferred_element_type=jnp.float32)
                    + params["enc_b1"], 0.0)
    pooled = jnp.mean(h, axis=1)
    latent = pooled @ params["enc_w2"] + params["enc_b2"]
    hd = jnp.maximum(latent @ params["dec_w1"] + params["dec_b1"], 0.0)
    pts_cmaj = (hd @ params["dec_w2"] + params["dec_b2"]).reshape(-1, 3, NPTS)
    pts = jnp.transpose(pts_cmaj, (0, 2, 1))                     # (M, N, 3)

    cams_flat = cameras.reshape(-1, 5)
    cm, pos = jax.vmap(camera_mat)(cams_flat)
    # camera_trans_inv with inv(rotation) == transpose
    p_org = jnp.einsum("mnj,mji->mni", pts, cm) + pos[:, None, :]
    cm_main, pos_main = jax.vmap(camera_mat)(cameras[:, 0, :])
    cm_main_r = jnp.repeat(cm_main, V, axis=0)
    pos_main_r = jnp.repeat(pos_main, V, axis=0)
    p_cur = jnp.einsum("mnj,mij->mni", p_org - pos_main_r[:, None, :], cm_main_r)
    pts_b = p_cur.reshape(B, V, NPTS, 3)
    view_mean = jnp.mean(pts_b, axis=2, keepdims=True)
    batch_mean = jnp.mean(view_mean, axis=1, keepdims=True)
    cent = pts_b - view_mean + batch_mean
    return {
        "img_feat": {"latent_code": latent},
        "points": cent.reshape(B, V * NPTS, 3),
        "points_all_views": p_cur,
    }


if __name__ == "__main__":
    key = jax.random.PRNGKey(0)
    k_img, k_par = jax.random.split(key)
    B, V = 2, 2
    imgs = jax.random.normal(k_img, (B, V, 3, IMG, IMG), jnp.float32)
    az = jnp.array([[30.0, 120.0], [200.0, 310.0]], jnp.float32)
    el = jnp.array([[25.0, 35.0], [15.0, 40.0]], jnp.float32)
    dist = jnp.array([[1.2, 1.5], [1.8, 1.0]], jnp.float32)
    cameras = jnp.stack([az, el, jnp.zeros_like(az), dist, jnp.zeros_like(az)],
                        axis=-1)

    params = init_params(k_par)

    out = jax.jit(psgn_forward)(params, imgs, cameras)
    out = jax.block_until_ready(out)

    ref = psgn_forward_ref(params, imgs, cameras)
    np.testing.assert_allclose(np.asarray(out["img_feat"]["latent_code"]),
                               np.asarray(ref["img_feat"]["latent_code"]),
                               rtol=2e-3, atol=2e-3)
    np.testing.assert_allclose(np.asarray(out["points_all_views"]),
                               np.asarray(ref["points_all_views"]),
                               rtol=2e-3, atol=2e-3)
    np.testing.assert_allclose(np.asarray(out["points"]),
                               np.asarray(ref["points"]),
                               rtol=2e-3, atol=2e-3)
    assert out["points"].shape == (B, V * NPTS, 3)
    assert out["points_all_views"].shape == (B * V, NPTS, 3)
    print("KERNEL_OK")
</pallas_src>

<mosaic_0001>
module attributes {stable_mosaic.version = 11 : i64} {
  func.func @_enc_dec_kernel(%arg0: i32, %arg1: memref<4x196x768xbf16, #tpu.memory_space<vmem>>, %arg2: memref<768x128xbf16, #tpu.memory_space<vmem>>, %arg3: memref<1x128xf32, #tpu.memory_space<vmem>>, %arg4: memref<128x128xf32, #tpu.memory_space<vmem>>, %arg5: memref<1x128xf32, #tpu.memory_space<vmem>>, %arg6: memref<128x256xf32, #tpu.memory_space<vmem>>, %arg7: memref<1x256xf32, #tpu.memory_space<vmem>>, %arg8: memref<256x768xf32, #tpu.memory_space<vmem>>, %arg9: memref<1x768xf32, #tpu.memory_space<vmem>>, %arg10: memref<4x128xf32, #tpu.memory_space<vmem>>, %arg11: memref<4x768xf32, #tpu.memory_space<vmem>>) attributes {dimension_semantics = [#tpu.dimension_semantics<parallel>], iteration_bounds = array<i64: 1>, scalar_prefetch = 0 : i64, scratch_operands = 0 : i64, tpu.core_type = #tpu.core_type<tc>, window_params = [{transform_indices = @transform_0, window_bounds = array<i64: 4, 196, 768>}, {pipeline_mode = #tpu.pipeline_mode<synchronous>, transform_indices = @transform_1, window_bounds = array<i64: 768, 128>}, {pipeline_mode = #tpu.pipeline_mode<synchronous>, transform_indices = @transform_2, window_bounds = array<i64: 1, 128>}, {pipeline_mode = #tpu.pipeline_mode<synchronous>, transform_indices = @transform_3, window_bounds = array<i64: 128, 128>}, {pipeline_mode = #tpu.pipeline_mode<synchronous>, transform_indices = @transform_4, window_bounds = array<i64: 1, 128>}, {pipeline_mode = #tpu.pipeline_mode<synchronous>, transform_indices = @transform_5, window_bounds = array<i64: 128, 256>}, {pipeline_mode = #tpu.pipeline_mode<synchronous>, transform_indices = @transform_6, window_bounds = array<i64: 1, 256>}, {pipeline_mode = #tpu.pipeline_mode<synchronous>, transform_indices = @transform_7, window_bounds = array<i64: 256, 768>}, {pipeline_mode = #tpu.pipeline_mode<synchronous>, transform_indices = @transform_8, window_bounds = array<i64: 1, 768>}, {transform_indices = @transform_9, window_bounds = array<i64: 4, 128>}, {transform_indices = @transform_10, window_bounds = array<i64: 4, 768>}]} {
    %c0 = arith.constant 0 : index
    %c0_0 = arith.constant 0 : index
    %0 = vector.load %arg2[%c0, %c0_0] : memref<768x128xbf16, #tpu.memory_space<vmem>>, vector<768x128xbf16>
    %c0_1 = arith.constant 0 : index
    %c0_2 = arith.constant 0 : index
    %1 = vector.load %arg3[%c0_1, %c0_2] : memref<1x128xf32, #tpu.memory_space<vmem>>, vector<1x128xf32>
    %c0_3 = arith.constant 0 : index
    %c0_4 = arith.constant 0 : index
    %c0_5 = arith.constant 0 : index
    %2 = vector.load %arg1[%c0_3, %c0_4, %c0_5] : memref<4x196x768xbf16, #tpu.memory_space<vmem>>, vector<1x196x768xbf16>
    %3 = vector.shape_cast %2 : vector<1x196x768xbf16> to vector<196x768xbf16>
    %cst = arith.constant dense<0.000000e+00> : vector<196x128xf32>
    %4 = tpu.matmul %3, %0, %cst {dimension_numbers = #tpu.dot_dimension_numbers<[1], [0], [0], [1], [0, 0, 1, 1], [], []>} : vector<196x768xbf16>, vector<768x128xbf16>, vector<196x128xf32> -> vector<196x128xf32>
    %5 = vector.broadcast %1 : vector<1x128xf32> to vector<196x128xf32>
    %6 = arith.addf %4, %5 : vector<196x128xf32>
    %cst_6 = arith.constant 0.000000e+00 : f32
    %7 = vector.broadcast %cst_6 : f32 to vector<196x128xf32>
    %8 = arith.maximumf %6, %7 : vector<196x128xf32>
    %cst_7 = arith.constant dense<0.000000e+00> : vector<128xf32>
    %9 = vector.multi_reduction <add>, %8, %cst_7 [0] : vector<196x128xf32> to vector<128xf32>
    %10 = vector.shape_cast %9 : vector<128xf32> to vector<1x128xf32>
    %cst_8 = arith.constant 1.960000e+02 : f32
    %11 = vector.broadcast %cst_8 : f32 to vector<1x128xf32>
    %12 = arith.divf %10, %11 : vector<1x128xf32>
    %c1 = arith.constant 1 : index
    %c0_9 = arith.constant 0 : index
    %c0_10 = arith.constant 0 : index
    %13 = vector.load %arg1[%c1, %c0_9, %c0_10] : memref<4x196x768xbf16, #tpu.memory_space<vmem>>, vector<1x196x768xbf16>
    %14 = vector.shape_cast %13 : vector<1x196x768xbf16> to vector<196x768xbf16>
    %cst_11 = arith.constant dense<0.000000e+00> : vector<196x128xf32>
    %15 = tpu.matmul %14, %0, %cst_11 {dimension_numbers = #tpu.dot_dimension_numbers<[1], [0], [0], [1], [0, 0, 1, 1], [], []>} : vector<196x768xbf16>, vector<768x128xbf16>, vector<196x128xf32> -> vector<196x128xf32>
    %16 = vector.broadcast %1 : vector<1x128xf32> to vector<196x128xf32>
    %17 = arith.addf %15, %16 : vector<196x128xf32>
    %cst_12 = arith.constant 0.000000e+00 : f32
    %18 = vector.broadcast %cst_12 : f32 to vector<196x128xf32>
    %19 = arith.maximumf %17, %18 : vector<196x128xf32>
    %cst_13 = arith.constant dense<0.000000e+00> : vector<128xf32>
    %20 = vector.multi_reduction <add>, %19, %cst_13 [0] : vector<196x128xf32> to vector<128xf32>
    %21 = vector.shape_cast %20 : vector<128xf32> to vector<1x128xf32>
    %cst_14 = arith.constant 1.960000e+02 : f32
    %22 = vector.broadcast %cst_14 : f32 to vector<1x128xf32>
    %23 = arith.divf %21, %22 : vector<1x128xf32>
    %c2 = arith.constant 2 : index
    %c0_15 = arith.constant 0 : index
    %c0_16 = arith.constant 0 : index
    %24 = vector.load %arg1[%c2, %c0_15, %c0_16] : memref<4x196x768xbf16, #tpu.memory_space<vmem>>, vector<1x196x768xbf16>
    %25 = vector.shape_cast %24 : vector<1x196x768xbf16> to vector<196x768xbf16>
    %cst_17 = arith.constant dense<0.000000e+00> : vector<196x128xf32>
    %26 = tpu.matmul %25, %0, %cst_17 {dimension_numbers = #tpu.dot_dimension_numbers<[1], [0], [0], [1], [0, 0, 1, 1], [], []>} : vector<196x768xbf16>, vector<768x128xbf16>, vector<196x128xf32> -> vector<196x128xf32>
    %27 = vector.broadcast %1 : vector<1x128xf32> to vector<196x128xf32>
    %28 = arith.addf %26, %27 : vector<196x128xf32>
    %cst_18 = arith.constant 0.000000e+00 : f32
    %29 = vector.broadcast %cst_18 : f32 to vector<196x128xf32>
    %30 = arith.maximumf %28, %29 : vector<196x128xf32>
    %cst_19 = arith.constant dense<0.000000e+00> : vector<128xf32>
    %31 = vector.multi_reduction <add>, %30, %cst_19 [0] : vector<196x128xf32> to vector<128xf32>
    %32 = vector.shape_cast %31 : vector<128xf32> to vector<1x128xf32>
    %cst_20 = arith.constant 1.960000e+02 : f32
    %33 = vector.broadcast %cst_20 : f32 to vector<1x128xf32>
    %34 = arith.divf %32, %33 : vector<1x128xf32>
    %c3 = arith.constant 3 : index
    %c0_21 = arith.constant 0 : index
    %c0_22 = arith.constant 0 : index
    %35 = vector.load %arg1[%c3, %c0_21, %c0_22] : memref<4x196x768xbf16, #tpu.memory_space<vmem>>, vector<1x196x768xbf16>
    %36 = vector.shape_cast %35 : vector<1x196x768xbf16> to vector<196x768xbf16>
    %cst_23 = arith.constant dense<0.000000e+00> : vector<196x128xf32>
    %37 = tpu.matmul %36, %0, %cst_23 {dimension_numbers = #tpu.dot_dimension_numbers<[1], [0], [0], [1], [0, 0, 1, 1], [], []>} : vector<196x768xbf16>, vector<768x128xbf16>, vector<196x128xf32> -> vector<196x128xf32>
    %38 = vector.broadcast %1 : vector<1x128xf32> to vector<196x128xf32>
    %39 = arith.addf %37, %38 : vector<196x128xf32>
    %cst_24 = arith.constant 0.000000e+00 : f32
    %40 = vector.broadcast %cst_24 : f32 to vector<196x128xf32>
    %41 = arith.maximumf %39, %40 : vector<196x128xf32>
    %cst_25 = arith.constant dense<0.000000e+00> : vector<128xf32>
    %42 = vector.multi_reduction <add>, %41, %cst_25 [0] : vector<196x128xf32> to vector<128xf32>
    %43 = vector.shape_cast %42 : vector<128xf32> to vector<1x128xf32>
    %cst_26 = arith.constant 1.960000e+02 : f32
    %44 = vector.broadcast %cst_26 : f32 to vector<1x128xf32>
    %45 = arith.divf %43, %44 : vector<1x128xf32>
    %46 = tpu.concatenate %12, %23, %34, %45 in 0 : vector<1x128xf32>, vector<1x128xf32>, vector<1x128xf32>, vector<1x128xf32> -> vector<4x128xf32>
    %c0_27 = arith.constant 0 : index
    %c0_28 = arith.constant 0 : index
    %47 = vector.load %arg4[%c0_27, %c0_28] : memref<128x128xf32, #tpu.memory_space<vmem>>, vector<128x128xf32>
    %cst_29 = arith.constant dense<0.000000e+00> : vector<4x128xf32>
    %48 = tpu.matmul %46, %47, %cst_29 {dimension_numbers = #tpu.dot_dimension_numbers<[1], [0], [0], [1], [0, 0, 1, 1], [], []>} : vector<4x128xf32>, vector<128x128xf32>, vector<4x128xf32> -> vector<4x128xf32>
    %c0_30 = arith.constant 0 : index
    %c0_31 = arith.constant 0 : index
    %49 = vector.load %arg5[%c0_30, %c0_31] : memref<1x128xf32, #tpu.memory_space<vmem>>, vector<1x128xf32>
    %50 = vector.broadcast %49 : vector<1x128xf32> to vector<4x128xf32>
    %51 = arith.addf %48, %50 : vector<4x128xf32>
    %c0_32 = arith.constant 0 : index
    %c0_33 = arith.constant 0 : index
    %52 = vector.load %arg10[%c0_32, %c0_33] : memref<4x128xf32, #tpu.memory_space<vmem>>, vector<4x128xf32>
    tpu.vector_store %arg10[%c0_32, %c0_33], %51 {strides = array<i32>} : memref<4x128xf32, #tpu.memory_space<vmem>>, vector<4x128xf32>,
    %c0_34 = arith.constant 0 : index
    %c0_35 = arith.constant 0 : index
    %53 = vector.load %arg6[%c0_34, %c0_35] : memref<128x256xf32, #tpu.memory_space<vmem>>, vector<128x256xf32>
    %cst_36 = arith.constant dense<0.000000e+00> : vector<4x256xf32>
    %54 = tpu.matmul %51, %53, %cst_36 {dimension_numbers = #tpu.dot_dimension_numbers<[1], [0], [0], [1], [0, 0, 1, 1], [], []>} : vector<4x128xf32>, vector<128x256xf32>, vector<4x256xf32> -> vector<4x256xf32>
    %c0_37 = arith.constant 0 : index
    %c0_38 = arith.constant 0 : index
    %55 = vector.load %arg7[%c0_37, %c0_38] : memref<1x256xf32, #tpu.memory_space<vmem>>, vector<1x256xf32>
    %56 = vector.broadcast %55 : vector<1x256xf32> to vector<4x256xf32>
    %57 = arith.addf %54, %56 : vector<4x256xf32>
    %cst_39 = arith.constant 0.000000e+00 : f32
    %58 = vector.broadcast %cst_39 : f32 to vector<4x256xf32>
    %59 = arith.maximumf %57, %58 : vector<4x256xf32>
    %c0_40 = arith.constant 0 : index
    %c0_41 = arith.constant 0 : index
    %60 = vector.load %arg8[%c0_40, %c0_41] : memref<256x768xf32, #tpu.memory_space<vmem>>, vector<256x768xf32>
    %cst_42 = arith.constant dense<0.000000e+00> : vector<4x768xf32>
    %61 = tpu.matmul %59, %60, %cst_42 {dimension_numbers = #tpu.dot_dimension_numbers<[1], [0], [0], [1], [0, 0, 1, 1], [], []>} : vector<4x256xf32>, vector<256x768xf32>, vector<4x768xf32> -> vector<4x768xf32>
    %c0_43 = arith.constant 0 : index
    %c0_44 = arith.constant 0 : index
    %62 = vector.load %arg9[%c0_43, %c0_44] : memref<1x768xf32, #tpu.memory_space<vmem>>, vector<1x768xf32>
    %63 = vector.broadcast %62 : vector<1x768xf32> to vector<4x768xf32>
    %64 = arith.addf %61, %63 : vector<4x768xf32>
    %c0_45 = arith.constant 0 : index
    %c0_46 = arith.constant 0 : index
    %65 = vector.load %arg11[%c0_45, %c0_46] : memref<4x768xf32, #tpu.memory_space<vmem>>, vector<4x768xf32>
    tpu.vector_store %arg11[%c0_45, %c0_46], %64 {strides = array<i32>} : memref<4x768xf32, #tpu.memory_space<vmem>>, vector<4x768xf32>,
    return
  }
  func.func @transform_0(%arg0: i32) -> (i32, i32, i32) {
    %c0_i32 = arith.constant 0 : i32
    %c0_i32_0 = arith.constant 0 : i32
    %c0_i32_1 = arith.constant 0 : i32
    return %arg0, %c0_i32, %c0_i32_0 : i32, i32, i32
  }
  func.func @transform_1(%arg0: i32) -> (i32, i32) {
    %c0_i32 = arith.constant 0 : i32
    %c0_i32_0 = arith.constant 0 : i32
    %c0_i32_1 = arith.constant 0 : i32
    return %c0_i32, %c0_i32_0 : i32, i32
  }
  func.func @transform_2(%arg0: i32) -> (i32, i32) {
    %c0_i32 = arith.constant 0 : i32
    %c0_i32_0 = arith.constant 0 : i32
    %c0_i32_1 = arith.constant 0 : i32
    return %c0_i32, %c0_i32_0 : i32, i32
  }
  func.func @transform_3(%arg0: i32) -> (i32, i32) {
    %c0_i32 = arith.constant 0 : i32
    %c0_i32_0 = arith.constant 0 : i32
    %c0_i32_1 = arith.constant 0 : i32
    return %c0_i32, %c0_i32_0 : i32, i32
  }
  func.func @transform_4(%arg0: i32) -> (i32, i32) {
    %c0_i32 = arith.constant 0 : i32
    %c0_i32_0 = arith.constant 0 : i32
    %c0_i32_1 = arith.constant 0 : i32
    return %c0_i32, %c0_i32_0 : i32, i32
  }
  func.func @transform_5(%arg0: i32) -> (i32, i32) {
    %c0_i32 = arith.constant 0 : i32
    %c0_i32_0 = arith.constant 0 : i32
    %c0_i32_1 = arith.constant 0 : i32
    return %c0_i32, %c0_i32_0 : i32, i32
  }
  func.func @transform_6(%arg0: i32) -> (i32, i32) {
    %c0_i32 = arith.constant 0 : i32
    %c0_i32_0 = arith.constant 0 : i32
    %c0_i32_1 = arith.constant 0 : i32
    return %c0_i32, %c0_i32_0 : i32, i32
  }
  func.func @transform_7(%arg0: i32) -> (i32, i32) {
    %c0_i32 = arith.constant 0 : i32
    %c0_i32_0 = arith.constant 0 : i32
    %c0_i32_1 = arith.constant 0 : i32
    return %c0_i32, %c0_i32_0 : i32, i32
  }
  func.func @transform_8(%arg0: i32) -> (i32, i32) {
    %c0_i32 = arith.constant 0 : i32
    %c0_i32_0 = arith.constant 0 : i32
    %c0_i32_1 = arith.constant 0 : i32
    return %c0_i32, %c0_i32_0 : i32, i32
  }
  func.func @transform_9(%arg0: i32) -> (i32, i32) {
    %c0_i32 = arith.constant 0 : i32
    %c0_i32_0 = arith.constant 0 : i32
    return %arg0, %c0_i32 : i32, i32
  }
  func.func @transform_10(%arg0: i32) -> (i32, i32) {
    %c0_i32 = arith.constant 0 : i32
    %c0_i32_0 = arith.constant 0 : i32
    return %arg0, %c0_i32 : i32, i32
  }
}

module attributes {stable_mosaic.version = 11 : i64} {
  func.func @_cam_center_kernel(%arg0: i32, %arg1: memref<1x2x3x256xf32, #tpu.memory_space<vmem>>, %arg2: memref<1x2x3x3xf32, #tpu.memory_space<vmem>>, %arg3: memref<1x2x3x1xf32, #tpu.memory_space<vmem>>, %arg4: memref<1x2x3x256xf32, #tpu.memory_space<vmem>>, %arg5: memref<1x2x3x256xf32, #tpu.memory_space<vmem>>) attributes {dimension_semantics = [#tpu.dimension_semantics<parallel>], iteration_bounds = array<i64: 2>, scalar_prefetch = 0 : i64, scratch_operands = 0 : i64, tpu.core_type = #tpu.core_type<tc>, window_params = [{transform_indices = @transform_0, window_bounds = array<i64: 1, 2, 3, 256>}, {transform_indices = @transform_1, window_bounds = array<i64: 1, 2, 3, 3>}, {transform_indices = @transform_2, window_bounds = array<i64: 1, 2, 3, 1>}, {transform_indices = @transform_3, window_bounds = array<i64: 1, 2, 3, 256>}, {transform_indices = @transform_4, window_bounds = array<i64: 1, 2, 3, 256>}]} {
    %c0 = arith.constant 0 : index
    %c0_0 = arith.constant 0 : index
    %c0_1 = arith.constant 0 : index
    %c0_2 = arith.constant 0 : index
    %0 = vector.load %arg1[%c0, %c0_0, %c0_1, %c0_2] : memref<1x2x3x256xf32, #tpu.memory_space<vmem>>, vector<1x1x3x256xf32>
    %1 = vector.shape_cast %0 : vector<1x1x3x256xf32> to vector<3x256xf32>
    %c0_3 = arith.constant 0 : index
    %c0_4 = arith.constant 0 : index
    %c0_5 = arith.constant 0 : index
    %c0_6 = arith.constant 0 : index
    %2 = vector.load %arg2[%c0_3, %c0_4, %c0_5, %c0_6] : memref<1x2x3x3xf32, #tpu.memory_space<vmem>>, vector<1x1x3x3xf32>
    %3 = vector.shape_cast %2 : vector<1x1x3x3xf32> to vector<3x3xf32>
    %c0_7 = arith.constant 0 : index
    %c0_8 = arith.constant 0 : index
    %c0_9 = arith.constant 0 : index
    %c0_10 = arith.constant 0 : index
    %4 = vector.load %arg3[%c0_7, %c0_8, %c0_9, %c0_10] : memref<1x2x3x1xf32, #tpu.memory_space<vmem>>, vector<1x1x3x1xf32>
    %5 = vector.shape_cast %4 : vector<1x1x3x1xf32> to vector<3x1xf32>
    %6 = vector.extract_strided_slice %3 {offsets = [0, 0], sizes = [3, 1], strides = [1, 1]} : vector<3x3xf32> to vector<3x1xf32>
    %7 = vector.extract_strided_slice %1 {offsets = [0, 0], sizes = [1, 256], strides = [1, 1]} : vector<3x256xf32> to vector<1x256xf32>
    %8 = vector.broadcast %6 : vector<3x1xf32> to vector<3x256xf32>
    %9 = vector.broadcast %7 : vector<1x256xf32> to vector<3x256xf32>
    %10 = arith.mulf %8, %9 : vector<3x256xf32>
    %11 = vector.extract_strided_slice %3 {offsets = [0, 1], sizes = [3, 1], strides = [1, 1]} : vector<3x3xf32> to vector<3x1xf32>
    %12 = vector.extract_strided_slice %1 {offsets = [1, 0], sizes = [1, 256], strides = [1, 1]} : vector<3x256xf32> to vector<1x256xf32>
    %13 = vector.broadcast %11 : vector<3x1xf32> to vector<3x256xf32>
    %14 = vector.broadcast %12 : vector<1x256xf32> to vector<3x256xf32>
    %15 = arith.mulf %13, %14 : vector<3x256xf32>
    %16 = arith.addf %10, %15 : vector<3x256xf32>
    %17 = vector.extract_strided_slice %3 {offsets = [0, 2], sizes = [3, 1], strides = [1, 1]} : vector<3x3xf32> to vector<3x1xf32>
    %18 = vector.extract_strided_slice %1 {offsets = [2, 0], sizes = [1, 256], strides = [1, 1]} : vector<3x256xf32> to vector<1x256xf32>
    %19 = vector.broadcast %17 : vector<3x1xf32> to vector<3x256xf32>
    %20 = vector.broadcast %18 : vector<1x256xf32> to vector<3x256xf32>
    %21 = arith.mulf %19, %20 : vector<3x256xf32>
    %22 = arith.addf %16, %21 : vector<3x256xf32>
    %23 = vector.broadcast %5 : vector<3x1xf32> to vector<3x256xf32>
    %24 = arith.addf %22, %23 : vector<3x256xf32>
    %c0_11 = arith.constant 0 : index
    %c0_12 = arith.constant 0 : index
    %c0_13 = arith.constant 0 : index
    %c0_14 = arith.constant 0 : index
    %25 = vector.load %arg4[%c0_11, %c0_12, %c0_13, %c0_14] : memref<1x2x3x256xf32, #tpu.memory_space<vmem>>, vector<1x1x3x256xf32>
    %26 = vector.shape_cast %25 : vector<1x1x3x256xf32> to vector<3x256xf32>
    %27 = vector.shape_cast %24 : vector<3x256xf32> to vector<1x1x3x256xf32>
    tpu.vector_store %arg4[%c0_11, %c0_12, %c0_13, %c0_14], %27 {strides = array<i32>} : memref<1x2x3x256xf32, #tpu.memory_space<vmem>>, vector<1x1x3x256xf32>,
    %c0_15 = arith.constant 0 : index
    %c1 = arith.constant 1 : index
    %c0_16 = arith.constant 0 : index
    %c0_17 = arith.constant 0 : index
    %28 = vector.load %arg1[%c0_15, %c1, %c0_16, %c0_17] : memref<1x2x3x256xf32, #tpu.memory_space<vmem>>, vector<1x1x3x256xf32>
    %29 = vector.shape_cast %28 : vector<1x1x3x256xf32> to vector<3x256xf32>
    %c0_18 = arith.constant 0 : index
    %c1_19 = arith.constant 1 : index
    %c0_20 = arith.constant 0 : index
    %c0_21 = arith.constant 0 : index
    %30 = vector.load %arg2[%c0_18, %c1_19, %c0_20, %c0_21] : memref<1x2x3x3xf32, #tpu.memory_space<vmem>>, vector<1x1x3x3xf32>
    %31 = vector.shape_cast %30 : vector<1x1x3x3xf32> to vector<3x3xf32>
    %c0_22 = arith.constant 0 : index
    %c1_23 = arith.constant 1 : index
    %c0_24 = arith.constant 0 : index
    %c0_25 = arith.constant 0 : index
    %32 = vector.load %arg3[%c0_22, %c1_23, %c0_24, %c0_25] : memref<1x2x3x1xf32, #tpu.memory_space<vmem>>, vector<1x1x3x1xf32>
    %33 = vector.shape_cast %32 : vector<1x1x3x1xf32> to vector<3x1xf32>
    %34 = vector.extract_strided_slice %31 {offsets = [0, 0], sizes = [3, 1], strides = [1, 1]} : vector<3x3xf32> to vector<3x1xf32>
    %35 = vector.extract_strided_slice %29 {offsets = [0, 0], sizes = [1, 256], strides = [1, 1]} : vector<3x256xf32> to vector<1x256xf32>
    %36 = vector.broadcast %34 : vector<3x1xf32> to vector<3x256xf32>
    %37 = vector.broadcast %35 : vector<1x256xf32> to vector<3x256xf32>
    %38 = arith.mulf %36, %37 : vector<3x256xf32>
    %39 = vector.extract_strided_slice %31 {offsets = [0, 1], sizes = [3, 1], strides = [1, 1]} : vector<3x3xf32> to vector<3x1xf32>
    %40 = vector.extract_strided_slice %29 {offsets = [1, 0], sizes = [1, 256], strides = [1, 1]} : vector<3x256xf32> to vector<1x256xf32>
    %41 = vector.broadcast %39 : vector<3x1xf32> to vector<3x256xf32>
    %42 = vector.broadcast %40 : vector<1x256xf32> to vector<3x256xf32>
    %43 = arith.mulf %41, %42 : vector<3x256xf32>
    %44 = arith.addf %38, %43 : vector<3x256xf32>
    %45 = vector.extract_strided_slice %31 {offsets = [0, 2], sizes = [3, 1], strides = [1, 1]} : vector<3x3xf32> to vector<3x1xf32>
    %46 = vector.extract_strided_slice %29 {offsets = [2, 0], sizes = [1, 256], strides = [1, 1]} : vector<3x256xf32> to vector<1x256xf32>
    %47 = vector.broadcast %45 : vector<3x1xf32> to vector<3x256xf32>
    %48 = vector.broadcast %46 : vector<1x256xf32> to vector<3x256xf32>
    %49 = arith.mulf %47, %48 : vector<3x256xf32>
    %50 = arith.addf %44, %49 : vector<3x256xf32>
    %51 = vector.broadcast %33 : vector<3x1xf32> to vector<3x256xf32>
    %52 = arith.addf %50, %51 : vector<3x256xf32>
    %c0_26 = arith.constant 0 : index
    %c1_27 = arith.constant 1 : index
    %c0_28 = arith.constant 0 : index
    %c0_29 = arith.constant 0 : index
    %53 = vector.load %arg4[%c0_26, %c1_27, %c0_28, %c0_29] : memref<1x2x3x256xf32, #tpu.memory_space<vmem>>, vector<1x1x3x256xf32>
    %54 = vector.shape_cast %53 : vector<1x1x3x256xf32> to vector<3x256xf32>
    %55 = vector.shape_cast %52 : vector<3x256xf32> to vector<1x1x3x256xf32>
    tpu.vector_store %arg4[%c0_26, %c1_27, %c0_28, %c0_29], %55 {strides = array<i32>} : memref<1x2x3x256xf32, #tpu.memory_space<vmem>>, vector<1x1x3x256xf32>,
    %56 = vector.shape_cast %24 : vector<3x256xf32> to vector<1x3x256xf32>
    %57 = vector.shape_cast %52 : vector<3x256xf32> to vector<1x3x256xf32>
    %58 = tpu.concatenate %56, %57 in 0 : vector<1x3x256xf32>, vector<1x3x256xf32> -> vector<2x3x256xf32>
    %cst = arith.constant dense<0.000000e+00> : vector<2x3xf32>
    %59 = vector.multi_reduction <add>, %58, %cst [2] : vector<2x3x256xf32> to vector<2x3xf32>
    %60 = vector.shape_cast %59 : vector<2x3xf32> to vector<2x3x1xf32>
    %cst_30 = arith.constant 2.560000e+02 : f32
    %61 = vector.broadcast %cst_30 : f32 to vector<2x3x1xf32>
    %62 = arith.divf %60, %61 : vector<2x3x1xf32>
    %cst_31 = arith.constant dense<0.000000e+00> : vector<3x1xf32>
    %63 = vector.multi_reduction <add>, %62, %cst_31 [0] : vector<2x3x1xf32> to vector<3x1xf32>
    %64 = vector.shape_cast %63 : vector<3x1xf32> to vector<1x3x1xf32>
    %cst_32 = arith.constant 2.000000e+00 : f32
    %65 = vector.broadcast %cst_32 : f32 to vector<1x3x1xf32>
    %66 = arith.divf %64, %65 : vector<1x3x1xf32>
    %67 = vector.broadcast %62 : vector<2x3x1xf32> to vector<2x3x256xf32>
    %68 = arith.subf %58, %67 : vector<2x3x256xf32>
    %69 = vector.broadcast %66 : vector<1x3x1xf32> to vector<2x3x256xf32>
    %70 = arith.addf %68, %69 : vector<2x3x256xf32>
    %c0_33 = arith.constant 0 : index
    %c0_34 = arith.constant 0 : index
    %c0_35 = arith.constant 0 : index
    %c0_36 = arith.constant 0 : index
    %71 = vector.load %arg5[%c0_33, %c0_34, %c0_35, %c0_36] : memref<1x2x3x256xf32, #tpu.memory_space<vmem>>, vector<1x2x3x256xf32>
    %72 = vector.shape_cast %71 : vector<1x2x3x256xf32> to vector<2x3x256xf32>
    %73 = vector.shape_cast %70 : vector<2x3x256xf32> to vector<1x2x3x256xf32>
    tpu.vector_store %arg5[%c0_33, %c0_34, %c0_35, %c0_36], %73 {strides = array<i32>} : memref<1x2x3x256xf32, #tpu.memory_space<vmem>>, vector<1x2x3x256xf32>,
    return
  }
  func.func @transform_0(%arg0: i32) -> (i32, i32, i32, i32) {
    %c0_i32 = arith.constant 0 : i32
    %c0_i32_0 = arith.constant 0 : i32
    %c0_i32_1 = arith.constant 0 : i32
    %c0_i32_2 = arith.constant 0 : i32
    return %arg0, %c0_i32, %c0_i32_0, %c0_i32_1 : i32, i32, i32, i32
  }
  func.func @transform_1(%arg0: i32) -> (i32, i32, i32, i32) {
    %c0_i32 = arith.constant 0 : i32
    %c0_i32_0 = arith.constant 0 : i32
    %c0_i32_1 = arith.constant 0 : i32
    %c0_i32_2 = arith.constant 0 : i32
    return %arg0, %c0_i32, %c0_i32_0, %c0_i32_1 : i32, i32, i32, i32
  }
  func.func @transform_2(%arg0: i32) -> (i32, i32, i32, i32) {
    %c0_i32 = arith.constant 0 : i32
    %c0_i32_0 = arith.constant 0 : i32
    %c0_i32_1 = arith.constant 0 : i32
    %c0_i32_2 = arith.constant 0 : i32
    return %arg0, %c0_i32, %c0_i32_0, %c0_i32_1 : i32, i32, i32, i32
  }
  func.func @transform_3(%arg0: i32) -> (i32, i32, i32, i32) {
    %c0_i32 = arith.constant 0 : i32
    %c0_i32_0 = arith.constant 0 : i32
    %c0_i32_1 = arith.constant 0 : i32
    %c0_i32_2 = arith.constant 0 : i32
    return %arg0, %c0_i32, %c0_i32_0, %c0_i32_1 : i32, i32, i32, i32
  }
  func.func @transform_4(%arg0: i32) -> (i32, i32, i32, i32) {
    %c0_i32 = arith.constant 0 : i32
    %c0_i32_0 = arith.constant 0 : i32
    %c0_i32_1 = arith.constant 0 : i32
    %c0_i32_2 = arith.constant 0 : i32
    return %arg0, %c0_i32, %c0_i32_0, %c0_i32_1 : i32, i32, i32, i32
  }
}

</mosaic_0001>

<llo_original>
// kernel: psgn_forward.2
$region0: #{psgn_forward.2}
  #allocation0 [shape = 'u32[]', space=smem, size = 0x4, offset = 0x4, fixed_abs, tag = 'smem constant byte address 0x4 - core index']
  #allocation1 [shape = 'u32[144,128]{1,0:T(1,128)}', space=vmem, size = 0x12000, scoped, tag = 'internal scratch']
  %s0 = inlined_call_operand.vmem [shape: bf16[4,196,768], index: 0, kind: input, shape index: {}]
  %s1 = inlined_call_operand.vmem [shape: bf16[768,128], index: 1, kind: input, shape index: {}]
  %s2 = inlined_call_operand.vmem [shape: f32[1,128], index: 2, kind: input, shape index: {}]
  %s3 = inlined_call_operand.vmem [shape: f32[128,128], index: 3, kind: input, shape index: {}]
  %s4 = inlined_call_operand.vmem [shape: f32[1,128], index: 4, kind: input, shape index: {}]
  %s5 = inlined_call_operand.vmem [shape: f32[128,256], index: 5, kind: input, shape index: {}]
  %s6 = inlined_call_operand.vmem [shape: f32[1,256], index: 6, kind: input, shape index: {}]
  %s7 = inlined_call_operand.vmem [shape: f32[256,768], index: 7, kind: input, shape index: {}]
  %s8 = inlined_call_operand.vmem [shape: f32[1,768], index: 8, kind: input, shape index: {}]
  %s9 = inlined_call_operand.hbm [shape: f32[4,128], index: 9, kind: output, shape index: {0}]
  %s10 = inlined_call_operand.vmem [shape: f32[4,768], index: 10, kind: output, shape index: {1}]
  %11 = xla_tuple %s9, %s10
  %s12 = sld [smem:[#allocation0]]
  $region54: #{psgn_forward.2} parent=0
    _
  %s14 = ssub.s32 1, %s12
  %s15 = scalar_select 0, %s14, %s12
  $region1: #{psgn_forward.2} parent=0
    #allocation2 [shape = 'u8[2048]{0}', space=vmem, size = 0x800, scoped, tag = 'output window, operand 0, single buffered']
    #allocation3 [shape = 's32[1]{0}', space=sflag, size = 0x4, scoped, tag = 'scoped memory for psgn_forward.2']
    %16 = vsyncpa [#allocation3], 0
    // Predicated region
    $region2: #{psgn_forward.2} parent=1 // pred_check
      _
    $region3: #{psgn_forward.2} parent=1 // pred_check_branch
      %18 = sbr.rel (0) target = $region5
    $region4: #{psgn_forward.2} parent=1 // pred_region
      _
    $region5: #{psgn_forward.2} parent=1 // pred_fallthru
      _
    // Predicated region
    $region6: #{psgn_forward.2} parent=1 // pred_check
      _
    $region7: #{psgn_forward.2} parent=1 // pred_check_branch
      %20 = sbr.rel (0) target = $region9
    $region8: #{psgn_forward.2} parent=1 // pred_region
      _
    $region9: #{psgn_forward.2} parent=1 // pred_fallthru
      _
    // Predicated region
    $region10: #{psgn_forward.2} parent=1 // pred_check
      _
    $region11: #{psgn_forward.2} parent=1 // pred_check_branch
      %22 = sbr.rel (0) target = $region13
    $region12: #{psgn_forward.2} parent=1 // pred_region
      _
    $region13: #{psgn_forward.2} parent=1 // pred_fallthru
      _
    // Predicated region
    $region14: #{psgn_forward.2} parent=1 // pred_check
      _
    $region15: #{psgn_forward.2} parent=1 // pred_check_branch
      %24 = sbr.rel (0) target = $region17
    $region16: #{psgn_forward.2} parent=1 // pred_region
      _
    $region17: #{psgn_forward.2} parent=1 // pred_fallthru
      _
    // Predicated region
    $region18: #{psgn_forward.2} parent=1 // pred_check
      _
    $region19: #{psgn_forward.2} parent=1 // pred_check_branch
      %26 = sbr.rel (0) target = $region21
    $region20: #{psgn_forward.2} parent=1 // pred_region
      _
    $region21: #{psgn_forward.2} parent=1 // pred_fallthru
      _
    // Predicated region
    $region22: #{psgn_forward.2} parent=1 // pred_check
      _
    $region23: #{psgn_forward.2} parent=1 // pred_check_branch
      %28 = sbr.rel (0) target = $region25
    $region24: #{psgn_forward.2} parent=1 // pred_region
      _
    $region25: #{psgn_forward.2} parent=1 // pred_fallthru
      _
    // Predicated region
    $region26: #{psgn_forward.2} parent=1 // pred_check
      _
    $region27: #{psgn_forward.2} parent=1 // pred_check_branch
      %30 = sbr.rel (0) target = $region29
    $region28: #{psgn_forward.2} parent=1 // pred_region
      _
    $region29: #{psgn_forward.2} parent=1 // pred_fallthru
      _
    // Predicated region
    $region30: #{psgn_forward.2} parent=1 // pred_check
      _
    $region31: #{psgn_forward.2} parent=1 // pred_check_branch
      %32 = sbr.rel (0) target = $region33
    $region32: #{psgn_forward.2} parent=1 // pred_region
      _
    $region33: #{psgn_forward.2} parent=1 // pred_fallthru
      _
    // Predicated region
    $region34: #{psgn_forward.2} parent=1 // pred_check
      _
    $region35: #{psgn_forward.2} parent=1 // pred_check_branch
      %34 = sbr.rel (0) target = $region37
    $region36: #{psgn_forward.2} parent=1 // pred_region
      _
    $region37: #{psgn_forward.2} parent=1 // pred_fallthru
      _
    %v36 = vld [vmem:[%s1] sm:$0xf]
    %v37 = vld [vmem:[%s1 + $0x4] sm:$0xf]
    %v38 = vld [vmem:[%s1 + $0x8] sm:$0xf]
    %v39 = vld [vmem:[%s1 + $0xc] sm:$0xf]
    %v40 = vld [vmem:[%s1 + $0x10] sm:$0xf]
    %v41 = vld [vmem:[%s1 + $0x14] sm:$0xf]
    %v42 = vld [vmem:[%s1 + $0x18] sm:$0xf]
    %v43 = vld [vmem:[%s1 + $0x1c] sm:$0xf]
    %v44 = vld [vmem:[%s1 + $0x20] sm:$0xf]
    %v45 = vld [vmem:[%s1 + $0x24] sm:$0xf]
    %v46 = vld [vmem:[%s1 + $0x28] sm:$0xf]
    %v47 = vld [vmem:[%s1 + $0x2c] sm:$0xf]
    %v48 = vld [vmem:[%s1 + $0x30] sm:$0xf]
    %v49 = vld [vmem:[%s1 + $0x34] sm:$0xf]
    %v50 = vld [vmem:[%s1 + $0x38] sm:$0xf]
    %v51 = vld [vmem:[%s1 + $0x3c] sm:$0xf]
    %v52 = vld [vmem:[%s1 + $0x40] sm:$0xf]
    %v53 = vld [vmem:[%s1 + $0x44] sm:$0xf]
    %v54 = vld [vmem:[%s1 + $0x48] sm:$0xf]
    %v55 = vld [vmem:[%s1 + $0x4c] sm:$0xf]
    %v56 = vld [vmem:[%s1 + $0x50] sm:$0xf]
    %v57 = vld [vmem:[%s1 + $0x54] sm:$0xf]
    %v58 = vld [vmem:[%s1 + $0x58] sm:$0xf]
    %v59 = vld [vmem:[%s1 + $0x5c] sm:$0xf]
    %v60 = vld [vmem:[%s1 + $0x60] sm:$0xf]
    %v61 = vld [vmem:[%s1 + $0x64] sm:$0xf]
    %v62 = vld [vmem:[%s1 + $0x68] sm:$0xf]
    %v63 = vld [vmem:[%s1 + $0x6c] sm:$0xf]
    %v64 = vld [vmem:[%s1 + $0x70] sm:$0xf]
    %v65 = vld [vmem:[%s1 + $0x74] sm:$0xf]
    %v66 = vld [vmem:[%s1 + $0x78] sm:$0xf]
    %v67 = vld [vmem:[%s1 + $0x7c] sm:$0xf]
    %v68 = vld [vmem:[%s1 + $0x80] sm:$0xf]
    %v69 = vld [vmem:[%s1 + $0x84] sm:$0xf]
    %v70 = vld [vmem:[%s1 + $0x88] sm:$0xf]
    %v71 = vld [vmem:[%s1 + $0x8c] sm:$0xf]
    %v72 = vld [vmem:[%s1 + $0x90] sm:$0xf]
    %v73 = vld [vmem:[%s1 + $0x94] sm:$0xf]
    %v74 = vld [vmem:[%s1 + $0x98] sm:$0xf]
    %v75 = vld [vmem:[%s1 + $0x9c] sm:$0xf]
    %v76 = vld [vmem:[%s1 + $0xa0] sm:$0xf]
    %v77 = vld [vmem:[%s1 + $0xa4] sm:$0xf]
    %v78 = vld [vmem:[%s1 + $0xa8] sm:$0xf]
    %v79 = vld [vmem:[%s1 + $0xac] sm:$0xf]
    %v80 = vld [vmem:[%s1 + $0xb0] sm:$0xf]
    %v81 = vld [vmem:[%s1 + $0xb4] sm:$0xf]
    %v82 = vld [vmem:[%s1 + $0xb8] sm:$0xf]
    %v83 = vld [vmem:[%s1 + $0xbc] sm:$0xf]
    %v84 = vld [vmem:[%s1 + $0xc0] sm:$0xf]
    %v85 = vld [vmem:[%s1 + $0xc4] sm:$0xf]
    %v86 = vld [vmem:[%s1 + $0xc8] sm:$0xf]
    %v87 = vld [vmem:[%s1 + $0xcc] sm:$0xf]
    %v88 = vld [vmem:[%s1 + $0xd0] sm:$0xf]
    %v89 = vld [vmem:[%s1 + $0xd4] sm:$0xf]
    %v90 = vld [vmem:[%s1 + $0xd8] sm:$0xf]
    %v91 = vld [vmem:[%s1 + $0xdc] sm:$0xf]
    %v92 = vld [vmem:[%s1 + $0xe0] sm:$0xf]
    %v93 = vld [vmem:[%s1 + $0xe4] sm:$0xf]
    %v94 = vld [vmem:[%s1 + $0xe8] sm:$0xf]
    %v95 = vld [vmem:[%s1 + $0xec] sm:$0xf]
    %v96 = vld [vmem:[%s1 + $0xf0] sm:$0xf]
    %v97 = vld [vmem:[%s1 + $0xf4] sm:$0xf]
    %v98 = vld [vmem:[%s1 + $0xf8] sm:$0xf]
    %v99 = vld [vmem:[%s1 + $0xfc] sm:$0xf]
    %v100 = vld [vmem:[%s1 + $0x100] sm:$0xf]
    %v101 = vld [vmem:[%s1 + $0x104] sm:$0xf]
    %v102 = vld [vmem:[%s1 + $0x108] sm:$0xf]
    %v103 = vld [vmem:[%s1 + $0x10c] sm:$0xf]
    %v104 = vld [vmem:[%s1 + $0x110] sm:$0xf]
    %v105 = vld [vmem:[%s1 + $0x114] sm:$0xf]
    %v106 = vld [vmem:[%s1 + $0x118] sm:$0xf]
    %v107 = vld [vmem:[%s1 + $0x11c] sm:$0xf]
    %v108 = vld [vmem:[%s1 + $0x120] sm:$0xf]
    %v109 = vld [vmem:[%s1 + $0x124] sm:$0xf]
    %v110 = vld [vmem:[%s1 + $0x128] sm:$0xf]
    %v111 = vld [vmem:[%s1 + $0x12c] sm:$0xf]
    %v112 = vld [vmem:[%s1 + $0x130] sm:$0xf]
    %v113 = vld [vmem:[%s1 + $0x134] sm:$0xf]
    %v114 = vld [vmem:[%s1 + $0x138] sm:$0xf]
    %v115 = vld [vmem:[%s1 + $0x13c] sm:$0xf]
    %v116 = vld [vmem:[%s1 + $0x140] sm:$0xf]
    %v117 = vld [vmem:[%s1 + $0x144] sm:$0xf]
    %v118 = vld [vmem:[%s1 + $0x148] sm:$0xf]
    %v119 = vld [vmem:[%s1 + $0x14c] sm:$0xf]
    %v120 = vld [vmem:[%s1 + $0x150] sm:$0xf]
    %v121 = vld [vmem:[%s1 + $0x154] sm:$0xf]
    %v122 = vld [vmem:[%s1 + $0x158] sm:$0xf]
    %v123 = vld [vmem:[%s1 + $0x15c] sm:$0xf]
    %v124 = vld [vmem:[%s1 + $0x160] sm:$0xf]
    %v125 = vld [vmem:[%s1 + $0x164] sm:$0xf]
    %v126 = vld [vmem:[%s1 + $0x168] sm:$0xf]
    %v127 = vld [vmem:[%s1 + $0x16c] sm:$0xf]
    %v128 = vld [vmem:[%s1 + $0x170] sm:$0xf]
    %v129 = vld [vmem:[%s1 + $0x174] sm:$0xf]
    %v130 = vld [vmem:[%s1 + $0x178] sm:$0xf]
    %v131 = vld [vmem:[%s1 + $0x17c] sm:$0xf]
    %v132 = vld [vmem:[%s2] sm:$0x1]
    %v133 = vld [vmem:[%s0] sm:$0xff]
    %v134 = vld [vmem:[%s0 + $0x8] sm:$0xff]
    %v135 = vld [vmem:[%s0 + $0x10] sm:$0xff]
    %v136 = vld [vmem:[%s0 + $0x18] sm:$0xff]
    %v137 = vld [vmem:[%s0 + $0x20] sm:$0xff]
    %v138 = vld [vmem:[%s0 + $0x28] sm:$0xff]
    %v139 = vld [vmem:[%s0 + $0x30] sm:$0xff]
    %v140 = vld [vmem:[%s0 + $0x38] sm:$0xff]
    %v141 = vld [vmem:[%s0 + $0x40] sm:$0xff]
    %v142 = vld [vmem:[%s0 + $0x48] sm:$0xff]
    %v143 = vld [vmem:[%s0 + $0x50] sm:$0xff]
    %v144 = vld [vmem:[%s0 + $0x58] sm:$0xff]
    %v145 = vld [vmem:[%s0 + $0x60] sm:$0xff]
    %v146 = vld [vmem:[%s0 + $0x68] sm:$0xff]
    %v147 = vld [vmem:[%s0 + $0x70] sm:$0xff]
    %v148 = vld [vmem:[%s0 + $0x78] sm:$0xff]
    %v149 = vld [vmem:[%s0 + $0x80] sm:$0xff]
    %v150 = vld [vmem:[%s0 + $0x88] sm:$0xff]
    %v151 = vld [vmem:[%s0 + $0x90] sm:$0xff]
    %v152 = vld [vmem:[%s0 + $0x98] sm:$0xff]
    %v153 = vld [vmem:[%s0 + $0xa0] sm:$0xff]
    %v154 = vld [vmem:[%s0 + $0xa8] sm:$0xff]
    %v155 = vld [vmem:[%s0 + $0xb0] sm:$0xff]
    %v156 = vld [vmem:[%s0 + $0xb8] sm:$0xff]
    %v157 = vld [vmem:[%s0 + $0xc0] sm:$0xff]
    %v158 = vld [vmem:[%s0 + $0xc8] sm:$0xff]
    %v159 = vld [vmem:[%s0 + $0xd0] sm:$0xff]
    %v160 = vld [vmem:[%s0 + $0xd8] sm:$0xff]
    %v161 = vld [vmem:[%s0 + $0xe0] sm:$0xff]
    %v162 = vld [vmem:[%s0 + $0xe8] sm:$0xff]
    %v163 = vld [vmem:[%s0 + $0xf0] sm:$0xff]
    %v164 = vld [vmem:[%s0 + $0xf8] sm:$0xff]
    %v165 = vld [vmem:[%s0 + $0x100] sm:$0xff]
    %v166 = vld [vmem:[%s0 + $0x108] sm:$0xff]
    %v167 = vld [vmem:[%s0 + $0x110] sm:$0xff]
    %v168 = vld [vmem:[%s0 + $0x118] sm:$0xff]
    %v169 = vld [vmem:[%s0 + $0x120] sm:$0xff]
    %v170 = vld [vmem:[%s0 + $0x128] sm:$0xff]
    %v171 = vld [vmem:[%s0 + $0x130] sm:$0xff]
    %v172 = vld [vmem:[%s0 + $0x138] sm:$0xff]
    %v173 = vld [vmem:[%s0 + $0x140] sm:$0xff]
    %v174 = vld [vmem:[%s0 + $0x148] sm:$0xff]
    %v175 = vld [vmem:[%s0 + $0x150] sm:$0xff]
    %v176 = vld [vmem:[%s0 + $0x158] sm:$0xff]
    %v177 = vld [vmem:[%s0 + $0x160] sm:$0xff]
    %v178 = vld [vmem:[%s0 + $0x168] sm:$0xff]
    %v179 = vld [vmem:[%s0 + $0x170] sm:$0xff]
    %v180 = vld [vmem:[%s0 + $0x178] sm:$0xff]
    %v181 = vld [vmem:[%s0 + $0x180] sm:$0xff]
    %v182 = vld [vmem:[%s0 + $0x188] sm:$0xff]
    %v183 = vld [vmem:[%s0 + $0x190] sm:$0xff]
    %v184 = vld [vmem:[%s0 + $0x198] sm:$0xff]
    %v185 = vld [vmem:[%s0 + $0x1a0] sm:$0xff]
    %v186 = vld [vmem:[%s0 + $0x1a8] sm:$0xff]
    %v187 = vld [vmem:[%s0 + $0x1b0] sm:$0xff]
    %v188 = vld [vmem:[%s0 + $0x1b8] sm:$0xff]
    %v189 = vld [vmem:[%s0 + $0x1c0] sm:$0xff]
    %v190 = vld [vmem:[%s0 + $0x1c8] sm:$0xff]
    %v191 = vld [vmem:[%s0 + $0x1d0] sm:$0xff]
    %v192 = vld [vmem:[%s0 + $0x1d8] sm:$0xff]
    %v193 = vld [vmem:[%s0 + $0x1e0] sm:$0xff]
    %v194 = vld [vmem:[%s0 + $0x1e8] sm:$0xff]
    %v195 = vld [vmem:[%s0 + $0x1f0] sm:$0xff]
    %v196 = vld [vmem:[%s0 + $0x1f8] sm:$0xff]
    %v197 = vld [vmem:[%s0 + $0x200] sm:$0xff]
    %v198 = vld [vmem:[%s0 + $0x208] sm:$0xff]
    %v199 = vld [vmem:[%s0 + $0x210] sm:$0xff]
    %v200 = vld [vmem:[%s0 + $0x218] sm:$0xff]
    %v201 = vld [vmem:[%s0 + $0x220] sm:$0xff]
    %v202 = vld [vmem:[%s0 + $0x228] sm:$0xff]
    %v203 = vld [vmem:[%s0 + $0x230] sm:$0xff]
    %v204 = vld [vmem:[%s0 + $0x238] sm:$0xff]
    %v205 = vld [vmem:[%s0 + $0x240] sm:$0x33]
    %v206 = vld [vmem:[%s0 + $0x248] sm:$0x33]
    %v207 = vld [vmem:[%s0 + $0x250] sm:$0x33]
    %v209 = vlaneseq
    %v210 = vshrl.u32 %v209, 7
    %v211 = vsub.s32 0, %v210
    %v212 = vrot.slane %v132, %v211
    %v289 = vunpack.c.l.b16 %v133
    %v290 = vunpack.c.h.b16 %v133
    %v291 = vunpack.c.l.b16 %v134
    %v292 = vunpack.c.h.b16 %v134
    %v293 = vunpack.c.l.b16 %v135
    %v294 = vunpack.c.h.b16 %v135
    %v295 = vunpack.c.l.b16 %v136
    %v296 = vunpack.c.h.b16 %v136
    %v297 = vunpack.c.l.b16 %v137
    %v298 = vunpack.c.h.b16 %v137
    %v299 = vunpack.c.l.b16 %v138
    %v300 = vunpack.c.h.b16 %v138
    %v301 = vunpack.c.l.b16 %v139
    %v302 = vunpack.c.h.b16 %v139
    %v303 = vunpack.c.l.b16 %v140
    %v304 = vunpack.c.h.b16 %v140
    %v305 = vunpack.c.l.b16 %v141
    %v306 = vunpack.c.h.b16 %v141
    %v307 = vunpack.c.l.b16 %v142
    %v308 = vunpack.c.h.b16 %v142
    %v309 = vunpack.c.l.b16 %v143
    %v310 = vunpack.c.h.b16 %v143
    %v311 = vunpack.c.l.b16 %v144
    %v312 = vunpack.c.h.b16 %v144
    %v313 = vunpack.c.l.b16 %v145
    %v314 = vunpack.c.h.b16 %v145
    %v315 = vunpack.c.l.b16 %v146
    %v316 = vunpack.c.h.b16 %v146
    %v317 = vunpack.c.l.b16 %v147
    %v318 = vunpack.c.h.b16 %v147
    %v319 = vunpack.c.l.b16 %v148
    %v320 = vunpack.c.h.b16 %v148
    %v321 = vunpack.c.l.b16 %v149
    %v322 = vunpack.c.h.b16 %v149
    %v323 = vunpack.c.l.b16 %v150
    %v324 = vunpack.c.h.b16 %v150
    %v325 = vunpack.c.l.b16 %v151
    %v326 = vunpack.c.h.b16 %v151
    %v327 = vunpack.c.l.b16 %v152
    %v328 = vunpack.c.h.b16 %v152
    %v329 = vunpack.c.l.b16 %v153
    %v330 = vunpack.c.h.b16 %v153
    %v331 = vunpack.c.l.b16 %v154
    %v332 = vunpack.c.h.b16 %v154
    %v333 = vunpack.c.l.b16 %v155
    %v334 = vunpack.c.h.b16 %v155
    %v335 = vunpack.c.l.b16 %v156
    %v336 = vunpack.c.h.b16 %v156
    %v337 = vunpack.c.l.b16 %v157
    %v338 = vunpack.c.h.b16 %v157
    %v339 = vunpack.c.l.b16 %v158
    %v340 = vunpack.c.h.b16 %v158
    %v341 = vunpack.c.l.b16 %v159
    %v342 = vunpack.c.h.b16 %v159
    %v343 = vunpack.c.l.b16 %v160
    %v344 = vunpack.c.h.b16 %v160
    %v345 = vunpack.c.l.b16 %v161
    %v346 = vunpack.c.h.b16 %v161
    %v347 = vunpack.c.l.b16 %v162
    %v348 = vunpack.c.h.b16 %v162
    %v349 = vunpack.c.l.b16 %v163
    %v350 = vunpack.c.h.b16 %v163
    %v351 = vunpack.c.l.b16 %v164
    %v352 = vunpack.c.h.b16 %v164
    %v353 = vunpack.c.l.b16 %v165
    %v354 = vunpack.c.h.b16 %v165
    %v355 = vunpack.c.l.b16 %v166
    %v356 = vunpack.c.h.b16 %v166
    %v357 = vunpack.c.l.b16 %v167
    %v358 = vunpack.c.h.b16 %v167
    %v359 = vunpack.c.l.b16 %v168
    %v360 = vunpack.c.h.b16 %v168
    %v361 = vunpack.c.l.b16 %v169
    %v362 = vunpack.c.h.b16 %v169
    %v363 = vunpack.c.l.b16 %v170
    %v364 = vunpack.c.h.b16 %v170
    %v365 = vunpack.c.l.b16 %v171
    %v366 = vunpack.c.h.b16 %v171
    %v367 = vunpack.c.l.b16 %v172
    %v368 = vunpack.c.h.b16 %v172
    %v369 = vunpack.c.l.b16 %v173
    %v370 = vunpack.c.h.b16 %v173
    %v371 = vunpack.c.l.b16 %v174
    %v372 = vunpack.c.h.b16 %v174
    %v373 = vunpack.c.l.b16 %v175
    %v374 = vunpack.c.h.b16 %v175
    %v375 = vunpack.c.l.b16 %v176
    %v376 = vunpack.c.h.b16 %v176
    %v377 = vunpack.c.l.b16 %v177
    %v378 = vunpack.c.h.b16 %v177
    %v379 = vunpack.c.l.b16 %v178
    %v380 = vunpack.c.h.b16 %v178
    %v381 = vunpack.c.l.b16 %v179
    %v382 = vunpack.c.h.b16 %v179
    %v383 = vunpack.c.l.b16 %v180
    %v384 = vunpack.c.h.b16 %v180
    %v385 = vunpack.c.l.b16 %v181
    %v386 = vunpack.c.h.b16 %v181
    %v387 = vunpack.c.l.b16 %v182
    %v388 = vunpack.c.h.b16 %v182
    %v389 = vunpack.c.l.b16 %v183
    %v390 = vunpack.c.h.b16 %v183
    %v391 = vunpack.c.l.b16 %v184
    %v392 = vunpack.c.h.b16 %v184
    %v393 = vunpack.c.l.b16 %v185
    %v394 = vunpack.c.h.b16 %v185
    %v395 = vunpack.c.l.b16 %v186
    %v396 = vunpack.c.h.b16 %v186
    %v397 = vunpack.c.l.b16 %v187
    %v398 = vunpack.c.h.b16 %v187
    %v399 = vunpack.c.l.b16 %v188
    %v400 = vunpack.c.h.b16 %v188
    %v401 = vunpack.c.l.b16 %v189
    %v402 = vunpack.c.h.b16 %v189
    %v403 = vunpack.c.l.b16 %v190
    %v404 = vunpack.c.h.b16 %v190
    %v405 = vunpack.c.l.b16 %v191
    %v406 = vunpack.c.h.b16 %v191
    %v407 = vunpack.c.l.b16 %v192
    %v408 = vunpack.c.h.b16 %v192
    %v409 = vunpack.c.l.b16 %v193
    %v410 = vunpack.c.h.b16 %v193
    %v411 = vunpack.c.l.b16 %v194
    %v412 = vunpack.c.h.b16 %v194
    %v413 = vunpack.c.l.b16 %v195
    %v414 = vunpack.c.h.b16 %v195
    %v415 = vunpack.c.l.b16 %v196
    %v416 = vunpack.c.h.b16 %v196
    %v417 = vunpack.c.l.b16 %v197
    %v418 = vunpack.c.h.b16 %v197
    %v419 = vunpack.c.l.b16 %v198
    %v420 = vunpack.c.h.b16 %v198
    %v421 = vunpack.c.l.b16 %v199
    %v422 = vunpack.c.h.b16 %v199
    %v423 = vunpack.c.l.b16 %v200
    %v424 = vunpack.c.h.b16 %v200
    %v425 = vunpack.c.l.b16 %v201
    %v426 = vunpack.c.h.b16 %v201
    %v427 = vunpack.c.l.b16 %v202
    %v428 = vunpack.c.h.b16 %v202
    %v429 = vunpack.c.l.b16 %v203
    %v430 = vunpack.c.h.b16 %v203
    %v431 = vunpack.c.l.b16 %v204
    %v432 = vunpack.c.h.b16 %v204
    %v433 = vunpack.c.l.b16 %v205
    %v434 = vunpack.c.h.b16 %v205
    %v435 = vunpack.c.l.b16 %v206
    %v436 = vunpack.c.h.b16 %v206
    %v437 = vunpack.c.l.b16 %v207
    %v438 = vunpack.c.h.b16 %v207
    %v439 = vpack.c.b16 %v295, %v289
    %v440 = vpack.c.b16 %v296, %v290
    %v441 = vpack.c.b16 %v297, %v291
    %v442 = vpack.c.b16 %v298, %v292
    %v443 = vpack.c.b16 %v299, %v293
    %v444 = vpack.c.b16 %v300, %v294
    %v445 = vpack.c.b16 %v307, %v301
    %v446 = vpack.c.b16 %v308, %v302
    %v447 = vpack.c.b16 %v309, %v303
    %v448 = vpack.c.b16 %v310, %v304
    %v449 = vpack.c.b16 %v311, %v305
    %v450 = vpack.c.b16 %v312, %v306
    %v451 = vpack.c.b16 %v319, %v313
    %v452 = vpack.c.b16 %v320, %v314
    %v453 = vpack.c.b16 %v321, %v315
    %v454 = vpack.c.b16 %v322, %v316
    %v455 = vpack.c.b16 %v323, %v317
    %v456 = vpack.c.b16 %v324, %v318
    %v457 = vpack.c.b16 %v331, %v325
    %v458 = vpack.c.b16 %v332, %v326
    %v459 = vpack.c.b16 %v333, %v327
    %v460 = vpack.c.b16 %v334, %v328
    %v461 = vpack.c.b16 %v335, %v329
    %v462 = vpack.c.b16 %v336, %v330
    %v463 = vpack.c.b16 %v343, %v337
    %v464 = vpack.c.b16 %v344, %v338
    %v465 = vpack.c.b16 %v345, %v339
    %v466 = vpack.c.b16 %v346, %v340
    %v467 = vpack.c.b16 %v347, %v341
    %v468 = vpack.c.b16 %v348, %v342
    %v469 = vpack.c.b16 %v355, %v349
    %v470 = vpack.c.b16 %v356, %v350
    %v471 = vpack.c.b16 %v357, %v351
    %v472 = vpack.c.b16 %v358, %v352
    %v473 = vpack.c.b16 %v359, %v353
    %v474 = vpack.c.b16 %v360, %v354
    %v475 = vpack.c.b16 %v367, %v361
    %v476 = vpack.c.b16 %v368, %v362
    %v477 = vpack.c.b16 %v369, %v363
    %v478 = vpack.c.b16 %v370, %v364
    %v479 = vpack.c.b16 %v371, %v365
    %v480 = vpack.c.b16 %v372, %v366
    %v481 = vpack.c.b16 %v379, %v373
    %v482 = vpack.c.b16 %v380, %v374
    %v483 = vpack.c.b16 %v381, %v375
    %v484 = vpack.c.b16 %v382, %v376
    %v485 = vpack.c.b16 %v383, %v377
    %v486 = vpack.c.b16 %v384, %v378
    %v487 = vpack.c.b16 %v391, %v385
    %v488 = vpack.c.b16 %v392, %v386
    %v489 = vpack.c.b16 %v393, %v387
    %v490 = vpack.c.b16 %v394, %v388
    %v491 = vpack.c.b16 %v395, %v389
    %v492 = vpack.c.b16 %v396, %v390
    %v493 = vpack.c.b16 %v403, %v397
    %v494 = vpack.c.b16 %v404, %v398
    %v495 = vpack.c.b16 %v405, %v399
    %v496 = vpack.c.b16 %v406, %v400
    %v497 = vpack.c.b16 %v407, %v401
    %v498 = vpack.c.b16 %v408, %v402
    %v499 = vpack.c.b16 %v415, %v409
    %v500 = vpack.c.b16 %v416, %v410
    %v501 = vpack.c.b16 %v417, %v411
    %v502 = vpack.c.b16 %v418, %v412
    %v503 = vpack.c.b16 %v419, %v413
    %v504 = vpack.c.b16 %v420, %v414
    %v505 = vpack.c.b16 %v427, %v421
    %v506 = vpack.c.b16 %v428, %v422
    %v507 = vpack.c.b16 %v429, %v423
    %v508 = vpack.c.b16 %v430, %v424
    %v509 = vpack.c.b16 %v431, %v425
    %v510 = vpack.c.b16 %v432, %v426
    %v511 = vpack.c.b16 %v433, %v433
    %v512 = vpack.c.b16 %v434, %v434
    %v513 = vpack.c.b16 %v435, %v435
    %v514 = vpack.c.b16 %v436, %v436
    %v515 = vpack.c.b16 %v437, %v437
    %v516 = vpack.c.b16 %v438, %v438
    %v691 = vunpack.c.l.b16 %v36
    %v692 = vunpack.c.l.b16 %v37
    %v693 = vunpack.c.l.b16 %v38
    %v694 = vunpack.c.l.b16 %v39
    %v695 = vunpack.c.l.b16 %v40
    %v696 = vunpack.c.l.b16 %v41
    %v697 = vunpack.c.l.b16 %v42
    %v698 = vunpack.c.l.b16 %v43
    %v699 = vunpack.c.l.b16 %v44
    %v700 = vunpack.c.l.b16 %v45
    %v701 = vunpack.c.l.b16 %v46
    %v702 = vunpack.c.l.b16 %v47
    %v703 = vunpack.c.l.b16 %v48
    %v704 = vunpack.c.l.b16 %v49
    %v705 = vunpack.c.l.b16 %v50
    %v706 = vunpack.c.l.b16 %v51
    %v707 = vunpack.c.l.b16 %v52
    %v708 = vunpack.c.l.b16 %v53
    %v709 = vunpack.c.l.b16 %v54
    %v710 = vunpack.c.l.b16 %v55
    %v711 = vunpack.c.l.b16 %v56
    %v712 = vunpack.c.l.b16 %v57
    %v713 = vunpack.c.l.b16 %v58
    %v714 = vunpack.c.l.b16 %v59
    %v715 = vunpack.c.l.b16 %v60
    %v716 = vunpack.c.l.b16 %v61
    %v717 = vunpack.c.l.b16 %v62
    %v718 = vunpack.c.l.b16 %v63
    %v719 = vunpack.c.l.b16 %v64
    %v720 = vunpack.c.l.b16 %v65
    %v721 = vunpack.c.l.b16 %v66
    %v722 = vunpack.c.l.b16 %v67
    %v723 = vunpack.c.l.b16 %v68
    %v724 = vunpack.c.l.b16 %v69
    %v725 = vunpack.c.l.b16 %v70
    %v726 = vunpack.c.l.b16 %v71
    %v727 = vunpack.c.l.b16 %v72
    %v728 = vunpack.c.l.b16 %v73
    %v729 = vunpack.c.l.b16 %v74
    %v730 = vunpack.c.l.b16 %v75
    %v731 = vunpack.c.l.b16 %v76
    %v732 = vunpack.c.l.b16 %v77
    %v733 = vunpack.c.l.b16 %v78
    %v734 = vunpack.c.l.b16 %v79
    %v735 = vunpack.c.l.b16 %v80
    %v736 = vunpack.c.l.b16 %v81
    %v737 = vunpack.c.l.b16 %v82
    %v738 = vunpack.c.l.b16 %v83
    %v739 = vunpack.c.l.b16 %v84
    %v740 = vunpack.c.l.b16 %v85
    %v741 = vunpack.c.l.b16 %v86
    %v742 = vunpack.c.l.b16 %v87
    %v743 = vunpack.c.l.b16 %v88
    %v744 = vunpack.c.l.b16 %v89
    %v745 = vunpack.c.l.b16 %v90
    %v746 = vunpack.c.l.b16 %v91
    %v747 = vunpack.c.l.b16 %v92
    %v748 = vunpack.c.l.b16 %v93
    %v749 = vunpack.c.l.b16 %v94
    %v750 = vunpack.c.l.b16 %v95
    %v751 = vunpack.c.l.b16 %v96
    %v752 = vunpack.c.l.b16 %v97
    %v753 = vunpack.c.l.b16 %v98
    %v754 = vunpack.c.l.b16 %v99
    %v755 = vunpack.c.l.b16 %v100
    %v756 = vunpack.c.l.b16 %v101
    %v757 = vunpack.c.l.b16 %v102
    %v758 = vunpack.c.l.b16 %v103
    %v759 = vunpack.c.l.b16 %v104
    %v760 = vunpack.c.l.b16 %v105
    %v761 = vunpack.c.l.b16 %v106
    %v762 = vunpack.c.l.b16 %v107
    %v763 = vunpack.c.l.b16 %v108
    %v764 = vunpack.c.l.b16 %v109
    %v765 = vunpack.c.l.b16 %v110
    %v766 = vunpack.c.l.b16 %v111
    %v767 = vunpack.c.l.b16 %v112
    %v768 = vunpack.c.l.b16 %v113
    %v769 = vunpack.c.l.b16 %v114
    %v770 = vunpack.c.l.b16 %v115
    %v771 = vunpack.c.l.b16 %v116
    %v772 = vunpack.c.l.b16 %v117
    %v773 = vunpack.c.l.b16 %v118
    %v774 = vunpack.c.l.b16 %v119
    %v775 = vunpack.c.l.b16 %v120
    %v776 = vunpack.c.l.b16 %v121
    %v777 = vunpack.c.l.b16 %v122
    %v778 = vunpack.c.l.b16 %v123
    %v779 = vunpack.c.l.b16 %v124
    %v780 = vunpack.c.l.b16 %v125
    %v781 = vunpack.c.l.b16 %v126
    %v782 = vunpack.c.l.b16 %v127
    %v783 = vunpack.c.l.b16 %v128
    %v784 = vunpack.c.l.b16 %v129
    %v785 = vunpack.c.l.b16 %v130
    %v786 = vunpack.c.l.b16 %v131
    %v787 = vpack.c.b16 %v692, %v691
    %v788 = vpack.c.b16 %v694, %v693
    %v789 = vpack.c.b16 %v696, %v695
    %v790 = vpack.c.b16 %v698, %v697
    %v791 = vpack.c.b16 %v700, %v699
    %v792 = vpack.c.b16 %v702, %v701
    %v793 = vpack.c.b16 %v704, %v703
    %v794 = vpack.c.b16 %v706, %v705
    %v795 = vpack.c.b16 %v708, %v707
    %v796 = vpack.c.b16 %v710, %v709
    %v797 = vpack.c.b16 %v712, %v711
    %v798 = vpack.c.b16 %v714, %v713
    %v799 = vpack.c.b16 %v716, %v715
    %v800 = vpack.c.b16 %v718, %v717
    %v801 = vpack.c.b16 %v720, %v719
    %v802 = vpack.c.b16 %v722, %v721
    %v803 = vpack.c.b16 %v724, %v723
    %v804 = vpack.c.b16 %v726, %v725
    %v805 = vpack.c.b16 %v728, %v727
    %v806 = vpack.c.b16 %v730, %v729
    %v807 = vpack.c.b16 %v732, %v731
    %v808 = vpack.c.b16 %v734, %v733
    %v809 = vpack.c.b16 %v736, %v735
    %v810 = vpack.c.b16 %v738, %v737
    %v811 = vpack.c.b16 %v740, %v739
    %v812 = vpack.c.b16 %v742, %v741
    %v813 = vpack.c.b16 %v744, %v743
    %v814 = vpack.c.b16 %v746, %v745
    %v815 = vpack.c.b16 %v748, %v747
    %v816 = vpack.c.b16 %v750, %v749
    %v817 = vpack.c.b16 %v752, %v751
    %v818 = vpack.c.b16 %v754, %v753
    %v819 = vpack.c.b16 %v756, %v755
    %v820 = vpack.c.b16 %v758, %v757
    %v821 = vpack.c.b16 %v760, %v759
    %v822 = vpack.c.b16 %v762, %v761
    %v823 = vpack.c.b16 %v764, %v763
    %v824 = vpack.c.b16 %v766, %v765
    %v825 = vpack.c.b16 %v768, %v767
    %v826 = vpack.c.b16 %v770, %v769
    %v827 = vpack.c.b16 %v772, %v771
    %v828 = vpack.c.b16 %v774, %v773
    %v829 = vpack.c.b16 %v776, %v775
    %v830 = vpack.c.b16 %v778, %v777
    %v831 = vpack.c.b16 %v780, %v779
    %v832 = vpack.c.b16 %v782, %v781
    %v833 = vpack.c.b16 %v784, %v783
    %v834 = vpack.c.b16 %v786, %v785
    %883 = vmatprep.subr.bf16.mxu0 0
    %884 = vmatpush1.bf16.msra.mxu0 %v787
    %885 = vmatprep.subr.bf16.mxu0 0
    %886 = vmatpush1.bf16.msra.mxu0 %v788
    %887 = vmatprep.subr.bf16.mxu0 0
    %888 = vmatpush1.bf16.msra.mxu0 %v789
    %889 = vmatprep.subr.bf16.mxu0 0
    %890 = vmatpush1.bf16.msra.mxu0 %v790
    %891 = vmatprep.subr.bf16.mxu0 0
    %892 = vmatpush1.bf16.msra.mxu0 %v791
    %893 = vmatprep.subr.bf16.mxu0 0
    %894 = vmatpush1.bf16.msra.mxu0 %v792
    %895 = vmatprep.subr.bf16.mxu0 0
    %896 = vmatpush1.bf16.msra.mxu0 %v793
    %897 = vmatprep.subr.bf16.mxu0 0
    %898 = vmatpush1.bf16.msra.mxu0 %v794
    %899 = vmatprep.subr.bf16.mxu0 0
    %900 = vmatpush1.bf16.msra.mxu0 %v795
    %901 = vmatprep.subr.bf16.mxu0 0
    %902 = vmatpush1.bf16.msra.mxu0 %v796
    %903 = vmatprep.subr.bf16.mxu0 0
    %904 = vmatpush1.bf16.msra.mxu0 %v797
    %905 = vmatprep.subr.bf16.mxu0 0
    %906 = vmatpush1.bf16.msra.mxu0 %v798
    %907 = vmatprep.subr.bf16.mxu0 0
    %908 = vmatpush1.bf16.msra.mxu0 %v799
    %909 = vmatprep.subr.bf16.mxu0 0
    %910 = vmatpush1.bf16.msra.mxu0 %v800
    %911 = vmatprep.subr.bf16.mxu0 0
    %912 = vmatpush1.bf16.msra.mxu0 %v801
    %913 = vmatprep.subr.bf16.mxu0 0
    %914 = vmatpush1.bf16.msra.mxu0 %v802
    %915 = vmatprep.mubr.bf16.mxu0 %v440
    %916 = vmatmul.mubr.bf16.gmra.mrb[0].mxu0 %v439
    %v917 = vpop.f32.mrb[0].mxu0
    %v918 = vadd.f32 %v212, %v917
    %v919 = vpop.f32.mrb[0].mxu0
    %v920 = vpop.f32.mrb[0].mxu0
    %v921 = vadd.f32 %v212, %v920
    %v922 = vpop.f32.mrb[0].mxu0
    %923 = vmatprep.mubr.bf16.mxu0 %v446
    %924 = vmatmul.mubr.bf16.gmra.mrb[0].mxu0 %v445
    %v925 = vpop.f32.mrb[0].mxu0
    %v926 = vadd.f32 %v212, %v925
    %v927 = vpop.f32.mrb[0].mxu0
    %v928 = vpop.f32.mrb[0].mxu0
    %v929 = vadd.f32 %v212, %v928
    %v930 = vpop.f32.mrb[0].mxu0
    %931 = vmatprep.mubr.bf16.mxu0 %v452
    %932 = vmatmul.mubr.bf16.gmra.mrb[0].mxu0 %v451
    %v933 = vpop.f32.mrb[0].mxu0
    %v934 = vadd.f32 %v212, %v933
    %v935 = vpop.f32.mrb[0].mxu0
    %v936 = vpop.f32.mrb[0].mxu0
    %v937 = vadd.f32 %v212, %v936
    %v938 = vpop.f32.mrb[0].mxu0
    %939 = vmatprep.mubr.bf16.mxu0 %v458
    %940 = vmatmul.mubr.bf16.gmra.mrb[0].mxu0 %v457
    %v941 = vpop.f32.mrb[0].mxu0
    %v942 = vadd.f32 %v212, %v941
    %v943 = vpop.f32.mrb[0].mxu0
    %v944 = vpop.f32.mrb[0].mxu0
    %v945 = vadd.f32 %v212, %v944
    %v946 = vpop.f32.mrb[0].mxu0
    %947 = vmatprep.mubr.bf16.mxu0 %v464
    %948 = vmatmul.mubr.bf16.gmra.mrb[0].mxu0 %v463
    %v949 = vpop.f32.mrb[0].mxu0
    %v950 = vadd.f32 %v212, %v949
    %v951 = vpop.f32.mrb[0].mxu0
    %v952 = vpop.f32.mrb[0].mxu0
    %v953 = vadd.f32 %v212, %v952
    %v954 = vpop.f32.mrb[0].mxu0
    %955 = vmatprep.mubr.bf16.mxu0 %v470
    %956 = vmatmul.mubr.bf16.gmra.mrb[0].mxu0 %v469
    %v957 = vpop.f32.mrb[0].mxu0
    %v958 = vadd.f32 %v212, %v957
    %v959 = vpop.f32.mrb[0].mxu0
    %v960 = vpop.f32.mrb[0].mxu0
    %v961 = vadd.f32 %v212, %v960
    %v962 = vpop.f32.mrb[0].mxu0
    %963 = vmatprep.mubr.bf16.mxu0 %v476
    %964 = vmatmul.mubr.bf16.gmra.mrb[0].mxu0 %v475
    %v965 = vpop.f32.mrb[0].mxu0
    %v966 = vadd.f32 %v212, %v965
    %v967 = vpop.f32.mrb[0].mxu0
    %v968 = vpop.f32.mrb[0].mxu0
    %v969 = vadd.f32 %v212, %v968
    %v970 = vpop.f32.mrb[0].mxu0
    %971 = vmatprep.mubr.bf16.mxu0 %v482
    %972 = vmatmul.mubr.bf16.gmra.mrb[0].mxu0 %v481
    %v973 = vpop.f32.mrb[0].mxu0
    %v974 = vadd.f32 %v212, %v973
    %v975 = vpop.f32.mrb[0].mxu0
    %v976 = vpop.f32.mrb[0].mxu0
    %v977 = vadd.f32 %v212, %v976
    %v978 = vpop.f32.mrb[0].mxu0
    %979 = vmatprep.mubr.bf16.mxu0 %v488
    %980 = vmatmul.mubr.bf16.gmra.mrb[0].mxu0 %v487
    %v981 = vpop.f32.mrb[0].mxu0
    %v982 = vadd.f32 %v212, %v981
    %v983 = vpop.f32.mrb[0].mxu0
    %v984 = vpop.f32.mrb[0].mxu0
    %v985 = vadd.f32 %v212, %v984
    %v986 = vpop.f32.mrb[0].mxu0
    %987 = vmatprep.mubr.bf16.mxu0 %v494
    %988 = vmatmul.mubr.bf16.gmra.mrb[0].mxu0 %v493
    %v989 = vpop.f32.mrb[0].mxu0
    %v990 = vadd.f32 %v212, %v989
    %v991 = vpop.f32.mrb[0].mxu0
    %v992 = vpop.f32.mrb[0].mxu0
    %v993 = vadd.f32 %v212, %v992
    %v994 = vpop.f32.mrb[0].mxu0
    %995 = vmatprep.mubr.bf16.mxu0 %v500
    %996 = vmatmul.mubr.bf16.gmra.mrb[0].mxu0 %v499
    %v997 = vpop.f32.mrb[0].mxu0
    %v998 = vadd.f32 %v212, %v997
    %v999 = vpop.f32.mrb[0].mxu0
    %v1000 = vpop.f32.mrb[0].mxu0
    %v1001 = vadd.f32 %v212, %v1000
    %v1002 = vpop.f32.mrb[0].mxu0
    %1003 = vmatprep.mubr.bf16.mxu0 %v506
    %1004 = vmatmul.mubr.bf16.gmra.mrb[0].mxu0 %v505
    %v1005 = vpop.f32.mrb[0].mxu0
    %v1006 = vadd.f32 %v212, %v1005
    %v1007 = vpop.f32.mrb[0].mxu0
    %v1008 = vpop.f32.mrb[0].mxu0
    %v1009 = vadd.f32 %v212, %v1008
    %v1010 = vpop.f32.mrb[0].mxu0
    %1011 = vmatprep.mubr.bf16.mxu0 %v512
    %1012 = vmatmul.mubr.bf16.gmra.mrb[0].mxu0 %v511
    %v1013 = vpop.f32.mrb[0].mxu0
    %v1014 = vadd.f32 %v212, %v1013
    %v1015 = vpop.f32.mrb[0].mxu0
    %v1016 = vpop.f32.mrb[0].mxu0
    %v1017 = vpop.f32.mrb[0].mxu0
    %1018 = vdwg.mxu0
    %1019 = vmatprep.subr.bf16.mxu0 0
    %1020 = vmatpush1.bf16.msra.mxu0 %v803
    %1021 = vmatprep.subr.bf16.mxu0 0
    %1022 = vmatpush1.bf16.msra.mxu0 %v804
    %1023 = vmatprep.subr.bf16.mxu0 0
    %1024 = vmatpush1.bf16.msra.mxu0 %v805
    %1025 = vmatprep.subr.bf16.mxu0 0
    %1026 = vmatpush1.bf16.msra.mxu0 %v806
    %1027 = vmatprep.subr.bf16.mxu0 0
    %1028 = vmatpush1.bf16.msra.mxu0 %v807
    %1029 = vmatprep.subr.bf16.mxu0 0
    %1030 = vmatpush1.bf16.msra.mxu0 %v808
    %1031 = vmatprep.subr.bf16.mxu0 0
    %1032 = vmatpush1.bf16.msra.mxu0 %v809
    %1033 = vmatprep.subr.bf16.mxu0 0
    %1034 = vmatpush1.bf16.msra.mxu0 %v810
    %1035 = vmatprep.subr.bf16.mxu0 0
    %1036 = vmatpush1.bf16.msra.mxu0 %v811
    %1037 = vmatprep.subr.bf16.mxu0 0
    %1038 = vmatpush1.bf16.msra.mxu0 %v812
    %1039 = vmatprep.subr.bf16.mxu0 0
    %1040 = vmatpush1.bf16.msra.mxu0 %v813
    %1041 = vmatprep.subr.bf16.mxu0 0
    %1042 = vmatpush1.bf16.msra.mxu0 %v814
    %1043 = vmatprep.subr.bf16.mxu0 0
    %1044 = vmatpush1.bf16.msra.mxu0 %v815
    %1045 = vmatprep.subr.bf16.mxu0 0
    %1046 = vmatpush1.bf16.msra.mxu0 %v816
    %1047 = vmatprep.subr.bf16.mxu0 0
    %1048 = vmatpush1.bf16.msra.mxu0 %v817
    %1049 = vmatprep.subr.bf16.mxu0 0
    %1050 = vmatpush1.bf16.msra.mxu0 %v818
    %1051 = vmatprep.mubr.bf16.mxu0 %v442
    %1052 = vmatmul.mubr.bf16.gmra.mrb[0].mxu0 %v441
    %v1053 = vpop.f32.mrb[0].mxu0
    %v1054 = vadd.f32 %v918, %v1053
    %v1055 = vpop.f32.mrb[0].mxu0
    %v1056 = vpop.f32.mrb[0].mxu0
    %v1057 = vadd.f32 %v921, %v1056
    %v1058 = vpop.f32.mrb[0].mxu0
    %1059 = vmatprep.mubr.bf16.mxu0 %v448
    %1060 = vmatmul.mubr.bf16.gmra.mrb[0].mxu0 %v447
    %v1061 = vpop.f32.mrb[0].mxu0
    %v1062 = vadd.f32 %v926, %v1061
    %v1063 = vpop.f32.mrb[0].mxu0
    %v1064 = vpop.f32.mrb[0].mxu0
    %v1065 = vadd.f32 %v929, %v1064
    %v1066 = vpop.f32.mrb[0].mxu0
    %1067 = vmatprep.mubr.bf16.mxu0 %v454
    %1068 = vmatmul.mubr.bf16.gmra.mrb[0].mxu0 %v453
    %v1069 = vpop.f32.mrb[0].mxu0
    %v1070 = vadd.f32 %v934, %v1069
    %v1071 = vpop.f32.mrb[0].mxu0
    %v1072 = vpop.f32.mrb[0].mxu0
    %v1073 = vadd.f32 %v937, %v1072
    %v1074 = vpop.f32.mrb[0].mxu0
    %1075 = vmatprep.mubr.bf16.mxu0 %v460
    %1076 = vmatmul.mubr.bf16.gmra.mrb[0].mxu0 %v459
    %v1077 = vpop.f32.mrb[0].mxu0
    %v1078 = vadd.f32 %v942, %v1077
    %v1079 = vpop.f32.mrb[0].mxu0
    %v1080 = vpop.f32.mrb[0].mxu0
    %v1081 = vadd.f32 %v945, %v1080
    %v1082 = vpop.f32.mrb[0].mxu0
    %1083 = vmatprep.mubr.bf16.mxu0 %v466
    %1084 = vmatmul.mubr.bf16.gmra.mrb[0].mxu0 %v465
    %v1085 = vpop.f32.mrb[0].mxu0
    %v1086 = vadd.f32 %v950, %v1085
    %v1087 = vpop.f32.mrb[0].mxu0
    %v1088 = vpop.f32.mrb[0].mxu0
    %v1089 = vadd.f32 %v953, %v1088
    %v1090 = vpop.f32.mrb[0].mxu0
    %1091 = vmatprep.mubr.bf16.mxu0 %v472
    %1092 = vmatmul.mubr.bf16.gmra.mrb[0].mxu0 %v471
    %v1093 = vpop.f32.mrb[0].mxu0
    %v1094 = vadd.f32 %v958, %v1093
    %v1095 = vpop.f32.mrb[0].mxu0
    %v1096 = vpop.f32.mrb[0].mxu0
    %v1097 = vadd.f32 %v961, %v1096
    %v1098 = vpop.f32.mrb[0].mxu0
    %1099 = vmatprep.mubr.bf16.mxu0 %v478
    %1100 = vmatmul.mubr.bf16.gmra.mrb[0].mxu0 %v477
    %v1101 = vpop.f32.mrb[0].mxu0
    %v1102 = vadd.f32 %v966, %v1101
    %v1103 = vpop.f32.mrb[0].mxu0
    %v1104 = vpop.f32.mrb[0].mxu0
    %v1105 = vadd.f32 %v969, %v1104
    %v1106 = vpop.f32.mrb[0].mxu0
    %1107 = vmatprep.mubr.bf16.mxu0 %v484
    %1108 = vmatmul.mubr.bf16.gmra.mrb[0].mxu0 %v483
    %v1109 = vpop.f32.mrb[0].mxu0
    %v1110 = vadd.f32 %v974, %v1109
    %v1111 = vpop.f32.mrb[0].mxu0
    %v1112 = vpop.f32.mrb[0].mxu0
    %v1113 = vadd.f32 %v977, %v1112
    %v1114 = vpop.f32.mrb[0].mxu0
    %1115 = vmatprep.mubr.bf16.mxu0 %v490
    %1116 = vmatmul.mubr.bf16.gmra.mrb[0].mxu0 %v489
    %v1117 = vpop.f32.mrb[0].mxu0
    %v1118 = vadd.f32 %v982, %v1117
    %v1119 = vpop.f32.mrb[0].mxu0
    %v1120 = vpop.f32.mrb[0].mxu0
    %v1121 = vadd.f32 %v985, %v1120
    %v1122 = vpop.f32.mrb[0].mxu0
    %1123 = vmatprep.mubr.bf16.mxu0 %v496
    %1124 = vmatmul.mubr.bf16.gmra.mrb[0].mxu0 %v495
    %v1125 = vpop.f32.mrb[0].mxu0
    %v1126 = vadd.f32 %v990, %v1125
    %v1127 = vpop.f32.mrb[0].mxu0
    %v1128 = vpop.f32.mrb[0].mxu0
    %v1129 = vadd.f32 %v993, %v1128
    %v1130 = vpop.f32.mrb[0].mxu0
    %1131 = vmatprep.mubr.bf16.mxu0 %v502
    %1132 = vmatmul.mubr.bf16.gmra.mrb[0].mxu0 %v501
    %v1133 = vpop.f32.mrb[0].mxu0
    %v1134 = vadd.f32 %v998, %v1133
    %v1135 = vpop.f32.mrb[0].mxu0
    %v1136 = vpop.f32.mrb[0].mxu0
    %v1137 = vadd.f32 %v1001, %v1136
    %v1138 = vpop.f32.mrb[0].mxu0
    %1139 = vmatprep.mubr.bf16.mxu0 %v508
    %1140 = vmatmul.mubr.bf16.gmra.mrb[0].mxu0 %v507
    %v1141 = vpop.f32.mrb[0].mxu0
    %v1142 = vadd.f32 %v1006, %v1141
    %v1143 = vpop.f32.mrb[0].mxu0
    %v1144 = vpop.f32.mrb[0].mxu0
    %v1145 = vadd.f32 %v1009, %v1144
    %v1146 = vpop.f32.mrb[0].mxu0
    %1147 = vmatprep.mubr.bf16.mxu0 %v514
    %1148 = vmatmul.mubr.bf16.gmra.mrb[0].mxu0 %v513
    %v1149 = vpop.f32.mrb[0].mxu0
    %v1150 = vadd.f32 %v1014, %v1149
    %v1151 = vpop.f32.mrb[0].mxu0
    %v1152 = vpop.f32.mrb[0].mxu0
    %v1153 = vpop.f32.mrb[0].mxu0
    %1154 = vdwg.mxu0
    %1155 = vmatprep.subr.bf16.mxu0 0
    %1156 = vmatpush1.bf16.msra.mxu0 %v819
    %1157 = vmatprep.subr.bf16.mxu0 0
    %1158 = vmatpush1.bf16.msra.mxu0 %v820
    %1159 = vmatprep.subr.bf16.mxu0 0
    %1160 = vmatpush1.bf16.msra.mxu0 %v821
    %1161 = vmatprep.subr.bf16.mxu0 0
    %1162 = vmatpush1.bf16.msra.mxu0 %v822
    %1163 = vmatprep.subr.bf16.mxu0 0
    %1164 = vmatpush1.bf16.msra.mxu0 %v823
    %1165 = vmatprep.subr.bf16.mxu0 0
    %1166 = vmatpush1.bf16.msra.mxu0 %v824
    %1167 = vmatprep.subr.bf16.mxu0 0
    %1168 = vmatpush1.bf16.msra.mxu0 %v825
    %1169 = vmatprep.subr.bf16.mxu0 0
    %1170 = vmatpush1.bf16.msra.mxu0 %v826
    %1171 = vmatprep.subr.bf16.mxu0 0
    %1172 = vmatpush1.bf16.msra.mxu0 %v827
    %1173 = vmatprep.subr.bf16.mxu0 0
    %1174 = vmatpush1.bf16.msra.mxu0 %v828
    %1175 = vmatprep.subr.bf16.mxu0 0
    %1176 = vmatpush1.bf16.msra.mxu0 %v829
    %1177 = vmatprep.subr.bf16.mxu0 0
    %1178 = vmatpush1.bf16.msra.mxu0 %v830
    %1179 = vmatprep.subr.bf16.mxu0 0
    %1180 = vmatpush1.bf16.msra.mxu0 %v831
    %1181 = vmatprep.subr.bf16.mxu0 0
    %1182 = vmatpush1.bf16.msra.mxu0 %v832
    %1183 = vmatprep.subr.bf16.mxu0 0
    %1184 = vmatpush1.bf16.msra.mxu0 %v833
    %1185 = vmatprep.subr.bf16.mxu0 0
    %1186 = vmatpush1.bf16.msra.mxu0 %v834
    %1187 = vmatprep.mubr.bf16.mxu0 %v444
    %1188 = vmatmul.mubr.bf16.gmra.mrb[0].mxu0 %v443
    %v1189 = vpop.f32.mrb[0].mxu0
    %v1190 = vadd.f32 %v1054, %v1189
    %v1191 = vpop.f32.mrb[0].mxu0
    %v1192 = vpop.f32.mrb[0].mxu0
    %v1193 = vadd.f32 %v1057, %v1192
    %v1194 = vpop.f32.mrb[0].mxu0
    %1195 = vmatprep.mubr.bf16.mxu0 %v450
    %1196 = vmatmul.mubr.bf16.gmra.mrb[0].mxu0 %v449
    %v1197 = vpop.f32.mrb[0].mxu0
    %v1198 = vadd.f32 %v1062, %v1197
    %v1199 = vpop.f32.mrb[0].mxu0
    %v1200 = vpop.f32.mrb[0].mxu0
    %v1201 = vadd.f32 %v1065, %v1200
    %v1202 = vpop.f32.mrb[0].mxu0
    %1203 = vmatprep.mubr.bf16.mxu0 %v456
    %1204 = vmatmul.mubr.bf16.gmra.mrb[0].mxu0 %v455
    %v1205 = vpop.f32.mrb[0].mxu0
    %v1206 = vadd.f32 %v1070, %v1205
    %v1207 = vpop.f32.mrb[0].mxu0
    %v1208 = vpop.f32.mrb[0].mxu0
    %v1209 = vadd.f32 %v1073, %v1208
    %v1210 = vpop.f32.mrb[0].mxu0
    %1211 = vmatprep.mubr.bf16.mxu0 %v462
    %1212 = vmatmul.mubr.bf16.gmra.mrb[0].mxu0 %v461
    %v1213 = vpop.f32.mrb[0].mxu0
    %v1214 = vadd.f32 %v1078, %v1213
    %v1215 = vpop.f32.mrb[0].mxu0
    %v1216 = vpop.f32.mrb[0].mxu0
    %v1217 = vadd.f32 %v1081, %v1216
    %v1218 = vpop.f32.mrb[0].mxu0
    %1219 = vmatprep.mubr.bf16.mxu0 %v468
    %1220 = vmatmul.mubr.bf16.gmra.mrb[0].mxu0 %v467
    %v1221 = vpop.f32.mrb[0].mxu0
    %v1222 = vadd.f32 %v1086, %v1221
    %v1223 = vpop.f32.mrb[0].mxu0
    %v1224 = vpop.f32.mrb[0].mxu0
    %v1225 = vadd.f32 %v1089, %v1224
    %v1226 = vpop.f32.mrb[0].mxu0
    %1227 = vmatprep.mubr.bf16.mxu0 %v474
    %1228 = vmatmul.mubr.bf16.gmra.mrb[0].mxu0 %v473
    %v1229 = vpop.f32.mrb[0].mxu0
    %v1230 = vadd.f32 %v1094, %v1229
    %v1231 = vpop.f32.mrb[0].mxu0
    %v1232 = vpop.f32.mrb[0].mxu0
    %v1233 = vadd.f32 %v1097, %v1232
    %v1234 = vpop.f32.mrb[0].mxu0
    %1235 = vmatprep.mubr.bf16.mxu0 %v480
    %1236 = vmatmul.mubr.bf16.gmra.mrb[0].mxu0 %v479
    %v1237 = vpop.f32.mrb[0].mxu0
    %v1238 = vadd.f32 %v1102, %v1237
    %v1239 = vpop.f32.mrb[0].mxu0
    %v1240 = vpop.f32.mrb[0].mxu0
    %v1241 = vadd.f32 %v1105, %v1240
    %v1242 = vpop.f32.mrb[0].mxu0
    %1243 = vmatprep.mubr.bf16.mxu0 %v486
    %1244 = vmatmul.mubr.bf16.gmra.mrb[0].mxu0 %v485
    %v1245 = vpop.f32.mrb[0].mxu0
    %v1246 = vadd.f32 %v1110, %v1245
    %v1247 = vpop.f32.mrb[0].mxu0
    %v1248 = vpop.f32.mrb[0].mxu0
    %v1249 = vadd.f32 %v1113, %v1248
    %v1250 = vpop.f32.mrb[0].mxu0
    %1251 = vmatprep.mubr.bf16.mxu0 %v492
    %1252 = vmatmul.mubr.bf16.gmra.mrb[0].mxu0 %v491
    %v1253 = vpop.f32.mrb[0].mxu0
    %v1254 = vadd.f32 %v1118, %v1253
    %v1255 = vpop.f32.mrb[0].mxu0
    %v1256 = vpop.f32.mrb[0].mxu0
    %v1257 = vadd.f32 %v1121, %v1256
    %v1258 = vpop.f32.mrb[0].mxu0
    %1259 = vmatprep.mubr.bf16.mxu0 %v498
    %1260 = vmatmul.mubr.bf16.gmra.mrb[0].mxu0 %v497
    %v1261 = vpop.f32.mrb[0].mxu0
    %v1262 = vadd.f32 %v1126, %v1261
    %v1263 = vpop.f32.mrb[0].mxu0
    %v1264 = vpop.f32.mrb[0].mxu0
    %v1265 = vadd.f32 %v1129, %v1264
    %v1266 = vpop.f32.mrb[0].mxu0
    %1267 = vmatprep.mubr.bf16.mxu0 %v504
    %1268 = vmatmul.mubr.bf16.gmra.mrb[0].mxu0 %v503
    %v1269 = vpop.f32.mrb[0].mxu0
    %v1270 = vadd.f32 %v1134, %v1269
    %v1271 = vpop.f32.mrb[0].mxu0
    %v1272 = vpop.f32.mrb[0].mxu0
    %v1273 = vadd.f32 %v1137, %v1272
    %v1274 = vpop.f32.mrb[0].mxu0
    %1275 = vmatprep.mubr.bf16.mxu0 %v510
    %1276 = vmatmul.mubr.bf16.gmra.mrb[0].mxu0 %v509
    %v1277 = vpop.f32.mrb[0].mxu0
    %v1278 = vadd.f32 %v1142, %v1277
    %v1279 = vpop.f32.mrb[0].mxu0
    %v1280 = vpop.f32.mrb[0].mxu0
    %v1281 = vadd.f32 %v1145, %v1280
    %v1282 = vpop.f32.mrb[0].mxu0
    %1283 = vmatprep.mubr.bf16.mxu0 %v516
    %1284 = vmatmul.mubr.bf16.gmra.mrb[0].mxu0 %v515
    %v1285 = vpop.f32.mrb[0].mxu0
    %v1286 = vadd.f32 %v1150, %v1285
    %v1287 = vpop.f32.mrb[0].mxu0
    %v1288 = vpop.f32.mrb[0].mxu0
    %v1289 = vpop.f32.mrb[0].mxu0
    %1290 = vdwg.mxu0
    %v1291 = vmax.f32 %v1190, 0.0
    %v1292 = vmax.f32 %v1193, 0.0
    %v1293 = vmax.f32 %v1198, 0.0
    %v1294 = vmax.f32 %v1201, 0.0
    %v1295 = vmax.f32 %v1206, 0.0
    %v1296 = vmax.f32 %v1209, 0.0
    %v1297 = vmax.f32 %v1214, 0.0
    %v1298 = vmax.f32 %v1217, 0.0
    %v1299 = vmax.f32 %v1222, 0.0
    %v1300 = vmax.f32 %v1225, 0.0
    %v1301 = vmax.f32 %v1230, 0.0
    %v1302 = vmax.f32 %v1233, 0.0
    %v1303 = vmax.f32 %v1238, 0.0
    %v1304 = vmax.f32 %v1241, 0.0
    %v1305 = vmax.f32 %v1246, 0.0
    %v1306 = vmax.f32 %v1249, 0.0
    %v1307 = vmax.f32 %v1254, 0.0
    %v1308 = vmax.f32 %v1257, 0.0
    %v1309 = vmax.f32 %v1262, 0.0
    %v1310 = vmax.f32 %v1265, 0.0
    %v1311 = vmax.f32 %v1270, 0.0
    %v1312 = vmax.f32 %v1273, 0.0
    %v1313 = vmax.f32 %v1278, 0.0
    %v1314 = vmax.f32 %v1281, 0.0
    %v1315 = vmax.f32 %v1286, 0.0
    %v1316 = vadd.f32 %v1291, %v1292
    %v1317 = vadd.f32 %v1316, %v1293
    %v1318 = vadd.f32 %v1317, %v1294
    %v1319 = vadd.f32 %v1318, %v1295
    %v1320 = vadd.f32 %v1319, %v1296
    %v1321 = vadd.f32 %v1320, %v1297
    %v1322 = vadd.f32 %v1321, %v1298
    %v1323 = vadd.f32 %v1322, %v1299
    %v1324 = vadd.f32 %v1323, %v1300
    %v1325 = vadd.f32 %v1324, %v1301
    %v1326 = vadd.f32 %v1325, %v1302
    %v1327 = vadd.f32 %v1326, %v1303
    %v1328 = vadd.f32 %v1327, %v1304
    %v1329 = vadd.f32 %v1328, %v1305
    %v1330 = vadd.f32 %v1329, %v1306
    %v1331 = vadd.f32 %v1330, %v1307
    %v1332 = vadd.f32 %v1331, %v1308
    %v1333 = vadd.f32 %v1332, %v1309
    %v1334 = vadd.f32 %v1333, %v1310
    %v1335 = vadd.f32 %v1334, %v1311
    %v1336 = vadd.f32 %v1335, %v1312
    %v1337 = vadd.f32 %v1336, %v1313
    %v1338 = vadd.f32 %v1337, %v1314
    %vm1339 = vcmask 1043456
    %v1340 = vsel %vm1339, %v1315, 0.0
    %v1341 = vadd.f32 %v1338, %v1340
    %v1342 = vrot.slane %v1341, 4
    %v1343 = vadd.f32 %v1341, %v1342
    %v1344 = vrot.slane %v1343, 2
    %v1345 = vadd.f32 %v1343, %v1344
    %v1346 = vrot.slane %v1345, 1
    %v1347 = vadd.f32 %v1345, %v1346
    %v1348 = vrcp.pop 196.0
    %v1349 = vmul.f32 %v1347, %v1348
    %s1350 = scalar_lea.vmem %s0, 600
    %v1351 = vld [vmem:[%s1350] sm:$0xff]
    %v1352 = vld [vmem:[%s1350 + $0x8] sm:$0xff]
    %v1353 = vld [vmem:[%s1350 + $0x10] sm:$0xff]
    %v1354 = vld [vmem:[%s1350 + $0x18] sm:$0xff]
    %v1355 = vld [vmem:[%s1350 + $0x20] sm:$0xff]
    %v1356 = vld [vmem:[%s1350 + $0x28] sm:$0xff]
    %v1357 = vld [vmem:[%s1350 + $0x30] sm:$0xff]
    %v1358 = vld [vmem:[%s1350 + $0x38] sm:$0xff]
    %v1359 = vld [vmem:[%s1350 + $0x40] sm:$0xff]
    %v1360 = vld [vmem:[%s1350 + $0x48] sm:$0xff]
    %v1361 = vld [vmem:[%s1350 + $0x50] sm:$0xff]
    %v1362 = vld [vmem:[%s1350 + $0x58] sm:$0xff]
    %v1363 = vld [vmem:[%s1350 + $0x60] sm:$0xff]
    %v1364 = vld [vmem:[%s1350 + $0x68] sm:$0xff]
    %v1365 = vld [vmem:[%s1350 + $0x70] sm:$0xff]
    %v1366 = vld [vmem:[%s1350 + $0x78] sm:$0xff]
    %v1367 = vld [vmem:[%s1350 + $0x80] sm:$0xff]
    %v1368 = vld [vmem:[%s1350 + $0x88] sm:$0xff]
    %v1369 = vld [vmem:[%s1350 + $0x90] sm:$0xff]
    %v1370 = vld [vmem:[%s1350 + $0x98] sm:$0xff]
    %v1371 = vld [vmem:[%s1350 + $0xa0] sm:$0xff]
    %v1372 = vld [vmem:[%s1350 + $0xa8] sm:$0xff]
    %v1373 = vld [vmem:[%s1350 + $0xb0] sm:$0xff]
    %v1374 = vld [vmem:[%s1350 + $0xb8] sm:$0xff]
    %v1375 = vld [vmem:[%s1350 + $0xc0] sm:$0xff]
    %v1376 = vld [vmem:[%s1350 + $0xc8] sm:$0xff]
    %v1377 = vld [vmem:[%s1350 + $0xd0] sm:$0xff]
    %v1378 = vld [vmem:[%s1350 + $0xd8] sm:$0xff]
    %v1379 = vld [vmem:[%s1350 + $0xe0] sm:$0xff]
    %v1380 = vld [vmem:[%s1350 + $0xe8] sm:$0xff]
    %v1381 = vld [vmem:[%s1350 + $0xf0] sm:$0xff]
    %v1382 = vld [vmem:[%s1350 + $0xf8] sm:$0xff]
    %v1383 = vld [vmem:[%s1350 + $0x100] sm:$0xff]
    %v1384 = vld [vmem:[%s1350 + $0x108] sm:$0xff]
    %v1385 = vld [vmem:[%s1350 + $0x110] sm:$0xff]
    %v1386 = vld [vmem:[%s1350 + $0x118] sm:$0xff]
    %v1387 = vld [vmem:[%s1350 + $0x120] sm:$0xff]
    %v1388 = vld [vmem:[%s1350 + $0x128] sm:$0xff]
    %v1389 = vld [vmem:[%s1350 + $0x130] sm:$0xff]
    %v1390 = vld [vmem:[%s1350 + $0x138] sm:$0xff]
    %v1391 = vld [vmem:[%s1350 + $0x140] sm:$0xff]
    %v1392 = vld [vmem:[%s1350 + $0x148] sm:$0xff]
    %v1393 = vld [vmem:[%s1350 + $0x150] sm:$0xff]
    %v1394 = vld [vmem:[%s1350 + $0x158] sm:$0xff]
    %v1395 = vld [vmem:[%s1350 + $0x160] sm:$0xff]
    %v1396 = vld [vmem:[%s1350 + $0x168] sm:$0xff]
    %v1397 = vld [vmem:[%s1350 + $0x170] sm:$0xff]
    %v1398 = vld [vmem:[%s1350 + $0x178] sm:$0xff]
    %v1399 = vld [vmem:[%s1350 + $0x180] sm:$0xff]
    %v1400 = vld [vmem:[%s1350 + $0x188] sm:$0xff]
    %v1401 = vld [vmem:[%s1350 + $0x190] sm:$0xff]
    %v1402 = vld [vmem:[%s1350 + $0x198] sm:$0xff]
    %v1403 = vld [vmem:[%s1350 + $0x1a0] sm:$0xff]
    %v1404 = vld [vmem:[%s1350 + $0x1a8] sm:$0xff]
    %v1405 = vld [vmem:[%s1350 + $0x1b0] sm:$0xff]
    %v1406 = vld [vmem:[%s1350 + $0x1b8] sm:$0xff]
    %v1407 = vld [vmem:[%s1350 + $0x1c0] sm:$0xff]
    %v1408 = vld [vmem:[%s1350 + $0x1c8] sm:$0xff]
    %v1409 = vld [vmem:[%s1350 + $0x1d0] sm:$0xff]
    %v1410 = vld [vmem:[%s1350 + $0x1d8] sm:$0xff]
    %v1411 = vld [vmem:[%s1350 + $0x1e0] sm:$0xff]
    %v1412 = vld [vmem:[%s1350 + $0x1e8] sm:$0xff]
    %v1413 = vld [vmem:[%s1350 + $0x1f0] sm:$0xff]
    %v1414 = vld [vmem:[%s1350 + $0x1f8] sm:$0xff]
    %v1415 = vld [vmem:[%s1350 + $0x200] sm:$0xff]
    %v1416 = vld [vmem:[%s1350 + $0x208] sm:$0xff]
    %v1417 = vld [vmem:[%s1350 + $0x210] sm:$0xff]
    %v1418 = vld [vmem:[%s1350 + $0x218] sm:$0xff]
    %v1419 = vld [vmem:[%s1350 + $0x220] sm:$0xff]
    %v1420 = vld [vmem:[%s1350 + $0x228] sm:$0xff]
    %v1421 = vld [vmem:[%s1350 + $0x230] sm:$0xff]
    %v1422 = vld [vmem:[%s1350 + $0x238] sm:$0xff]
    %v1423 = vld [vmem:[%s1350 + $0x240] sm:$0x33]
    %v1424 = vld [vmem:[%s1350 + $0x248] sm:$0x33]
    %v1425 = vld [vmem:[%s1350 + $0x250] sm:$0x33]
    %v1501 = vunpack.c.l.b16 %v1351
    %v1502 = vunpack.c.h.b16 %v1351
    %v1503 = vunpack.c.l.b16 %v1352
    %v1504 = vunpack.c.h.b16 %v1352
    %v1505 = vunpack.c.l.b16 %v1353
    %v1506 = vunpack.c.h.b16 %v1353
    %v1507 = vunpack.c.l.b16 %v1354
    %v1508 = vunpack.c.h.b16 %v1354
    %v1509 = vunpack.c.l.b16 %v1355
    %v1510 = vunpack.c.h.b16 %v1355
    %v1511 = vunpack.c.l.b16 %v1356
    %v1512 = vunpack.c.h.b16 %v1356
    %v1513 = vunpack.c.l.b16 %v1357
    %v1514 = vunpack.c.h.b16 %v1357
    %v1515 = vunpack.c.l.b16 %v1358
    %v1516 = vunpack.c.h.b16 %v1358
    %v1517 = vunpack.c.l.b16 %v1359
    %v1518 = vunpack.c.h.b16 %v1359
    %v1519 = vunpack.c.l.b16 %v1360
    %v1520 = vunpack.c.h.b16 %v1360
    %v1521 = vunpack.c.l.b16 %v1361
    %v1522 = vunpack.c.h.b16 %v1361
    %v1523 = vunpack.c.l.b16 %v1362
    %v1524 = vunpack.c.h.b16 %v1362
    %v1525 = vunpack.c.l.b16 %v1363
    %v1526 = vunpack.c.h.b16 %v1363
    %v1527 = vunpack.c.l.b16 %v1364
    %v1528 = vunpack.c.h.b16 %v1364
    %v1529 = vunpack.c.l.b16 %v1365
    %v1530 = vunpack.c.h.b16 %v1365
    %v1531 = vunpack.c.l.b16 %v1366
    %v1532 = vunpack.c.h.b16 %v1366
    %v1533 = vunpack.c.l.b16 %v1367
    %v1534 = vunpack.c.h.b16 %v1367
    %v1535 = vunpack.c.l.b16 %v1368
    %v1536 = vunpack.c.h.b16 %v1368
    %v1537 = vunpack.c.l.b16 %v1369
    %v1538 = vunpack.c.h.b16 %v1369
    %v1539 = vunpack.c.l.b16 %v1370
    %v1540 = vunpack.c.h.b16 %v1370
    %v1541 = vunpack.c.l.b16 %v1371
    %v1542 = vunpack.c.h.b16 %v1371
    %v1543 = vunpack.c.l.b16 %v1372
    %v1544 = vunpack.c.h.b16 %v1372
    %v1545 = vunpack.c.l.b16 %v1373
    %v1546 = vunpack.c.h.b16 %v1373
    %v1547 = vunpack.c.l.b16 %v1374
    %v1548 = vunpack.c.h.b16 %v1374
    %v1549 = vunpack.c.l.b16 %v1375
    %v1550 = vunpack.c.h.b16 %v1375
    %v1551 = vunpack.c.l.b16 %v1376
    %v1552 = vunpack.c.h.b16 %v1376
    %v1553 = vunpack.c.l.b16 %v1377
    %v1554 = vunpack.c.h.b16 %v1377
    %v1555 = vunpack.c.l.b16 %v1378
    %v1556 = vunpack.c.h.b16 %v1378
    %v1557 = vunpack.c.l.b16 %v1379
    %v1558 = vunpack.c.h.b16 %v1379
    %v1559 = vunpack.c.l.b16 %v1380
    %v1560 = vunpack.c.h.b16 %v1380
    %v1561 = vunpack.c.l.b16 %v1381
    %v1562 = vunpack.c.h.b16 %v1381
    %v1563 = vunpack.c.l.b16 %v1382
    %v1564 = vunpack.c.h.b16 %v1382
    %v1565 = vunpack.c.l.b16 %v1383
    %v1566 = vunpack.c.h.b16 %v1383
    %v1567 = vunpack.c.l.b16 %v1384
    %v1568 = vunpack.c.h.b16 %v1384
    %v1569 = vunpack.c.l.b16 %v1385
    %v1570 = vunpack.c.h.b16 %v1385
    %v1571 = vunpack.c.l.b16 %v1386
    %v1572 = vunpack.c.h.b16 %v1386
    %v1573 = vunpack.c.l.b16 %v1387
    %v1574 = vunpack.c.h.b16 %v1387
    %v1575 = vunpack.c.l.b16 %v1388
    %v1576 = vunpack.c.h.b16 %v1388
    %v1577 = vunpack.c.l.b16 %v1389
    %v1578 = vunpack.c.h.b16 %v1389
    %v1579 = vunpack.c.l.b16 %v1390
    %v1580 = vunpack.c.h.b16 %v1390
    %v1581 = vunpack.c.l.b16 %v1391
    %v1582 = vunpack.c.h.b16 %v1391
    %v1583 = vunpack.c.l.b16 %v1392
    %v1584 = vunpack.c.h.b16 %v1392
    %v1585 = vunpack.c.l.b16 %v1393
    %v1586 = vunpack.c.h.b16 %v1393
    %v1587 = vunpack.c.l.b16 %v1394
    %v1588 = vunpack.c.h.b16 %v1394
    %v1589 = vunpack.c.l.b16 %v1395
    %v1590 = vunpack.c.h.b16 %v1395
    %v1591 = vunpack.c.l.b16 %v1396
    %v1592 = vunpack.c.h.b16 %v1396
    %v1593 = vunpack.c.l.b16 %v1397
    %v1594 = vunpack.c.h.b16 %v1397
    %v1595 = vunpack.c.l.b16 %v1398
    %v1596 = vunpack.c.h.b16 %v1398
    %v1597 = vunpack.c.l.b16 %v1399
    %v1598 = vunpack.c.h.b16 %v1399
    %v1599 = vunpack.c.l.b16 %v1400
    %v1600 = vunpack.c.h.b16 %v1400
    %v1601 = vunpack.c.l.b16 %v1401
    %v1602 = vunpack.c.h.b16 %v1401
    %v1603 = vunpack.c.l.b16 %v1402
    %v1604 = vunpack.c.h.b16 %v1402
    %v1605 = vunpack.c.l.b16 %v1403
    %v1606 = vunpack.c.h.b16 %v1403
    %v1607 = vunpack.c.l.b16 %v1404
    %v1608 = vunpack.c.h.b16 %v1404
    %v1609 = vunpack.c.l.b16 %v1405
    %v1610 = vunpack.c.h.b16 %v1405
    %v1611 = vunpack.c.l.b16 %v1406
    %v1612 = vunpack.c.h.b16 %v1406
    %v1613 = vunpack.c.l.b16 %v1407
    %v1614 = vunpack.c.h.b16 %v1407
    %v1615 = vunpack.c.l.b16 %v1408
    %v1616 = vunpack.c.h.b16 %v1408
    %v1617 = vunpack.c.l.b16 %v1409
    %v1618 = vunpack.c.h.b16 %v1409
    %v1619 = vunpack.c.l.b16 %v1410
    %v1620 = vunpack.c.h.b16 %v1410
    %v1621 = vunpack.c.l.b16 %v1411
    %v1622 = vunpack.c.h.b16 %v1411
    %v1623 = vunpack.c.l.b16 %v1412
    %v1624 = vunpack.c.h.b16 %v1412
    %v1625 = vunpack.c.l.b16 %v1413
    %v1626 = vunpack.c.h.b16 %v1413
    %v1627 = vunpack.c.l.b16 %v1414
    %v1628 = vunpack.c.h.b16 %v1414
    %v1629 = vunpack.c.l.b16 %v1415
    %v1630 = vunpack.c.h.b16 %v1415
    %v1631 = vunpack.c.l.b16 %v1416
    %v1632 = vunpack.c.h.b16 %v1416
    %v1633 = vunpack.c.l.b16 %v1417
    %v1634 = vunpack.c.h.b16 %v1417
    %v1635 = vunpack.c.l.b16 %v1418
    %v1636 = vunpack.c.h.b16 %v1418
    %v1637 = vunpack.c.l.b16 %v1419
    %v1638 = vunpack.c.h.b16 %v1419
    %v1639 = vunpack.c.l.b16 %v1420
    %v1640 = vunpack.c.h.b16 %v1420
    %v1641 = vunpack.c.l.b16 %v1421
    %v1642 = vunpack.c.h.b16 %v1421
    %v1643 = vunpack.c.l.b16 %v1422
    %v1644 = vunpack.c.h.b16 %v1422
    %v1645 = vunpack.c.l.b16 %v1423
    %v1646 = vunpack.c.h.b16 %v1423
    %v1647 = vunpack.c.l.b16 %v1424
    %v1648 = vunpack.c.h.b16 %v1424
    %v1649 = vunpack.c.l.b16 %v1425
    %v1650 = vunpack.c.h.b16 %v1425
    %v1651 = vpack.c.b16 %v1507, %v1501
    %v1652 = vpack.c.b16 %v1508, %v1502
    %v1653 = vpack.c.b16 %v1509, %v1503
    %v1654 = vpack.c.b16 %v1510, %v1504
    %v1655 = vpack.c.b16 %v1511, %v1505
    %v1656 = vpack.c.b16 %v1512, %v1506
    %v1657 = vpack.c.b16 %v1519, %v1513
    %v1658 = vpack.c.b16 %v1520, %v1514
    %v1659 = vpack.c.b16 %v1521, %v1515
    %v1660 = vpack.c.b16 %v1522, %v1516
    %v1661 = vpack.c.b16 %v1523, %v1517
    %v1662 = vpack.c.b16 %v1524, %v1518
    %v1663 = vpack.c.b16 %v1531, %v1525
    %v1664 = vpack.c.b16 %v1532, %v1526
    %v1665 = vpack.c.b16 %v1533, %v1527
    %v1666 = vpack.c.b16 %v1534, %v1528
    %v1667 = vpack.c.b16 %v1535, %v1529
    %v1668 = vpack.c.b16 %v1536, %v1530
    %v1669 = vpack.c.b16 %v1543, %v1537
    %v1670 = vpack.c.b16 %v1544, %v1538
    %v1671 = vpack.c.b16 %v1545, %v1539
    %v1672 = vpack.c.b16 %v1546, %v1540
    %v1673 = vpack.c.b16 %v1547, %v1541
    %v1674 = vpack.c.b16 %v1548, %v1542
    %v1675 = vpack.c.b16 %v1555, %v1549
    %v1676 = vpack.c.b16 %v1556, %v1550
    %v1677 = vpack.c.b16 %v1557, %v1551
    %v1678 = vpack.c.b16 %v1558, %v1552
    %v1679 = vpack.c.b16 %v1559, %v1553
    %v1680 = vpack.c.b16 %v1560, %v1554
    %v1681 = vpack.c.b16 %v1567, %v1561
    %v1682 = vpack.c.b16 %v1568, %v1562
    %v1683 = vpack.c.b16 %v1569, %v1563
    %v1684 = vpack.c.b16 %v1570, %v1564
    %v1685 = vpack.c.b16 %v1571, %v1565
    %v1686 = vpack.c.b16 %v1572, %v1566
    %v1687 = vpack.c.b16 %v1579, %v1573
    %v1688 = vpack.c.b16 %v1580, %v1574
    %v1689 = vpack.c.b16 %v1581, %v1575
    %v1690 = vpack.c.b16 %v1582, %v1576
    %v1691 = vpack.c.b16 %v1583, %v1577
    %v1692 = vpack.c.b16 %v1584, %v1578
    %v1693 = vpack.c.b16 %v1591, %v1585
    %v1694 = vpack.c.b16 %v1592, %v1586
    %v1695 = vpack.c.b16 %v1593, %v1587
    %v1696 = vpack.c.b16 %v1594, %v1588
    %v1697 = vpack.c.b16 %v1595, %v1589
    %v1698 = vpack.c.b16 %v1596, %v1590
    %v1699 = vpack.c.b16 %v1603, %v1597
    %v1700 = vpack.c.b16 %v1604, %v1598
    %v1701 = vpack.c.b16 %v1605, %v1599
    %v1702 = vpack.c.b16 %v1606, %v1600
    %v1703 = vpack.c.b16 %v1607, %v1601
    %v1704 = vpack.c.b16 %v1608, %v1602
    %v1705 = vpack.c.b16 %v1615, %v1609
    %v1706 = vpack.c.b16 %v1616, %v1610
    %v1707 = vpack.c.b16 %v1617, %v1611
    %v1708 = vpack.c.b16 %v1618, %v1612
    %v1709 = vpack.c.b16 %v1619, %v1613
    %v1710 = vpack.c.b16 %v1620, %v1614
    %v1711 = vpack.c.b16 %v1627, %v1621
    %v1712 = vpack.c.b16 %v1628, %v1622
    %v1713 = vpack.c.b16 %v1629, %v1623
    %v1714 = vpack.c.b16 %v1630, %v1624
    %v1715 = vpack.c.b16 %v1631, %v1625
    %v1716 = vpack.c.b16 %v1632, %v1626
    %v1717 = vpack.c.b16 %v1639, %v1633
    %v1718 = vpack.c.b16 %v1640, %v1634
    %v1719 = vpack.c.b16 %v1641, %v1635
    %v1720 = vpack.c.b16 %v1642, %v1636
    %v1721 = vpack.c.b16 %v1643, %v1637
    %v1722 = vpack.c.b16 %v1644, %v1638
    %v1723 = vpack.c.b16 %v1645, %v1645
    %v1724 = vpack.c.b16 %v1646, %v1646
    %v1725 = vpack.c.b16 %v1647, %v1647
    %v1726 = vpack.c.b16 %v1648, %v1648
    %v1727 = vpack.c.b16 %v1649, %v1649
    %v1728 = vpack.c.b16 %v1650, %v1650
    %1807 = vmatprep.subr.bf16.mxu0 0
    %1808 = vmatpush1.bf16.msra.mxu0 %v787
    %1809 = vmatprep.subr.bf16.mxu0 0
    %1810 = vmatpush1.bf16.msra.mxu0 %v788
    %1811 = vmatprep.subr.bf16.mxu0 0
    %1812 = vmatpush1.bf16.msra.mxu0 %v789
    %1813 = vmatprep.subr.bf16.mxu0 0
    %1814 = vmatpush1.bf16.msra.mxu0 %v790
    %1815 = vmatprep.subr.bf16.mxu0 0
    %1816 = vmatpush1.bf16.msra.mxu0 %v791
    %1817 = vmatprep.subr.bf16.mxu0 0
    %1818 = vmatpush1.bf16.msra.mxu0 %v792
    %1819 = vmatprep.subr.bf16.mxu0 0
    %1820 = vmatpush1.bf16.msra.mxu0 %v793
    %1821 = vmatprep.subr.bf16.mxu0 0
    %1822 = vmatpush1.bf16.msra.mxu0 %v794
    %1823 = vmatprep.subr.bf16.mxu0 0
    %1824 = vmatpush1.bf16.msra.mxu0 %v795
    %1825 = vmatprep.subr.bf16.mxu0 0
    %1826 = vmatpush1.bf16.msra.mxu0 %v796
    %1827 = vmatprep.subr.bf16.mxu0 0
    %1828 = vmatpush1.bf16.msra.mxu0 %v797
    %1829 = vmatprep.subr.bf16.mxu0 0
    %1830 = vmatpush1.bf16.msra.mxu0 %v798
    %1831 = vmatprep.subr.bf16.mxu0 0
    %1832 = vmatpush1.bf16.msra.mxu0 %v799
    %1833 = vmatprep.subr.bf16.mxu0 0
    %1834 = vmatpush1.bf16.msra.mxu0 %v800
    %1835 = vmatprep.subr.bf16.mxu0 0
    %1836 = vmatpush1.bf16.msra.mxu0 %v801
    %1837 = vmatprep.subr.bf16.mxu0 0
    %1838 = vmatpush1.bf16.msra.mxu0 %v802
    %1839 = vmatprep.mubr.bf16.mxu0 %v1652
    %1840 = vmatmul.mubr.bf16.gmra.mrb[0].mxu0 %v1651
    %v1841 = vpop.f32.mrb[0].mxu0
    %v1842 = vadd.f32 %v212, %v1841
    %v1843 = vpop.f32.mrb[0].mxu0
    %v1844 = vpop.f32.mrb[0].mxu0
    %v1845 = vadd.f32 %v212, %v1844
    %v1846 = vpop.f32.mrb[0].mxu0
    %1847 = vmatprep.mubr.bf16.mxu0 %v1658
    %1848 = vmatmul.mubr.bf16.gmra.mrb[0].mxu0 %v1657
    %v1849 = vpop.f32.mrb[0].mxu0
    %v1850 = vadd.f32 %v212, %v1849
    %v1851 = vpop.f32.mrb[0].mxu0
    %v1852 = vpop.f32.mrb[0].mxu0
    %v1853 = vadd.f32 %v212, %v1852
    %v1854 = vpop.f32.mrb[0].mxu0
    %1855 = vmatprep.mubr.bf16.mxu0 %v1664
    %1856 = vmatmul.mubr.bf16.gmra.mrb[0].mxu0 %v1663
    %v1857 = vpop.f32.mrb[0].mxu0
    %v1858 = vadd.f32 %v212, %v1857
    %v1859 = vpop.f32.mrb[0].mxu0
    %v1860 = vpop.f32.mrb[0].mxu0
    %v1861 = vadd.f32 %v212, %v1860
    %v1862 = vpop.f32.mrb[0].mxu0
    %1863 = vmatprep.mubr.bf16.mxu0 %v1670
    %1864 = vmatmul.mubr.bf16.gmra.mrb[0].mxu0 %v1669
    %v1865 = vpop.f32.mrb[0].mxu0
    %v1866 = vadd.f32 %v212, %v1865
    %v1867 = vpop.f32.mrb[0].mxu0
    %v1868 = vpop.f32.mrb[0].mxu0
    %v1869 = vadd.f32 %v212, %v1868
    %v1870 = vpop.f32.mrb[0].mxu0
    %1871 = vmatprep.mubr.bf16.mxu0 %v1676
    %1872 = vmatmul.mubr.bf16.gmra.mrb[0].mxu0 %v1675
    %v1873 = vpop.f32.mrb[0].mxu0
    %v1874 = vadd.f32 %v212, %v1873
    %v1875 = vpop.f32.mrb[0].mxu0
    %v1876 = vpop.f32.mrb[0].mxu0
    %v1877 = vadd.f32 %v212, %v1876
    %v1878 = vpop.f32.mrb[0].mxu0
    %1879 = vmatprep.mubr.bf16.mxu0 %v1682
    %1880 = vmatmul.mubr.bf16.gmra.mrb[0].mxu0 %v1681
    %v1881 = vpop.f32.mrb[0].mxu0
    %v1882 = vadd.f32 %v212, %v1881
    %v1883 = vpop.f32.mrb[0].mxu0
    %v1884 = vpop.f32.mrb[0].mxu0
    %v1885 = vadd.f32 %v212, %v1884
    %v1886 = vpop.f32.mrb[0].mxu0
    %1887 = vmatprep.mubr.bf16.mxu0 %v1688
    %1888 = vmatmul.mubr.bf16.gmra.mrb[0].mxu0 %v1687
    %v1889 = vpop.f32.mrb[0].mxu0
    %v1890 = vadd.f32 %v212, %v1889
    %v1891 = vpop.f32.mrb[0].mxu0
    %v1892 = vpop.f32.mrb[0].mxu0
    %v1893 = vadd.f32 %v212, %v1892
    %v1894 = vpop.f32.mrb[0].mxu0
    %1895 = vmatprep.mubr.bf16.mxu0 %v1694
    %1896 = vmatmul.mubr.bf16.gmra.mrb[0].mxu0 %v1693
    %v1897 = vpop.f32.mrb[0].mxu0
    %v1898 = vadd.f32 %v212, %v1897
    %v1899 = vpop.f32.mrb[0].mxu0
    %v1900 = vpop.f32.mrb[0].mxu0
    %v1901 = vadd.f32 %v212, %v1900
    %v1902 = vpop.f32.mrb[0].mxu0
    %1903 = vmatprep.mubr.bf16.mxu0 %v1700
    %1904 = vmatmul.mubr.bf16.gmra.mrb[0].mxu0 %v1699
    %v1905 = vpop.f32.mrb[0].mxu0
    %v1906 = vadd.f32 %v212, %v1905
    %v1907 = vpop.f32.mrb[0].mxu0
    %v1908 = vpop.f32.mrb[0].mxu0
    %v1909 = vadd.f32 %v212, %v1908
    %v1910 = vpop.f32.mrb[0].mxu0
    %1911 = vmatprep.mubr.bf16.mxu0 %v1706
    %1912 = vmatmul.mubr.bf16.gmra.mrb[0].mxu0 %v1705
    %v1913 = vpop.f32.mrb[0].mxu0
    %v1914 = vadd.f32 %v212, %v1913
    %v1915 = vpop.f32.mrb[0].mxu0
    %v1916 = vpop.f32.mrb[0].mxu0
    %v1917 = vadd.f32 %v212, %v1916
    %v1918 = vpop.f32.mrb[0].mxu0
    %1919 = vmatprep.mubr.bf16.mxu0 %v1712
    %1920 = vmatmul.mubr.bf16.gmra.mrb[0].mxu0 %v1711
    %v1921 = vpop.f32.mrb[0].mxu0
    %v1922 = vadd.f32 %v212, %v1921
    %v1923 = vpop.f32.mrb[0].mxu0
    %v1924 = vpop.f32.mrb[0].mxu0
    %v1925 = vadd.f32 %v212, %v1924
    %v1926 = vpop.f32.mrb[0].mxu0
    %1927 = vmatprep.mubr.bf16.mxu0 %v1718
    %1928 = vmatmul.mubr.bf16.gmra.mrb[0].mxu0 %v1717
    %v1929 = vpop.f32.mrb[0].mxu0
    %v1930 = vadd.f32 %v212, %v1929
    %v1931 = vpop.f32.mrb[0].mxu0
    %v1932 = vpop.f32.mrb[0].mxu0
    %v1933 = vadd.f32 %v212, %v1932
    %v1934 = vpop.f32.mrb[0].mxu0
    %1935 = vmatprep.mubr.bf16.mxu0 %v1724
    %1936 = vmatmul.mubr.bf16.gmra.mrb[0].mxu0 %v1723
    %v1937 = vpop.f32.mrb[0].mxu0
    %v1938 = vadd.f32 %v212, %v1937
    %v1939 = vpop.f32.mrb[0].mxu0
    %v1940 = vpop.f32.mrb[0].mxu0
    %v1941 = vpop.f32.mrb[0].mxu0
    %1942 = vdwg.mxu0
    %1943 = vmatprep.subr.bf16.mxu0 0
    %1944 = vmatpush1.bf16.msra.mxu0 %v803
    %1945 = vmatprep.subr.bf16.mxu0 0
    %1946 = vmatpush1.bf16.msra.mxu0 %v804
    %1947 = vmatprep.subr.bf16.mxu0 0
    %1948 = vmatpush1.bf16.msra.mxu0 %v805
    %1949 = vmatprep.subr.bf16.mxu0 0
    %1950 = vmatpush1.bf16.msra.mxu0 %v806
    %1951 = vmatprep.subr.bf16.mxu0 0
    %1952 = vmatpush1.bf16.msra.mxu0 %v807
    %1953 = vmatprep.subr.bf16.mxu0 0
    %1954 = vmatpush1.bf16.msra.mxu0 %v808
    %1955 = vmatprep.subr.bf16.mxu0 0
    %1956 = vmatpush1.bf16.msra.mxu0 %v809
    %1957 = vmatprep.subr.bf16.mxu0 0
    %1958 = vmatpush1.bf16.msra.mxu0 %v810
    %1959 = vmatprep.subr.bf16.mxu0 0
    %1960 = vmatpush1.bf16.msra.mxu0 %v811
    %1961 = vmatprep.subr.bf16.mxu0 0
    %1962 = vmatpush1.bf16.msra.mxu0 %v812
    %1963 = vmatprep.subr.bf16.mxu0 0
    %1964 = vmatpush1.bf16.msra.mxu0 %v813
    %1965 = vmatprep.subr.bf16.mxu0 0
    %1966 = vmatpush1.bf16.msra.mxu0 %v814
    %1967 = vmatprep.subr.bf16.mxu0 0
    %1968 = vmatpush1.bf16.msra.mxu0 %v815
    %1969 = vmatprep.subr.bf16.mxu0 0
    %1970 = vmatpush1.bf16.msra.mxu0 %v816
    %1971 = vmatprep.subr.bf16.mxu0 0
    %1972 = vmatpush1.bf16.msra.mxu0 %v817
    %1973 = vmatprep.subr.bf16.mxu0 0
    %1974 = vmatpush1.bf16.msra.mxu0 %v818
    %1975 = vmatprep.mubr.bf16.mxu0 %v1654
    %1976 = vmatmul.mubr.bf16.gmra.mrb[0].mxu0 %v1653
    %v1977 = vpop.f32.mrb[0].mxu0
    %v1978 = vadd.f32 %v1842, %v1977
    %v1979 = vpop.f32.mrb[0].mxu0
    %v1980 = vpop.f32.mrb[0].mxu0
    %v1981 = vadd.f32 %v1845, %v1980
    %v1982 = vpop.f32.mrb[0].mxu0
    %1983 = vmatprep.mubr.bf16.mxu0 %v1660
    %1984 = vmatmul.mubr.bf16.gmra.mrb[0].mxu0 %v1659
    %v1985 = vpop.f32.mrb[0].mxu0
    %v1986 = vadd.f32 %v1850, %v1985
    %v1987 = vpop.f32.mrb[0].mxu0
    %v1988 = vpop.f32.mrb[0].mxu0
    %v1989 = vadd.f32 %v1853, %v1988
    %v1990 = vpop.f32.mrb[0].mxu0
    %1991 = vmatprep.mubr.bf16.mxu0 %v1666
    %1992 = vmatmul.mubr.bf16.gmra.mrb[0].mxu0 %v1665
    %v1993 = vpop.f32.mrb[0].mxu0
    %v1994 = vadd.f32 %v1858, %v1993
    %v1995 = vpop.f32.mrb[0].mxu0
    %v1996 = vpop.f32.mrb[0].mxu0
    %v1997 = vadd.f32 %v1861, %v1996
    %v1998 = vpop.f32.mrb[0].mxu0
    %1999 = vmatprep.mubr.bf16.mxu0 %v1672
    %2000 = vmatmul.mubr.bf16.gmra.mrb[0].mxu0 %v1671
    %v2001 = vpop.f32.mrb[0].mxu0
    %v2002 = vadd.f32 %v1866, %v2001
    %v2003 = vpop.f32.mrb[0].mxu0
    %v2004 = vpop.f32.mrb[0].mxu0
    %v2005 = vadd.f32 %v1869, %v2004
    %v2006 = vpop.f32.mrb[0].mxu0
    %2007 = vmatprep.mubr.bf16.mxu0 %v1678
    %2008 = vmatmul.mubr.bf16.gmra.mrb[0].mxu0 %v1677
    %v2009 = vpop.f32.mrb[0].mxu0
    %v2010 = vadd.f32 %v1874, %v2009
    %v2011 = vpop.f32.mrb[0].mxu0
    %v2012 = vpop.f32.mrb[0].mxu0
    %v2013 = vadd.f32 %v1877, %v2012
    %v2014 = vpop.f32.mrb[0].mxu0
    %2015 = vmatprep.mubr.bf16.mxu0 %v1684
    %2016 = vmatmul.mubr.bf16.gmra.mrb[0].mxu0 %v1683
    %v2017 = vpop.f32.mrb[0].mxu0
    %v2018 = vadd.f32 %v1882, %v2017
    %v2019 = vpop.f32.mrb[0].mxu0
    %v2020 = vpop.f32.mrb[0].mxu0
    %v2021 = vadd.f32 %v1885, %v2020
    %v2022 = vpop.f32.mrb[0].mxu0
    %2023 = vmatprep.mubr.bf16.mxu0 %v1690
    %2024 = vmatmul.mubr.bf16.gmra.mrb[0].mxu0 %v1689
    %v2025 = vpop.f32.mrb[0].mxu0
    %v2026 = vadd.f32 %v1890, %v2025
    %v2027 = vpop.f32.mrb[0].mxu0
    %v2028 = vpop.f32.mrb[0].mxu0
    %v2029 = vadd.f32 %v1893, %v2028
    %v2030 = vpop.f32.mrb[0].mxu0
    %2031 = vmatprep.mubr.bf16.mxu0 %v1696
    %2032 = vmatmul.mubr.bf16.gmra.mrb[0].mxu0 %v1695
    %v2033 = vpop.f32.mrb[0].mxu0
    %v2034 = vadd.f32 %v1898, %v2033
    %v2035 = vpop.f32.mrb[0].mxu0
    %v2036 = vpop.f32.mrb[0].mxu0
    %v2037 = vadd.f32 %v1901, %v2036
    %v2038 = vpop.f32.mrb[0].mxu0
    %2039 = vmatprep.mubr.bf16.mxu0 %v1702
    %2040 = vmatmul.mubr.bf16.gmra.mrb[0].mxu0 %v1701
    %v2041 = vpop.f32.mrb[0].mxu0
    %v2042 = vadd.f32 %v1906, %v2041
    %v2043 = vpop.f32.mrb[0].mxu0
    %v2044 = vpop.f32.mrb[0].mxu0
    %v2045 = vadd.f32 %v1909, %v2044
    %v2046 = vpop.f32.mrb[0].mxu0
    %2047 = vmatprep.mubr.bf16.mxu0 %v1708
    %2048 = vmatmul.mubr.bf16.gmra.mrb[0].mxu0 %v1707
    %v2049 = vpop.f32.mrb[0].mxu0
    %v2050 = vadd.f32 %v1914, %v2049
    %v2051 = vpop.f32.mrb[0].mxu0
    %v2052 = vpop.f32.mrb[0].mxu0
    %v2053 = vadd.f32 %v1917, %v2052
    %v2054 = vpop.f32.mrb[0].mxu0
    %2055 = vmatprep.mubr.bf16.mxu0 %v1714
    %2056 = vmatmul.mubr.bf16.gmra.mrb[0].mxu0 %v1713
    %v2057 = vpop.f32.mrb[0].mxu0
    %v2058 = vadd.f32 %v1922, %v2057
    %v2059 = vpop.f32.mrb[0].mxu0
    %v2060 = vpop.f32.mrb[0].mxu0
    %v2061 = vadd.f32 %v1925, %v2060
    %v2062 = vpop.f32.mrb[0].mxu0
    %2063 = vmatprep.mubr.bf16.mxu0 %v1720
    %2064 = vmatmul.mubr.bf16.gmra.mrb[0].mxu0 %v1719
    %v2065 = vpop.f32.mrb[0].mxu0
    %v2066 = vadd.f32 %v1930, %v2065
    %v2067 = vpop.f32.mrb[0].mxu0
    %v2068 = vpop.f32.mrb[0].mxu0
    %v2069 = vadd.f32 %v1933, %v2068
    %v2070 = vpop.f32.mrb[0].mxu0
    %2071 = vmatprep.mubr.bf16.mxu0 %v1726
    %2072 = vmatmul.mubr.bf16.gmra.mrb[0].mxu0 %v1725
    %v2073 = vpop.f32.mrb[0].mxu0
    %v2074 = vadd.f32 %v1938, %v2073
    %v2075 = vpop.f32.mrb[0].mxu0
    %v2076 = vpop.f32.mrb[0].mxu0
    %v2077 = vpop.f32.mrb[0].mxu0
    %2078 = vdwg.mxu0
    %2079 = vmatprep.subr.bf16.mxu0 0
    %2080 = vmatpush1.bf16.msra.mxu0 %v819
    %2081 = vmatprep.subr.bf16.mxu0 0
    %2082 = vmatpush1.bf16.msra.mxu0 %v820
    %2083 = vmatprep.subr.bf16.mxu0 0
    %2084 = vmatpush1.bf16.msra.mxu0 %v821
    %2085 = vmatprep.subr.bf16.mxu0 0
    %2086 = vmatpush1.bf16.msra.mxu0 %v822
    %2087 = vmatprep.subr.bf16.mxu0 0
    %2088 = vmatpush1.bf16.msra.mxu0 %v823
    %2089 = vmatprep.subr.bf16.mxu0 0
    %2090 = vmatpush1.bf16.msra.mxu0 %v824
    %2091 = vmatprep.subr.bf16.mxu0 0
    %2092 = vmatpush1.bf16.msra.mxu0 %v825
    %2093 = vmatprep.subr.bf16.mxu0 0
    %2094 = vmatpush1.bf16.msra.mxu0 %v826
    %2095 = vmatprep.subr.bf16.mxu0 0
    %2096 = vmatpush1.bf16.msra.mxu0 %v827
    %2097 = vmatprep.subr.bf16.mxu0 0
    %2098 = vmatpush1.bf16.msra.mxu0 %v828
    %2099 = vmatprep.subr.bf16.mxu0 0
    %2100 = vmatpush1.bf16.msra.mxu0 %v829
    %2101 = vmatprep.subr.bf16.mxu0 0
    %2102 = vmatpush1.bf16.msra.mxu0 %v830
    %2103 = vmatprep.subr.bf16.mxu0 0
    %2104 = vmatpush1.bf16.msra.mxu0 %v831
    %2105 = vmatprep.subr.bf16.mxu0 0
    %2106 = vmatpush1.bf16.msra.mxu0 %v832
    %2107 = vmatprep.subr.bf16.mxu0 0
    %2108 = vmatpush1.bf16.msra.mxu0 %v833
    %2109 = vmatprep.subr.bf16.mxu0 0
    %2110 = vmatpush1.bf16.msra.mxu0 %v834
    %2111 = vmatprep.mubr.bf16.mxu0 %v1656
    %2112 = vmatmul.mubr.bf16.gmra.mrb[0].mxu0 %v1655
    %v2113 = vpop.f32.mrb[0].mxu0
    %v2114 = vadd.f32 %v1978, %v2113
    %v2115 = vpop.f32.mrb[0].mxu0
    %v2116 = vpop.f32.mrb[0].mxu0
    %v2117 = vadd.f32 %v1981, %v2116
    %v2118 = vpop.f32.mrb[0].mxu0
    %2119 = vmatprep.mubr.bf16.mxu0 %v1662
    %2120 = vmatmul.mubr.bf16.gmra.mrb[0].mxu0 %v1661
    %v2121 = vpop.f32.mrb[0].mxu0
    %v2122 = vadd.f32 %v1986, %v2121
    %v2123 = vpop.f32.mrb[0].mxu0
    %v2124 = vpop.f32.mrb[0].mxu0
    %v2125 = vadd.f32 %v1989, %v2124
    %v2126 = vpop.f32.mrb[0].mxu0
    %2127 = vmatprep.mubr.bf16.mxu0 %v1668
    %2128 = vmatmul.mubr.bf16.gmra.mrb[0].mxu0 %v1667
    %v2129 = vpop.f32.mrb[0].mxu0
    %v2130 = vadd.f32 %v1994, %v2129
    %v2131 = vpop.f32.mrb[0].mxu0
    %v2132 = vpop.f32.mrb[0].mxu0
    %v2133 = vadd.f32 %v1997, %v2132
    %v2134 = vpop.f32.mrb[0].mxu0
    %2135 = vmatprep.mubr.bf16.mxu0 %v1674
    %2136 = vmatmul.mubr.bf16.gmra.mrb[0].mxu0 %v1673
    %v2137 = vpop.f32.mrb[0].mxu0
    %v2138 = vadd.f32 %v2002, %v2137
    %v2139 = vpop.f32.mrb[0].mxu0
    %v2140 = vpop.f32.mrb[0].mxu0
    %v2141 = vadd.f32 %v2005, %v2140
    %v2142 = vpop.f32.mrb[0].mxu0
    %2143 = vmatprep.mubr.bf16.mxu0 %v1680
    %2144 = vmatmul.mubr.bf16.gmra.mrb[0].mxu0 %v1679
    %v2145 = vpop.f32.mrb[0].mxu0
    %v2146 = vadd.f32 %v2010, %v2145
    %v2147 = vpop.f32.mrb[0].mxu0
    %v2148 = vpop.f32.mrb[0].mxu0
    %v2149 = vadd.f32 %v2013, %v2148
    %v2150 = vpop.f32.mrb[0].mxu0
    %2151 = vmatprep.mubr.bf16.mxu0 %v1686
    %2152 = vmatmul.mubr.bf16.gmra.mrb[0].mxu0 %v1685
    %v2153 = vpop.f32.mrb[0].mxu0
    %v2154 = vadd.f32 %v2018, %v2153
    %v2155 = vpop.f32.mrb[0].mxu0
    %v2156 = vpop.f32.mrb[0].mxu0
    %v2157 = vadd.f32 %v2021, %v2156
    %v2158 = vpop.f32.mrb[0].mxu0
    %2159 = vmatprep.mubr.bf16.mxu0 %v1692
    %2160 = vmatmul.mubr.bf16.gmra.mrb[0].mxu0 %v1691
    %v2161 = vpop.f32.mrb[0].mxu0
    %v2162 = vadd.f32 %v2026, %v2161
    %v2163 = vpop.f32.mrb[0].mxu0
    %v2164 = vpop.f32.mrb[0].mxu0
    %v2165 = vadd.f32 %v2029, %v2164
    %v2166 = vpop.f32.mrb[0].mxu0
    %2167 = vmatprep.mubr.bf16.mxu0 %v1698
    %2168 = vmatmul.mubr.bf16.gmra.mrb[0].mxu0 %v1697
    %v2169 = vpop.f32.mrb[0].mxu0
    %v2170 = vadd.f32 %v2034, %v2169
    %v2171 = vpop.f32.mrb[0].mxu0
    %v2172 = vpop.f32.mrb[0].mxu0
    %v2173 = vadd.f32 %v2037, %v2172
    %v2174 = vpop.f32.mrb[0].mxu0
    %2175 = vmatprep.mubr.bf16.mxu0 %v1704
    %2176 = vmatmul.mubr.bf16.gmra.mrb[0].mxu0 %v1703
    %v2177 = vpop.f32.mrb[0].mxu0
    %v2178 = vadd.f32 %v2042, %v2177
    %v2179 = vpop.f32.mrb[0].mxu0
    %v2180 = vpop.f32.mrb[0].mxu0
    %v2181 = vadd.f32 %v2045, %v2180
    %v2182 = vpop.f32.mrb[0].mxu0
    %2183 = vmatprep.mubr.bf16.mxu0 %v1710
    %2184 = vmatmul.mubr.bf16.gmra.mrb[0].mxu0 %v1709
    %v2185 = vpop.f32.mrb[0].mxu0
    %v2186 = vadd.f32 %v2050, %v2185
    %v2187 = vpop.f32.mrb[0].mxu0
    %v2188 = vpop.f32.mrb[0].mxu0
    %v2189 = vadd.f32 %v2053, %v2188
    %v2190 = vpop.f32.mrb[0].mxu0
    %2191 = vmatprep.mubr.bf16.mxu0 %v1716
    %2192 = vmatmul.mubr.bf16.gmra.mrb[0].mxu0 %v1715
    %v2193 = vpop.f32.mrb[0].mxu0
    %v2194 = vadd.f32 %v2058, %v2193
    %v2195 = vpop.f32.mrb[0].mxu0
    %v2196 = vpop.f32.mrb[0].mxu0
    %v2197 = vadd.f32 %v2061, %v2196
    %v2198 = vpop.f32.mrb[0].mxu0
    %2199 = vmatprep.mubr.bf16.mxu0 %v1722
    %2200 = vmatmul.mubr.bf16.gmra.mrb[0].mxu0 %v1721
    %v2201 = vpop.f32.mrb[0].mxu0
    %v2202 = vadd.f32 %v2066, %v2201
    %v2203 = vpop.f32.mrb[0].mxu0
    %v2204 = vpop.f32.mrb[0].mxu0
    %v2205 = vadd.f32 %v2069, %v2204
    %v2206 = vpop.f32.mrb[0].mxu0
    %2207 = vmatprep.mubr.bf16.mxu0 %v1728
    %2208 = vmatmul.mubr.bf16.gmra.mrb[0].mxu0 %v1727
    %v2209 = vpop.f32.mrb[0].mxu0
    %v2210 = vadd.f32 %v2074, %v2209
    %v2211 = vpop.f32.mrb[0].mxu0
    %v2212 = vpop.f32.mrb[0].mxu0
    %v2213 = vpop.f32.mrb[0].mxu0
    %2214 = vdwg.mxu0
    %v2215 = vmax.f32 %v2114, 0.0
    %v2216 = vmax.f32 %v2117, 0.0
    %v2217 = vmax.f32 %v2122, 0.0
    %v2218 = vmax.f32 %v2125, 0.0
    %v2219 = vmax.f32 %v2130, 0.0
    %v2220 = vmax.f32 %v2133, 0.0
    %v2221 = vmax.f32 %v2138, 0.0
    %v2222 = vmax.f32 %v2141, 0.0
    %v2223 = vmax.f32 %v2146, 0.0
    %v2224 = vmax.f32 %v2149, 0.0
    %v2225 = vmax.f32 %v2154, 0.0
    %v2226 = vmax.f32 %v2157, 0.0
    %v2227 = vmax.f32 %v2162, 0.0
    %v2228 = vmax.f32 %v2165, 0.0
    %v2229 = vmax.f32 %v2170, 0.0
    %v2230 = vmax.f32 %v2173, 0.0
    %v2231 = vmax.f32 %v2178, 0.0
    %v2232 = vmax.f32 %v2181, 0.0
    %v2233 = vmax.f32 %v2186, 0.0
    %v2234 = vmax.f32 %v2189, 0.0
    %v2235 = vmax.f32 %v2194, 0.0
    %v2236 = vmax.f32 %v2197, 0.0
    %v2237 = vmax.f32 %v2202, 0.0
    %v2238 = vmax.f32 %v2205, 0.0
    %v2239 = vmax.f32 %v2210, 0.0
    %v2240 = vadd.f32 %v2215, %v2216
    %v2241 = vadd.f32 %v2240, %v2217
    %v2242 = vadd.f32 %v2241, %v2218
    %v2243 = vadd.f32 %v2242, %v2219
    %v2244 = vadd.f32 %v2243, %v2220
    %v2245 = vadd.f32 %v2244, %v2221
    %v2246 = vadd.f32 %v2245, %v2222
    %v2247 = vadd.f32 %v2246, %v2223
    %v2248 = vadd.f32 %v2247, %v2224
    %v2249 = vadd.f32 %v2248, %v2225
    %v2250 = vadd.f32 %v2249, %v2226
    %v2251 = vadd.f32 %v2250, %v2227
    %v2252 = vadd.f32 %v2251, %v2228
    %v2253 = vadd.f32 %v2252, %v2229
    %v2254 = vadd.f32 %v2253, %v2230
    %v2255 = vadd.f32 %v2254, %v2231
    %v2256 = vadd.f32 %v2255, %v2232
    %v2257 = vadd.f32 %v2256, %v2233
    %v2258 = vadd.f32 %v2257, %v2234
    %v2259 = vadd.f32 %v2258, %v2235
    %v2260 = vadd.f32 %v2259, %v2236
    %v2261 = vadd.f32 %v2260, %v2237
    %v2262 = vadd.f32 %v2261, %v2238
    %v2263 = vsel %vm1339, %v2239, 0.0
    %v2264 = vadd.f32 %v2262, %v2263
    %v2265 = vrot.slane %v2264, 4
    %v2266 = vadd.f32 %v2264, %v2265
    %v2267 = vrot.slane %v2266, 2
    %v2268 = vadd.f32 %v2266, %v2267
    %v2269 = vrot.slane %v2268, 1
    %v2270 = vadd.f32 %v2268, %v2269
    %v2271 = vmul.f32 %v2270, %v1348
    %s2272 = scalar_lea.vmem %s0, 1200
    %v2273 = vld [vmem:[%s2272] sm:$0xff]
    %v2274 = vld [vmem:[%s2272 + $0x8] sm:$0xff]
    %v2275 = vld [vmem:[%s2272 + $0x10] sm:$0xff]
    %v2276 = vld [vmem:[%s2272 + $0x18] sm:$0xff]
    %v2277 = vld [vmem:[%s2272 + $0x20] sm:$0xff]
    %v2278 = vld [vmem:[%s2272 + $0x28] sm:$0xff]
    %v2279 = vld [vmem:[%s2272 + $0x30] sm:$0xff]
    %v2280 = vld [vmem:[%s2272 + $0x38] sm:$0xff]
    %v2281 = vld [vmem:[%s2272 + $0x40] sm:$0xff]
    %v2282 = vld [vmem:[%s2272 + $0x48] sm:$0xff]
    %v2283 = vld [vmem:[%s2272 + $0x50] sm:$0xff]
    %v2284 = vld [vmem:[%s2272 + $0x58] sm:$0xff]
    %v2285 = vld [vmem:[%s2272 + $0x60] sm:$0xff]
    %v2286 = vld [vmem:[%s2272 + $0x68] sm:$0xff]
    %v2287 = vld [vmem:[%s2272 + $0x70] sm:$0xff]
    %v2288 = vld [vmem:[%s2272 + $0x78] sm:$0xff]
    %v2289 = vld [vmem:[%s2272 + $0x80] sm:$0xff]
    %v2290 = vld [vmem:[%s2272 + $0x88] sm:$0xff]
    %v2291 = vld [vmem:[%s2272 + $0x90] sm:$0xff]
    %v2292 = vld [vmem:[%s2272 + $0x98] sm:$0xff]
    %v2293 = vld [vmem:[%s2272 + $0xa0] sm:$0xff]
    %v2294 = vld [vmem:[%s2272 + $0xa8] sm:$0xff]
    %v2295 = vld [vmem:[%s2272 + $0xb0] sm:$0xff]
    %v2296 = vld [vmem:[%s2272 + $0xb8] sm:$0xff]
    %v2297 = vld [vmem:[%s2272 + $0xc0] sm:$0xff]
    %v2298 = vld [vmem:[%s2272 + $0xc8] sm:$0xff]
    %v2299 = vld [vmem:[%s2272 + $0xd0] sm:$0xff]
    %v2300 = vld [vmem:[%s2272 + $0xd8] sm:$0xff]
    %v2301 = vld [vmem:[%s2272 + $0xe0] sm:$0xff]
    %v2302 = vld [vmem:[%s2272 + $0xe8] sm:$0xff]
    %v2303 = vld [vmem:[%s2272 + $0xf0] sm:$0xff]
    %v2304 = vld [vmem:[%s2272 + $0xf8] sm:$0xff]
    %v2305 = vld [vmem:[%s2272 + $0x100] sm:$0xff]
    %v2306 = vld [vmem:[%s2272 + $0x108] sm:$0xff]
    %v2307 = vld [vmem:[%s2272 + $0x110] sm:$0xff]
    %v2308 = vld [vmem:[%s2272 + $0x118] sm:$0xff]
    %v2309 = vld [vmem:[%s2272 + $0x120] sm:$0xff]
    %v2310 = vld [vmem:[%s2272 + $0x128] sm:$0xff]
    %v2311 = vld [vmem:[%s2272 + $0x130] sm:$0xff]
    %v2312 = vld [vmem:[%s2272 + $0x138] sm:$0xff]
    %v2313 = vld [vmem:[%s2272 + $0x140] sm:$0xff]
    %v2314 = vld [vmem:[%s2272 + $0x148] sm:$0xff]
    %v2315 = vld [vmem:[%s2272 + $0x150] sm:$0xff]
    %v2316 = vld [vmem:[%s2272 + $0x158] sm:$0xff]
    %v2317 = vld [vmem:[%s2272 + $0x160] sm:$0xff]
    %v2318 = vld [vmem:[%s2272 + $0x168] sm:$0xff]
    %v2319 = vld [vmem:[%s2272 + $0x170] sm:$0xff]
    %v2320 = vld [vmem:[%s2272 + $0x178] sm:$0xff]
    %v2321 = vld [vmem:[%s2272 + $0x180] sm:$0xff]
    %v2322 = vld [vmem:[%s2272 + $0x188] sm:$0xff]
    %v2323 = vld [vmem:[%s2272 + $0x190] sm:$0xff]
    %v2324 = vld [vmem:[%s2272 + $0x198] sm:$0xff]
    %v2325 = vld [vmem:[%s2272 + $0x1a0] sm:$0xff]
    %v2326 = vld [vmem:[%s2272 + $0x1a8] sm:$0xff]
    %v2327 = vld [vmem:[%s2272 + $0x1b0] sm:$0xff]
    %v2328 = vld [vmem:[%s2272 + $0x1b8] sm:$0xff]
    %v2329 = vld [vmem:[%s2272 + $0x1c0] sm:$0xff]
    %v2330 = vld [vmem:[%s2272 + $0x1c8] sm:$0xff]
    %v2331 = vld [vmem:[%s2272 + $0x1d0] sm:$0xff]
    %v2332 = vld [vmem:[%s2272 + $0x1d8] sm:$0xff]
    %v2333 = vld [vmem:[%s2272 + $0x1e0] sm:$0xff]
    %v2334 = vld [vmem:[%s2272 + $0x1e8] sm:$0xff]
    %v2335 = vld [vmem:[%s2272 + $0x1f0] sm:$0xff]
    %v2336 = vld [vmem:[%s2272 + $0x1f8] sm:$0xff]
    %v2337 = vld [vmem:[%s2272 + $0x200] sm:$0xff]
    %v2338 = vld [vmem:[%s2272 + $0x208] sm:$0xff]
    %v2339 = vld [vmem:[%s2272 + $0x210] sm:$0xff]
    %v2340 = vld [vmem:[%s2272 + $0x218] sm:$0xff]
    %v2341 = vld [vmem:[%s2272 + $0x220] sm:$0xff]
    %v2342 = vld [vmem:[%s2272 + $0x228] sm:$0xff]
    %v2343 = vld [vmem:[%s2272 + $0x230] sm:$0xff]
    %v2344 = vld [vmem:[%s2272 + $0x238] sm:$0xff]
    %v2345 = vld [vmem:[%s2272 + $0x240] sm:$0x33]
    %v2346 = vld [vmem:[%s2272 + $0x248] sm:$0x33]
    %v2347 = vld [vmem:[%s2272 + $0x250] sm:$0x33]
    %v2423 = vunpack.c.l.b16 %v2273
    %v2424 = vunpack.c.h.b16 %v2273
    %v2425 = vunpack.c.l.b16 %v2274
    %v2426 = vunpack.c.h.b16 %v2274
    %v2427 = vunpack.c.l.b16 %v2275
    %v2428 = vunpack.c.h.b16 %v2275
    %v2429 = vunpack.c.l.b16 %v2276
    %v2430 = vunpack.c.h.b16 %v2276
    %v2431 = vunpack.c.l.b16 %v2277
    %v2432 = vunpack.c.h.b16 %v2277
    %v2433 = vunpack.c.l.b16 %v2278
    %v2434 = vunpack.c.h.b16 %v2278
    %v2435 = vunpack.c.l.b16 %v2279
    %v2436 = vunpack.c.h.b16 %v2279
    %v2437 = vunpack.c.l.b16 %v2280
    %v2438 = vunpack.c.h.b16 %v2280
    %v2439 = vunpack.c.l.b16 %v2281
    %v2440 = vunpack.c.h.b16 %v2281
    %v2441 = vunpack.c.l.b16 %v2282
    %v2442 = vunpack.c.h.b16 %v2282
    %v2443 = vunpack.c.l.b16 %v2283
    %v2444 = vunpack.c.h.b16 %v2283
    %v2445 = vunpack.c.l.b16 %v2284
    %v2446 = vunpack.c.h.b16 %v2284
    %v2447 = vunpack.c.l.b16 %v2285
    %v2448 = vunpack.c.h.b16 %v2285
    %v2449 = vunpack.c.l.b16 %v2286
    %v2450 = vunpack.c.h.b16 %v2286
    %v2451 = vunpack.c.l.b16 %v2287
    %v2452 = vunpack.c.h.b16 %v2287
    %v2453 = vunpack.c.l.b16 %v2288
    %v2454 = vunpack.c.h.b16 %v2288
    %v2455 = vunpack.c.l.b16 %v2289
    %v2456 = vunpack.c.h.b16 %v2289
    %v2457 = vunpack.c.l.b16 %v2290
    %v2458 = vunpack.c.h.b16 %v2290
    %v2459 = vunpack.c.l.b16 %v2291
    %v2460 = vunpack.c.h.b16 %v2291
    %v2461 = vunpack.c.l.b16 %v2292
    %v2462 = vunpack.c.h.b16 %v2292
    %v2463 = vunpack.c.l.b16 %v2293
    %v2464 = vunpack.c.h.b16 %v2293
    %v2465 = vunpack.c.l.b16 %v2294
    %v2466 = vunpack.c.h.b16 %v2294
    %v2467 = vunpack.c.l.b16 %v2295
    %v2468 = vunpack.c.h.b16 %v2295
    %v2469 = vunpack.c.l.b16 %v2296
    %v2470 = vunpack.c.h.b16 %v2296
    %v2471 = vunpack.c.l.b16 %v2297
    %v2472 = vunpack.c.h.b16 %v2297
    %v2473 = vunpack.c.l.b16 %v2298
    %v2474 = vunpack.c.h.b16 %v2298
    %v2475 = vunpack.c.l.b16 %v2299
    %v2476 = vunpack.c.h.b16 %v2299
    %v2477 = vunpack.c.l.b16 %v2300
    %v2478 = vunpack.c.h.b16 %v2300
    %v2479 = vunpack.c.l.b16 %v2301
    %v2480 = vunpack.c.h.b16 %v2301
    %v2481 = vunpack.c.l.b16 %v2302
    %v2482 = vunpack.c.h.b16 %v2302
    %v2483 = vunpack.c.l.b16 %v2303
    %v2484 = vunpack.c.h.b16 %v2303
    %v2485 = vunpack.c.l.b16 %v2304
    %v2486 = vunpack.c.h.b16 %v2304
    %v2487 = vunpack.c.l.b16 %v2305
    %v2488 = vunpack.c.h.b16 %v2305
    %v2489 = vunpack.c.l.b16 %v2306
    %v2490 = vunpack.c.h.b16 %v2306
    %v2491 = vunpack.c.l.b16 %v2307
    %v2492 = vunpack.c.h.b16 %v2307
    %v2493 = vunpack.c.l.b16 %v2308
    %v2494 = vunpack.c.h.b16 %v2308
    %v2495 = vunpack.c.l.b16 %v2309
    %v2496 = vunpack.c.h.b16 %v2309
    %v2497 = vunpack.c.l.b16 %v2310
    %v2498 = vunpack.c.h.b16 %v2310
    %v2499 = vunpack.c.l.b16 %v2311
    %v2500 = vunpack.c.h.b16 %v2311
    %v2501 = vunpack.c.l.b16 %v2312
    %v2502 = vunpack.c.h.b16 %v2312
    %v2503 = vunpack.c.l.b16 %v2313
    %v2504 = vunpack.c.h.b16 %v2313
    %v2505 = vunpack.c.l.b16 %v2314
    %v2506 = vunpack.c.h.b16 %v2314
    %v2507 = vunpack.c.l.b16 %v2315
    %v2508 = vunpack.c.h.b16 %v2315
    %v2509 = vunpack.c.l.b16 %v2316
    %v2510 = vunpack.c.h.b16 %v2316
    %v2511 = vunpack.c.l.b16 %v2317
    %v2512 = vunpack.c.h.b16 %v2317
    %v2513 = vunpack.c.l.b16 %v2318
    %v2514 = vunpack.c.h.b16 %v2318
    %v2515 = vunpack.c.l.b16 %v2319
    %v2516 = vunpack.c.h.b16 %v2319
    %v2517 = vunpack.c.l.b16 %v2320
    %v2518 = vunpack.c.h.b16 %v2320
    %v2519 = vunpack.c.l.b16 %v2321
    %v2520 = vunpack.c.h.b16 %v2321
    %v2521 = vunpack.c.l.b16 %v2322
    %v2522 = vunpack.c.h.b16 %v2322
    %v2523 = vunpack.c.l.b16 %v2323
    %v2524 = vunpack.c.h.b16 %v2323
    %v2525 = vunpack.c.l.b16 %v2324
    %v2526 = vunpack.c.h.b16 %v2324
    %v2527 = vunpack.c.l.b16 %v2325
    %v2528 = vunpack.c.h.b16 %v2325
    %v2529 = vunpack.c.l.b16 %v2326
    %v2530 = vunpack.c.h.b16 %v2326
    %v2531 = vunpack.c.l.b16 %v2327
    %v2532 = vunpack.c.h.b16 %v2327
    %v2533 = vunpack.c.l.b16 %v2328
    %v2534 = vunpack.c.h.b16 %v2328
    %v2535 = vunpack.c.l.b16 %v2329
    %v2536 = vunpack.c.h.b16 %v2329
    %v2537 = vunpack.c.l.b16 %v2330
    %v2538 = vunpack.c.h.b16 %v2330
    %v2539 = vunpack.c.l.b16 %v2331
    %v2540 = vunpack.c.h.b16 %v2331
    %v2541 = vunpack.c.l.b16 %v2332
    %v2542 = vunpack.c.h.b16 %v2332
    %v2543 = vunpack.c.l.b16 %v2333
    %v2544 = vunpack.c.h.b16 %v2333
    %v2545 = vunpack.c.l.b16 %v2334
    %v2546 = vunpack.c.h.b16 %v2334
    %v2547 = vunpack.c.l.b16 %v2335
    %v2548 = vunpack.c.h.b16 %v2335
    %v2549 = vunpack.c.l.b16 %v2336
    %v2550 = vunpack.c.h.b16 %v2336
    %v2551 = vunpack.c.l.b16 %v2337
    %v2552 = vunpack.c.h.b16 %v2337
    %v2553 = vunpack.c.l.b16 %v2338
    %v2554 = vunpack.c.h.b16 %v2338
    %v2555 = vunpack.c.l.b16 %v2339
    %v2556 = vunpack.c.h.b16 %v2339
    %v2557 = vunpack.c.l.b16 %v2340
    %v2558 = vunpack.c.h.b16 %v2340
    %v2559 = vunpack.c.l.b16 %v2341
    %v2560 = vunpack.c.h.b16 %v2341
    %v2561 = vunpack.c.l.b16 %v2342
    %v2562 = vunpack.c.h.b16 %v2342
    %v2563 = vunpack.c.l.b16 %v2343
    %v2564 = vunpack.c.h.b16 %v2343
    %v2565 = vunpack.c.l.b16 %v2344
    %v2566 = vunpack.c.h.b16 %v2344
    %v2567 = vunpack.c.l.b16 %v2345
    %v2568 = vunpack.c.h.b16 %v2345
    %v2569 = vunpack.c.l.b16 %v2346
    %v2570 = vunpack.c.h.b16 %v2346
    %v2571 = vunpack.c.l.b16 %v2347
    %v2572 = vunpack.c.h.b16 %v2347
    %v2573 = vpack.c.b16 %v2429, %v2423
    %v2574 = vpack.c.b16 %v2430, %v2424
    %v2575 = vpack.c.b16 %v2431, %v2425
    %v2576 = vpack.c.b16 %v2432, %v2426
    %v2577 = vpack.c.b16 %v2433, %v2427
    %v2578 = vpack.c.b16 %v2434, %v2428
    %v2579 = vpack.c.b16 %v2441, %v2435
    %v2580 = vpack.c.b16 %v2442, %v2436
    %v2581 = vpack.c.b16 %v2443, %v2437
    %v2582 = vpack.c.b16 %v2444, %v2438
    %v2583 = vpack.c.b16 %v2445, %v2439
    %v2584 = vpack.c.b16 %v2446, %v2440
    %v2585 = vpack.c.b16 %v2453, %v2447
    %v2586 = vpack.c.b16 %v2454, %v2448
    %v2587 = vpack.c.b16 %v2455, %v2449
    %v2588 = vpack.c.b16 %v2456, %v2450
    %v2589 = vpack.c.b16 %v2457, %v2451
    %v2590 = vpack.c.b16 %v2458, %v2452
    %v2591 = vpack.c.b16 %v2465, %v2459
    %v2592 = vpack.c.b16 %v2466, %v2460
    %v2593 = vpack.c.b16 %v2467, %v2461
    %v2594 = vpack.c.b16 %v2468, %v2462
    %v2595 = vpack.c.b16 %v2469, %v2463
    %v2596 = vpack.c.b16 %v2470, %v2464
    %v2597 = vpack.c.b16 %v2477, %v2471
    %v2598 = vpack.c.b16 %v2478, %v2472
    %v2599 = vpack.c.b16 %v2479, %v2473
    %v2600 = vpack.c.b16 %v2480, %v2474
    %v2601 = vpack.c.b16 %v2481, %v2475
    %v2602 = vpack.c.b16 %v2482, %v2476
    %v2603 = vpack.c.b16 %v2489, %v2483
    %v2604 = vpack.c.b16 %v2490, %v2484
    %v2605 = vpack.c.b16 %v2491, %v2485
    %v2606 = vpack.c.b16 %v2492, %v2486
    %v2607 = vpack.c.b16 %v2493, %v2487
    %v2608 = vpack.c.b16 %v2494, %v2488
    %v2609 = vpack.c.b16 %v2501, %v2495
    %v2610 = vpack.c.b16 %v2502, %v2496
    %v2611 = vpack.c.b16 %v2503, %v2497
    %v2612 = vpack.c.b16 %v2504, %v2498
    %v2613 = vpack.c.b16 %v2505, %v2499
    %v2614 = vpack.c.b16 %v2506, %v2500
    %v2615 = vpack.c.b16 %v2513, %v2507
    %v2616 = vpack.c.b16 %v2514, %v2508
    %v2617 = vpack.c.b16 %v2515, %v2509
    %v2618 = vpack.c.b16 %v2516, %v2510
    %v2619 = vpack.c.b16 %v2517, %v2511
    %v2620 = vpack.c.b16 %v2518, %v2512
    %v2621 = vpack.c.b16 %v2525, %v2519
    %v2622 = vpack.c.b16 %v2526, %v2520
    %v2623 = vpack.c.b16 %v2527, %v2521
    %v2624 = vpack.c.b16 %v2528, %v2522
    %v2625 = vpack.c.b16 %v2529, %v2523
    %v2626 = vpack.c.b16 %v2530, %v2524
    %v2627 = vpack.c.b16 %v2537, %v2531
    %v2628 = vpack.c.b16 %v2538, %v2532
    %v2629 = vpack.c.b16 %v2539, %v2533
    %v2630 = vpack.c.b16 %v2540, %v2534
    %v2631 = vpack.c.b16 %v2541, %v2535
    %v2632 = vpack.c.b16 %v2542, %v2536
    %v2633 = vpack.c.b16 %v2549, %v2543
    %v2634 = vpack.c.b16 %v2550, %v2544
    %v2635 = vpack.c.b16 %v2551, %v2545
    %v2636 = vpack.c.b16 %v2552, %v2546
    %v2637 = vpack.c.b16 %v2553, %v2547
    %v2638 = vpack.c.b16 %v2554, %v2548
    %v2639 = vpack.c.b16 %v2561, %v2555
    %v2640 = vpack.c.b16 %v2562, %v2556
    %v2641 = vpack.c.b16 %v2563, %v2557
    %v2642 = vpack.c.b16 %v2564, %v2558
    %v2643 = vpack.c.b16 %v2565, %v2559
    %v2644 = vpack.c.b16 %v2566, %v2560
    %v2645 = vpack.c.b16 %v2567, %v2567
    %v2646 = vpack.c.b16 %v2568, %v2568
    %v2647 = vpack.c.b16 %v2569, %v2569
    %v2648 = vpack.c.b16 %v2570, %v2570
    %v2649 = vpack.c.b16 %v2571, %v2571
    %v2650 = vpack.c.b16 %v2572, %v2572
    %2729 = vmatprep.subr.bf16.mxu0 0
    %2730 = vmatpush1.bf16.msra.mxu0 %v787
    %2731 = vmatprep.subr.bf16.mxu0 0
    %2732 = vmatpush1.bf16.msra.mxu0 %v788
    %2733 = vmatprep.subr.bf16.mxu0 0
    %2734 = vmatpush1.bf16.msra.mxu0 %v789
    %2735 = vmatprep.subr.bf16.mxu0 0
    %2736 = vmatpush1.bf16.msra.mxu0 %v790
    %2737 = vmatprep.subr.bf16.mxu0 0
    %2738 = vmatpush1.bf16.msra.mxu0 %v791
    %2739 = vmatprep.subr.bf16.mxu0 0
    %2740 = vmatpush1.bf16.msra.mxu0 %v792
    %2741 = vmatprep.subr.bf16.mxu0 0
    %2742 = vmatpush1.bf16.msra.mxu0 %v793
    %2743 = vmatprep.subr.bf16.mxu0 0
    %2744 = vmatpush1.bf16.msra.mxu0 %v794
    %2745 = vmatprep.subr.bf16.mxu0 0
    %2746 = vmatpush1.bf16.msra.mxu0 %v795
    %2747 = vmatprep.subr.bf16.mxu0 0
    %2748 = vmatpush1.bf16.msra.mxu0 %v796
    %2749 = vmatprep.subr.bf16.mxu0 0
    %2750 = vmatpush1.bf16.msra.mxu0 %v797
    %2751 = vmatprep.subr.bf16.mxu0 0
    %2752 = vmatpush1.bf16.msra.mxu0 %v798
    %2753 = vmatprep.subr.bf16.mxu0 0
    %2754 = vmatpush1.bf16.msra.mxu0 %v799
    %2755 = vmatprep.subr.bf16.mxu0 0
    %2756 = vmatpush1.bf16.msra.mxu0 %v800
    %2757 = vmatprep.subr.bf16.mxu0 0
    %2758 = vmatpush1.bf16.msra.mxu0 %v801
    %2759 = vmatprep.subr.bf16.mxu0 0
    %2760 = vmatpush1.bf16.msra.mxu0 %v802
    %2761 = vmatprep.mubr.bf16.mxu0 %v2574
    %2762 = vmatmul.mubr.bf16.gmra.mrb[0].mxu0 %v2573
    %v2763 = vpop.f32.mrb[0].mxu0
    %v2764 = vadd.f32 %v212, %v2763
    %v2765 = vpop.f32.mrb[0].mxu0
    %v2766 = vpop.f32.mrb[0].mxu0
    %v2767 = vadd.f32 %v212, %v2766
    %v2768 = vpop.f32.mrb[0].mxu0
    %2769 = vmatprep.mubr.bf16.mxu0 %v2580
    %2770 = vmatmul.mubr.bf16.gmra.mrb[0].mxu0 %v2579
    %v2771 = vpop.f32.mrb[0].mxu0
    %v2772 = vadd.f32 %v212, %v2771
    %v2773 = vpop.f32.mrb[0].mxu0
    %v2774 = vpop.f32.mrb[0].mxu0
    %v2775 = vadd.f32 %v212, %v2774
    %v2776 = vpop.f32.mrb[0].mxu0
    %2777 = vmatprep.mubr.bf16.mxu0 %v2586
    %2778 = vmatmul.mubr.bf16.gmra.mrb[0].mxu0 %v2585
    %v2779 = vpop.f32.mrb[0].mxu0
    %v2780 = vadd.f32 %v212, %v2779
    %v2781 = vpop.f32.mrb[0].mxu0
    %v2782 = vpop.f32.mrb[0].mxu0
    %v2783 = vadd.f32 %v212, %v2782
    %v2784 = vpop.f32.mrb[0].mxu0
    %2785 = vmatprep.mubr.bf16.mxu0 %v2592
    %2786 = vmatmul.mubr.bf16.gmra.mrb[0].mxu0 %v2591
    %v2787 = vpop.f32.mrb[0].mxu0
    %v2788 = vadd.f32 %v212, %v2787
    %v2789 = vpop.f32.mrb[0].mxu0
    %v2790 = vpop.f32.mrb[0].mxu0
    %v2791 = vadd.f32 %v212, %v2790
    %v2792 = vpop.f32.mrb[0].mxu0
    %2793 = vmatprep.mubr.bf16.mxu0 %v2598
    %2794 = vmatmul.mubr.bf16.gmra.mrb[0].mxu0 %v2597
    %v2795 = vpop.f32.mrb[0].mxu0
    %v2796 = vadd.f32 %v212, %v2795
    %v2797 = vpop.f32.mrb[0].mxu0
    %v2798 = vpop.f32.mrb[0].mxu0
    %v2799 = vadd.f32 %v212, %v2798
    %v2800 = vpop.f32.mrb[0].mxu0
    %2801 = vmatprep.mubr.bf16.mxu0 %v2604
    %2802 = vmatmul.mubr.bf16.gmra.mrb[0].mxu0 %v2603
    %v2803 = vpop.f32.mrb[0].mxu0
    %v2804 = vadd.f32 %v212, %v2803
    %v2805 = vpop.f32.mrb[0].mxu0
    %v2806 = vpop.f32.mrb[0].mxu0
    %v2807 = vadd.f32 %v212, %v2806
    %v2808 = vpop.f32.mrb[0].mxu0
    %2809 = vmatprep.mubr.bf16.mxu0 %v2610
    %2810 = vmatmul.mubr.bf16.gmra.mrb[0].mxu0 %v2609
    %v2811 = vpop.f32.mrb[0].mxu0
    %v2812 = vadd.f32 %v212, %v2811
    %v2813 = vpop.f32.mrb[0].mxu0
    %v2814 = vpop.f32.mrb[0].mxu0
    %v2815 = vadd.f32 %v212, %v2814
    %v2816 = vpop.f32.mrb[0].mxu0
    %2817 = vmatprep.mubr.bf16.mxu0 %v2616
    %2818 = vmatmul.mubr.bf16.gmra.mrb[0].mxu0 %v2615
    %v2819 = vpop.f32.mrb[0].mxu0
    %v2820 = vadd.f32 %v212, %v2819
    %v2821 = vpop.f32.mrb[0].mxu0
    %v2822 = vpop.f32.mrb[0].mxu0
    %v2823 = vadd.f32 %v212, %v2822
    %v2824 = vpop.f32.mrb[0].mxu0
    %2825 = vmatprep.mubr.bf16.mxu0 %v2622
    %2826 = vmatmul.mubr.bf16.gmra.mrb[0].mxu0 %v2621
    %v2827 = vpop.f32.mrb[0].mxu0
    %v2828 = vadd.f32 %v212, %v2827
    %v2829 = vpop.f32.mrb[0].mxu0
    %v2830 = vpop.f32.mrb[0].mxu0
    %v2831 = vadd.f32 %v212, %v2830
    %v2832 = vpop.f32.mrb[0].mxu0
    %2833 = vmatprep.mubr.bf16.mxu0 %v2628
    %2834 = vmatmul.mubr.bf16.gmra.mrb[0].mxu0 %v2627
    %v2835 = vpop.f32.mrb[0].mxu0
    %v2836 = vadd.f32 %v212, %v2835
    %v2837 = vpop.f32.mrb[0].mxu0
    %v2838 = vpop.f32.mrb[0].mxu0
    %v2839 = vadd.f32 %v212, %v2838
    %v2840 = vpop.f32.mrb[0].mxu0
    %2841 = vmatprep.mubr.bf16.mxu0 %v2634
    %2842 = vmatmul.mubr.bf16.gmra.mrb[0].mxu0 %v2633
    %v2843 = vpop.f32.mrb[0].mxu0
    %v2844 = vadd.f32 %v212, %v2843
    %v2845 = vpop.f32.mrb[0].mxu0
    %v2846 = vpop.f32.mrb[0].mxu0
    %v2847 = vadd.f32 %v212, %v2846
    %v2848 = vpop.f32.mrb[0].mxu0
    %2849 = vmatprep.mubr.bf16.mxu0 %v2640
    %2850 = vmatmul.mubr.bf16.gmra.mrb[0].mxu0 %v2639
    %v2851 = vpop.f32.mrb[0].mxu0
    %v2852 = vadd.f32 %v212, %v2851
    %v2853 = vpop.f32.mrb[0].mxu0
    %v2854 = vpop.f32.mrb[0].mxu0
    %v2855 = vadd.f32 %v212, %v2854
    %v2856 = vpop.f32.mrb[0].mxu0
    %2857 = vmatprep.mubr.bf16.mxu0 %v2646
    %2858 = vmatmul.mubr.bf16.gmra.mrb[0].mxu0 %v2645
    %v2859 = vpop.f32.mrb[0].mxu0
    %v2860 = vadd.f32 %v212, %v2859
    %v2861 = vpop.f32.mrb[0].mxu0
    %v2862 = vpop.f32.mrb[0].mxu0
    %v2863 = vpop.f32.mrb[0].mxu0
    %2864 = vdwg.mxu0
    %2865 = vmatprep.subr.bf16.mxu0 0
    %2866 = vmatpush1.bf16.msra.mxu0 %v803
    %2867 = vmatprep.subr.bf16.mxu0 0
    %2868 = vmatpush1.bf16.msra.mxu0 %v804
    %2869 = vmatprep.subr.bf16.mxu0 0
    %2870 = vmatpush1.bf16.msra.mxu0 %v805
    %2871 = vmatprep.subr.bf16.mxu0 0
    %2872 = vmatpush1.bf16.msra.mxu0 %v806
    %2873 = vmatprep.subr.bf16.mxu0 0
    %2874 = vmatpush1.bf16.msra.mxu0 %v807
    %2875 = vmatprep.subr.bf16.mxu0 0
    %2876 = vmatpush1.bf16.msra.mxu0 %v808
    %2877 = vmatprep.subr.bf16.mxu0 0
    %2878 = vmatpush1.bf16.msra.mxu0 %v809
    %2879 = vmatprep.subr.bf16.mxu0 0
    %2880 = vmatpush1.bf16.msra.mxu0 %v810
    %2881 = vmatprep.subr.bf16.mxu0 0
    %2882 = vmatpush1.bf16.msra.mxu0 %v811
    %2883 = vmatprep.subr.bf16.mxu0 0
    %2884 = vmatpush1.bf16.msra.mxu0 %v812
    %2885 = vmatprep.subr.bf16.mxu0 0
    %2886 = vmatpush1.bf16.msra.mxu0 %v813
    %2887 = vmatprep.subr.bf16.mxu0 0
    %2888 = vmatpush1.bf16.msra.mxu0 %v814
    %2889 = vmatprep.subr.bf16.mxu0 0
    %2890 = vmatpush1.bf16.msra.mxu0 %v815
    %2891 = vmatprep.subr.bf16.mxu0 0
    %2892 = vmatpush1.bf16.msra.mxu0 %v816
    %2893 = vmatprep.subr.bf16.mxu0 0
    %2894 = vmatpush1.bf16.msra.mxu0 %v817
    %2895 = vmatprep.subr.bf16.mxu0 0
    %2896 = vmatpush1.bf16.msra.mxu0 %v818
    %2897 = vmatprep.mubr.bf16.mxu0 %v2576
    %2898 = vmatmul.mubr.bf16.gmra.mrb[0].mxu0 %v2575
    %v2899 = vpop.f32.mrb[0].mxu0
    %v2900 = vadd.f32 %v2764, %v2899
    %v2901 = vpop.f32.mrb[0].mxu0
    %v2902 = vpop.f32.mrb[0].mxu0
    %v2903 = vadd.f32 %v2767, %v2902
    %v2904 = vpop.f32.mrb[0].mxu0
    %2905 = vmatprep.mubr.bf16.mxu0 %v2582
    %2906 = vmatmul.mubr.bf16.gmra.mrb[0].mxu0 %v2581
    %v2907 = vpop.f32.mrb[0].mxu0
    %v2908 = vadd.f32 %v2772, %v2907
    %v2909 = vpop.f32.mrb[0].mxu0
    %v2910 = vpop.f32.mrb[0].mxu0
    %v2911 = vadd.f32 %v2775, %v2910
    %v2912 = vpop.f32.mrb[0].mxu0
    %2913 = vmatprep.mubr.bf16.mxu0 %v2588
    %2914 = vmatmul.mubr.bf16.gmra.mrb[0].mxu0 %v2587
    %v2915 = vpop.f32.mrb[0].mxu0
    %v2916 = vadd.f32 %v2780, %v2915
    %v2917 = vpop.f32.mrb[0].mxu0
    %v2918 = vpop.f32.mrb[0].mxu0
    %v2919 = vadd.f32 %v2783, %v2918
    %v2920 = vpop.f32.mrb[0].mxu0
    %2921 = vmatprep.mubr.bf16.mxu0 %v2594
    %2922 = vmatmul.mubr.bf16.gmra.mrb[0].mxu0 %v2593
    %v2923 = vpop.f32.mrb[0].mxu0
    %v2924 = vadd.f32 %v2788, %v2923
    %v2925 = vpop.f32.mrb[0].mxu0
    %v2926 = vpop.f32.mrb[0].mxu0
    %v2927 = vadd.f32 %v2791, %v2926
    %v2928 = vpop.f32.mrb[0].mxu0
    %2929 = vmatprep.mubr.bf16.mxu0 %v2600
    %2930 = vmatmul.mubr.bf16.gmra.mrb[0].mxu0 %v2599
    %v2931 = vpop.f32.mrb[0].mxu0
    %v2932 = vadd.f32 %v2796, %v2931
    %v2933 = vpop.f32.mrb[0].mxu0
    %v2934 = vpop.f32.mrb[0].mxu0
    %v2935 = vadd.f32 %v2799, %v2934
    %v2936 = vpop.f32.mrb[0].mxu0
    %2937 = vmatprep.mubr.bf16.mxu0 %v2606
    %2938 = vmatmul.mubr.bf16.gmra.mrb[0].mxu0 %v2605
    %v2939 = vpop.f32.mrb[0].mxu0
    %v2940 = vadd.f32 %v2804, %v2939
    %v2941 = vpop.f32.mrb[0].mxu0
    %v2942 = vpop.f32.mrb[0].mxu0
    %v2943 = vadd.f32 %v2807, %v2942
    %v2944 = vpop.f32.mrb[0].mxu0
    %2945 = vmatprep.mubr.bf16.mxu0 %v2612
    %2946 = vmatmul.mubr.bf16.gmra.mrb[0].mxu0 %v2611
    %v2947 = vpop.f32.mrb[0].mxu0
    %v2948 = vadd.f32 %v2812, %v2947
    %v2949 = vpop.f32.mrb[0].mxu0
    %v2950 = vpop.f32.mrb[0].mxu0
    %v2951 = vadd.f32 %v2815, %v2950
    %v2952 = vpop.f32.mrb[0].mxu0
    %2953 = vmatprep.mubr.bf16.mxu0 %v2618
    %2954 = vmatmul.mubr.bf16.gmra.mrb[0].mxu0 %v2617
    %v2955 = vpop.f32.mrb[0].mxu0
    %v2956 = vadd.f32 %v2820, %v2955
    %v2957 = vpop.f32.mrb[0].mxu0
    %v2958 = vpop.f32.mrb[0].mxu0
    %v2959 = vadd.f32 %v2823, %v2958
    %v2960 = vpop.f32.mrb[0].mxu0
    %2961 = vmatprep.mubr.bf16.mxu0 %v2624
    %2962 = vmatmul.mubr.bf16.gmra.mrb[0].mxu0 %v2623
    %v2963 = vpop.f32.mrb[0].mxu0
    %v2964 = vadd.f32 %v2828, %v2963
    %v2965 = vpop.f32.mrb[0].mxu0
    %v2966 = vpop.f32.mrb[0].mxu0
    %v2967 = vadd.f32 %v2831, %v2966
    %v2968 = vpop.f32.mrb[0].mxu0
    %2969 = vmatprep.mubr.bf16.mxu0 %v2630
    %2970 = vmatmul.mubr.bf16.gmra.mrb[0].mxu0 %v2629
    %v2971 = vpop.f32.mrb[0].mxu0
    %v2972 = vadd.f32 %v2836, %v2971
    %v2973 = vpop.f32.mrb[0].mxu0
    %v2974 = vpop.f32.mrb[0].mxu0
    %v2975 = vadd.f32 %v2839, %v2974
    %v2976 = vpop.f32.mrb[0].mxu0
    %2977 = vmatprep.mubr.bf16.mxu0 %v2636
    %2978 = vmatmul.mubr.bf16.gmra.mrb[0].mxu0 %v2635
    %v2979 = vpop.f32.mrb[0].mxu0
    %v2980 = vadd.f32 %v2844, %v2979
    %v2981 = vpop.f32.mrb[0].mxu0
    %v2982 = vpop.f32.mrb[0].mxu0
    %v2983 = vadd.f32 %v2847, %v2982
    %v2984 = vpop.f32.mrb[0].mxu0
    %2985 = vmatprep.mubr.bf16.mxu0 %v2642
    %2986 = vmatmul.mubr.bf16.gmra.mrb[0].mxu0 %v2641
    %v2987 = vpop.f32.mrb[0].mxu0
    %v2988 = vadd.f32 %v2852, %v2987
    %v2989 = vpop.f32.mrb[0].mxu0
    %v2990 = vpop.f32.mrb[0].mxu0
    %v2991 = vadd.f32 %v2855, %v2990
    %v2992 = vpop.f32.mrb[0].mxu0
    %2993 = vmatprep.mubr.bf16.mxu0 %v2648
    %2994 = vmatmul.mubr.bf16.gmra.mrb[0].mxu0 %v2647
    %v2995 = vpop.f32.mrb[0].mxu0
    %v2996 = vadd.f32 %v2860, %v2995
    %v2997 = vpop.f32.mrb[0].mxu0
    %v2998 = vpop.f32.mrb[0].mxu0
    %v2999 = vpop.f32.mrb[0].mxu0
    %3000 = vdwg.mxu0
    %3001 = vmatprep.subr.bf16.mxu0 0
    %3002 = vmatpush1.bf16.msra.mxu0 %v819
    %3003 = vmatprep.subr.bf16.mxu0 0
    %3004 = vmatpush1.bf16.msra.mxu0 %v820
    %3005 = vmatprep.subr.bf16.mxu0 0
    %3006 = vmatpush1.bf16.msra.mxu0 %v821
    %3007 = vmatprep.subr.bf16.mxu0 0
    %3008 = vmatpush1.bf16.msra.mxu0 %v822
    %3009 = vmatprep.subr.bf16.mxu0 0
    %3010 = vmatpush1.bf16.msra.mxu0 %v823
    %3011 = vmatprep.subr.bf16.mxu0 0
    %3012 = vmatpush1.bf16.msra.mxu0 %v824
    %3013 = vmatprep.subr.bf16.mxu0 0
    %3014 = vmatpush1.bf16.msra.mxu0 %v825
    %3015 = vmatprep.subr.bf16.mxu0 0
    %3016 = vmatpush1.bf16.msra.mxu0 %v826
    %3017 = vmatprep.subr.bf16.mxu0 0
    %3018 = vmatpush1.bf16.msra.mxu0 %v827
    %3019 = vmatprep.subr.bf16.mxu0 0
    %3020 = vmatpush1.bf16.msra.mxu0 %v828
    %3021 = vmatprep.subr.bf16.mxu0 0
    %3022 = vmatpush1.bf16.msra.mxu0 %v829
    %3023 = vmatprep.subr.bf16.mxu0 0
    %3024 = vmatpush1.bf16.msra.mxu0 %v830
    %3025 = vmatprep.subr.bf16.mxu0 0
    %3026 = vmatpush1.bf16.msra.mxu0 %v831
    %3027 = vmatprep.subr.bf16.mxu0 0
    %3028 = vmatpush1.bf16.msra.mxu0 %v832
    %3029 = vmatprep.subr.bf16.mxu0 0
    %3030 = vmatpush1.bf16.msra.mxu0 %v833
    %3031 = vmatprep.subr.bf16.mxu0 0
    %3032 = vmatpush1.bf16.msra.mxu0 %v834
    %3033 = vmatprep.mubr.bf16.mxu0 %v2578
    %3034 = vmatmul.mubr.bf16.gmra.mrb[0].mxu0 %v2577
    %v3035 = vpop.f32.mrb[0].mxu0
    %v3036 = vadd.f32 %v2900, %v3035
    %v3037 = vpop.f32.mrb[0].mxu0
    %v3038 = vpop.f32.mrb[0].mxu0
    %v3039 = vadd.f32 %v2903, %v3038
    %v3040 = vpop.f32.mrb[0].mxu0
    %3041 = vmatprep.mubr.bf16.mxu0 %v2584
    %3042 = vmatmul.mubr.bf16.gmra.mrb[0].mxu0 %v2583
    %v3043 = vpop.f32.mrb[0].mxu0
    %v3044 = vadd.f32 %v2908, %v3043
    %v3045 = vpop.f32.mrb[0].mxu0
    %v3046 = vpop.f32.mrb[0].mxu0
    %v3047 = vadd.f32 %v2911, %v3046
    %v3048 = vpop.f32.mrb[0].mxu0
    %3049 = vmatprep.mubr.bf16.mxu0 %v2590
    %3050 = vmatmul.mubr.bf16.gmra.mrb[0].mxu0 %v2589
    %v3051 = vpop.f32.mrb[0].mxu0
    %v3052 = vadd.f32 %v2916, %v3051
    %v3053 = vpop.f32.mrb[0].mxu0
    %v3054 = vpop.f32.mrb[0].mxu0
    %v3055 = vadd.f32 %v2919, %v3054
    %v3056 = vpop.f32.mrb[0].mxu0
    %3057 = vmatprep.mubr.bf16.mxu0 %v2596
    %3058 = vmatmul.mubr.bf16.gmra.mrb[0].mxu0 %v2595
    %v3059 = vpop.f32.mrb[0].mxu0
    %v3060 = vadd.f32 %v2924, %v3059
    %v3061 = vpop.f32.mrb[0].mxu0
    %v3062 = vpop.f32.mrb[0].mxu0
    %v3063 = vadd.f32 %v2927, %v3062
    %v3064 = vpop.f32.mrb[0].mxu0
    %3065 = vmatprep.mubr.bf16.mxu0 %v2602
    %3066 = vmatmul.mubr.bf16.gmra.mrb[0].mxu0 %v2601
    %v3067 = vpop.f32.mrb[0].mxu0
    %v3068 = vadd.f32 %v2932, %v3067
    %v3069 = vpop.f32.mrb[0].mxu0
    %v3070 = vpop.f32.mrb[0].mxu0
    %v3071 = vadd.f32 %v2935, %v3070
    %v3072 = vpop.f32.mrb[0].mxu0
    %3073 = vmatprep.mubr.bf16.mxu0 %v2608
    %3074 = vmatmul.mubr.bf16.gmra.mrb[0].mxu0 %v2607
    %v3075 = vpop.f32.mrb[0].mxu0
    %v3076 = vadd.f32 %v2940, %v3075
    %v3077 = vpop.f32.mrb[0].mxu0
    %v3078 = vpop.f32.mrb[0].mxu0
    %v3079 = vadd.f32 %v2943, %v3078
    %v3080 = vpop.f32.mrb[0].mxu0
    %3081 = vmatprep.mubr.bf16.mxu0 %v2614
    %3082 = vmatmul.mubr.bf16.gmra.mrb[0].mxu0 %v2613
    %v3083 = vpop.f32.mrb[0].mxu0
    %v3084 = vadd.f32 %v2948, %v3083
    %v3085 = vpop.f32.mrb[0].mxu0
    %v3086 = vpop.f32.mrb[0].mxu0
    %v3087 = vadd.f32 %v2951, %v3086
    %v3088 = vpop.f32.mrb[0].mxu0
    %3089 = vmatprep.mubr.bf16.mxu0 %v2620
    %3090 = vmatmul.mubr.bf16.gmra.mrb[0].mxu0 %v2619
    %v3091 = vpop.f32.mrb[0].mxu0
    %v3092 = vadd.f32 %v2956, %v3091
    %v3093 = vpop.f32.mrb[0].mxu0
    %v3094 = vpop.f32.mrb[0].mxu0
    %v3095 = vadd.f32 %v2959, %v3094
    %v3096 = vpop.f32.mrb[0].mxu0
    %3097 = vmatprep.mubr.bf16.mxu0 %v2626
    %3098 = vmatmul.mubr.bf16.gmra.mrb[0].mxu0 %v2625
    %v3099 = vpop.f32.mrb[0].mxu0
    %v3100 = vadd.f32 %v2964, %v3099
    %v3101 = vpop.f32.mrb[0].mxu0
    %v3102 = vpop.f32.mrb[0].mxu0
    %v3103 = vadd.f32 %v2967, %v3102
    %v3104 = vpop.f32.mrb[0].mxu0
    %3105 = vmatprep.mubr.bf16.mxu0 %v2632
    %3106 = vmatmul.mubr.bf16.gmra.mrb[0].mxu0 %v2631
    %v3107 = vpop.f32.mrb[0].mxu0
    %v3108 = vadd.f32 %v2972, %v3107
    %v3109 = vpop.f32.mrb[0].mxu0
    %v3110 = vpop.f32.mrb[0].mxu0
    %v3111 = vadd.f32 %v2975, %v3110
    %v3112 = vpop.f32.mrb[0].mxu0
    %3113 = vmatprep.mubr.bf16.mxu0 %v2638
    %3114 = vmatmul.mubr.bf16.gmra.mrb[0].mxu0 %v2637
    %v3115 = vpop.f32.mrb[0].mxu0
    %v3116 = vadd.f32 %v2980, %v3115
    %v3117 = vpop.f32.mrb[0].mxu0
    %v3118 = vpop.f32.mrb[0].mxu0
    %v3119 = vadd.f32 %v2983, %v3118
    %v3120 = vpop.f32.mrb[0].mxu0
    %3121 = vmatprep.mubr.bf16.mxu0 %v2644
    %3122 = vmatmul.mubr.bf16.gmra.mrb[0].mxu0 %v2643
    %v3123 = vpop.f32.mrb[0].mxu0
    %v3124 = vadd.f32 %v2988, %v3123
    %v3125 = vpop.f32.mrb[0].mxu0
    %v3126 = vpop.f32.mrb[0].mxu0
    %v3127 = vadd.f32 %v2991, %v3126
    %v3128 = vpop.f32.mrb[0].mxu0
    %3129 = vmatprep.mubr.bf16.mxu0 %v2650
    %3130 = vmatmul.mubr.bf16.gmra.mrb[0].mxu0 %v2649
    %v3131 = vpop.f32.mrb[0].mxu0
    %v3132 = vadd.f32 %v2996, %v3131
    %v3133 = vpop.f32.mrb[0].mxu0
    %v3134 = vpop.f32.mrb[0].mxu0
    %v3135 = vpop.f32.mrb[0].mxu0
    %3136 = vdwg.mxu0
    %v3137 = vmax.f32 %v3036, 0.0
    %v3138 = vmax.f32 %v3039, 0.0
    %v3139 = vmax.f32 %v3044, 0.0
    %v3140 = vmax.f32 %v3047, 0.0
    %v3141 = vmax.f32 %v3052, 0.0
    %v3142 = vmax.f32 %v3055, 0.0
    %v3143 = vmax.f32 %v3060, 0.0
    %v3144 = vmax.f32 %v3063, 0.0
    %v3145 = vmax.f32 %v3068, 0.0
    %v3146 = vmax.f32 %v3071, 0.0
    %v3147 = vmax.f32 %v3076, 0.0
    %v3148 = vmax.f32 %v3079, 0.0
    %v3149 = vmax.f32 %v3084, 0.0
    %v3150 = vmax.f32 %v3087, 0.0
    %v3151 = vmax.f32 %v3092, 0.0
    %v3152 = vmax.f32 %v3095, 0.0
    %v3153 = vmax.f32 %v3100, 0.0
    %v3154 = vmax.f32 %v3103, 0.0
    %v3155 = vmax.f32 %v3108, 0.0
    %v3156 = vmax.f32 %v3111, 0.0
    %v3157 = vmax.f32 %v3116, 0.0
    %v3158 = vmax.f32 %v3119, 0.0
    %v3159 = vmax.f32 %v3124, 0.0
    %v3160 = vmax.f32 %v3127, 0.0
    %v3161 = vmax.f32 %v3132, 0.0
    %v3162 = vadd.f32 %v3137, %v3138
    %v3163 = vadd.f32 %v3162, %v3139
    %v3164 = vadd.f32 %v3163, %v3140
    %v3165 = vadd.f32 %v3164, %v3141
    %v3166 = vadd.f32 %v3165, %v3142
    %v3167 = vadd.f32 %v3166, %v3143
    %v3168 = vadd.f32 %v3167, %v3144
    %v3169 = vadd.f32 %v3168, %v3145
    %v3170 = vadd.f32 %v3169, %v3146
    %v3171 = vadd.f32 %v3170, %v3147
    %v3172 = vadd.f32 %v3171, %v3148
    %v3173 = vadd.f32 %v3172, %v3149
    %v3174 = vadd.f32 %v3173, %v3150
    %v3175 = vadd.f32 %v3174, %v3151
    %v3176 = vadd.f32 %v3175, %v3152
    %v3177 = vadd.f32 %v3176, %v3153
    %v3178 = vadd.f32 %v3177, %v3154
    %v3179 = vadd.f32 %v3178, %v3155
    %v3180 = vadd.f32 %v3179, %v3156
    %v3181 = vadd.f32 %v3180, %v3157
    %v3182 = vadd.f32 %v3181, %v3158
    %v3183 = vadd.f32 %v3182, %v3159
    %v3184 = vadd.f32 %v3183, %v3160
    %v3185 = vsel %vm1339, %v3161, 0.0
    %v3186 = vadd.f32 %v3184, %v3185
    %v3187 = vrot.slane %v3186, 4
    %v3188 = vadd.f32 %v3186, %v3187
    %v3189 = vrot.slane %v3188, 2
    %v3190 = vadd.f32 %v3188, %v3189
    %v3191 = vrot.slane %v3190, 1
    %v3192 = vadd.f32 %v3190, %v3191
    %v3193 = vmul.f32 %v3192, %v1348
    %s3194 = scalar_lea.vmem %s0, 1800
    %v3195 = vld [vmem:[%s3194] sm:$0xff]
    %v3196 = vld [vmem:[%s3194 + $0x8] sm:$0xff]
    %v3197 = vld [vmem:[%s3194 + $0x10] sm:$0xff]
    %v3198 = vld [vmem:[%s3194 + $0x18] sm:$0xff]
    %v3199 = vld [vmem:[%s3194 + $0x20] sm:$0xff]
    %v3200 = vld [vmem:[%s3194 + $0x28] sm:$0xff]
    %v3201 = vld [vmem:[%s3194 + $0x30] sm:$0xff]
    %v3202 = vld [vmem:[%s3194 + $0x38] sm:$0xff]
    %v3203 = vld [vmem:[%s3194 + $0x40] sm:$0xff]
    %v3204 = vld [vmem:[%s3194 + $0x48] sm:$0xff]
    %v3205 = vld [vmem:[%s3194 + $0x50] sm:$0xff]
    %v3206 = vld [vmem:[%s3194 + $0x58] sm:$0xff]
    %v3207 = vld [vmem:[%s3194 + $0x60] sm:$0xff]
    %v3208 = vld [vmem:[%s3194 + $0x68] sm:$0xff]
    %v3209 = vld [vmem:[%s3194 + $0x70] sm:$0xff]
    %v3210 = vld [vmem:[%s3194 + $0x78] sm:$0xff]
    %v3211 = vld [vmem:[%s3194 + $0x80] sm:$0xff]
    %v3212 = vld [vmem:[%s3194 + $0x88] sm:$0xff]
    %v3213 = vld [vmem:[%s3194 + $0x90] sm:$0xff]
    %v3214 = vld [vmem:[%s3194 + $0x98] sm:$0xff]
    %v3215 = vld [vmem:[%s3194 + $0xa0] sm:$0xff]
    %v3216 = vld [vmem:[%s3194 + $0xa8] sm:$0xff]
    %v3217 = vld [vmem:[%s3194 + $0xb0] sm:$0xff]
    %v3218 = vld [vmem:[%s3194 + $0xb8] sm:$0xff]
    %v3219 = vld [vmem:[%s3194 + $0xc0] sm:$0xff]
    %v3220 = vld [vmem:[%s3194 + $0xc8] sm:$0xff]
    %v3221 = vld [vmem:[%s3194 + $0xd0] sm:$0xff]
    %v3222 = vld [vmem:[%s3194 + $0xd8] sm:$0xff]
    %v3223 = vld [vmem:[%s3194 + $0xe0] sm:$0xff]
    %v3224 = vld [vmem:[%s3194 + $0xe8] sm:$0xff]
    %v3225 = vld [vmem:[%s3194 + $0xf0] sm:$0xff]
    %v3226 = vld [vmem:[%s3194 + $0xf8] sm:$0xff]
    %v3227 = vld [vmem:[%s3194 + $0x100] sm:$0xff]
    %v3228 = vld [vmem:[%s3194 + $0x108] sm:$0xff]
    %v3229 = vld [vmem:[%s3194 + $0x110] sm:$0xff]
    %v3230 = vld [vmem:[%s3194 + $0x118] sm:$0xff]
    %v3231 = vld [vmem:[%s3194 + $0x120] sm:$0xff]
    %v3232 = vld [vmem:[%s3194 + $0x128] sm:$0xff]
    %v3233 = vld [vmem:[%s3194 + $0x130] sm:$0xff]
    %v3234 = vld [vmem:[%s3194 + $0x138] sm:$0xff]
    %v3235 = vld [vmem:[%s3194 + $0x140] sm:$0xff]
    %v3236 = vld [vmem:[%s3194 + $0x148] sm:$0xff]
    %v3237 = vld [vmem:[%s3194 + $0x150] sm:$0xff]
    %v3238 = vld [vmem:[%s3194 + $0x158] sm:$0xff]
    %v3239 = vld [vmem:[%s3194 + $0x160] sm:$0xff]
    %v3240 = vld [vmem:[%s3194 + $0x168] sm:$0xff]
    %v3241 = vld [vmem:[%s3194 + $0x170] sm:$0xff]
    %v3242 = vld [vmem:[%s3194 + $0x178] sm:$0xff]
    %v3243 = vld [vmem:[%s3194 + $0x180] sm:$0xff]
    %v3244 = vld [vmem:[%s3194 + $0x188] sm:$0xff]
    %v3245 = vld [vmem:[%s3194 + $0x190] sm:$0xff]
    %v3246 = vld [vmem:[%s3194 + $0x198] sm:$0xff]
    %v3247 = vld [vmem:[%s3194 + $0x1a0] sm:$0xff]
    %v3248 = vld [vmem:[%s3194 + $0x1a8] sm:$0xff]
    %v3249 = vld [vmem:[%s3194 + $0x1b0] sm:$0xff]
    %v3250 = vld [vmem:[%s3194 + $0x1b8] sm:$0xff]
    %v3251 = vld [vmem:[%s3194 + $0x1c0] sm:$0xff]
    %v3252 = vld [vmem:[%s3194 + $0x1c8] sm:$0xff]
    %v3253 = vld [vmem:[%s3194 + $0x1d0] sm:$0xff]
    %v3254 = vld [vmem:[%s3194 + $0x1d8] sm:$0xff]
    %v3255 = vld [vmem:[%s3194 + $0x1e0] sm:$0xff]
    %v3256 = vld [vmem:[%s3194 + $0x1e8] sm:$0xff]
    %v3257 = vld [vmem:[%s3194 + $0x1f0] sm:$0xff]
    %v3258 = vld [vmem:[%s3194 + $0x1f8] sm:$0xff]
    %v3259 = vld [vmem:[%s3194 + $0x200] sm:$0xff]
    %v3260 = vld [vmem:[%s3194 + $0x208] sm:$0xff]
    %v3261 = vld [vmem:[%s3194 + $0x210] sm:$0xff]
    %v3262 = vld [vmem:[%s3194 + $0x218] sm:$0xff]
    %v3263 = vld [vmem:[%s3194 + $0x220] sm:$0xff]
    %v3264 = vld [vmem:[%s3194 + $0x228] sm:$0xff]
    %v3265 = vld [vmem:[%s3194 + $0x230] sm:$0xff]
    %v3266 = vld [vmem:[%s3194 + $0x238] sm:$0xff]
    %v3267 = vld [vmem:[%s3194 + $0x240] sm:$0x33]
    %v3268 = vld [vmem:[%s3194 + $0x248] sm:$0x33]
    %v3269 = vld [vmem:[%s3194 + $0x250] sm:$0x33]
    %v3345 = vunpack.c.l.b16 %v3195
    %v3346 = vunpack.c.h.b16 %v3195
    %v3347 = vunpack.c.l.b16 %v3196
    %v3348 = vunpack.c.h.b16 %v3196
    %v3349 = vunpack.c.l.b16 %v3197
    %v3350 = vunpack.c.h.b16 %v3197
    %v3351 = vunpack.c.l.b16 %v3198
    %v3352 = vunpack.c.h.b16 %v3198
    %v3353 = vunpack.c.l.b16 %v3199
    %v3354 = vunpack.c.h.b16 %v3199
    %v3355 = vunpack.c.l.b16 %v3200
    %v3356 = vunpack.c.h.b16 %v3200
    %v3357 = vunpack.c.l.b16 %v3201
    %v3358 = vunpack.c.h.b16 %v3201
    %v3359 = vunpack.c.l.b16 %v3202
    %v3360 = vunpack.c.h.b16 %v3202
    %v3361 = vunpack.c.l.b16 %v3203
    %v3362 = vunpack.c.h.b16 %v3203
    %v3363 = vunpack.c.l.b16 %v3204
    %v3364 = vunpack.c.h.b16 %v3204
    %v3365 = vunpack.c.l.b16 %v3205
    %v3366 = vunpack.c.h.b16 %v3205
    %v3367 = vunpack.c.l.b16 %v3206
    %v3368 = vunpack.c.h.b16 %v3206
    %v3369 = vunpack.c.l.b16 %v3207
    %v3370 = vunpack.c.h.b16 %v3207
    %v3371 = vunpack.c.l.b16 %v3208
    %v3372 = vunpack.c.h.b16 %v3208
    %v3373 = vunpack.c.l.b16 %v3209
    %v3374 = vunpack.c.h.b16 %v3209
    %v3375 = vunpack.c.l.b16 %v3210
    %v3376 = vunpack.c.h.b16 %v3210
    %v3377 = vunpack.c.l.b16 %v3211
    %v3378 = vunpack.c.h.b16 %v3211
    %v3379 = vunpack.c.l.b16 %v3212
    %v3380 = vunpack.c.h.b16 %v3212
    %v3381 = vunpack.c.l.b16 %v3213
    %v3382 = vunpack.c.h.b16 %v3213
    %v3383 = vunpack.c.l.b16 %v3214
    %v3384 = vunpack.c.h.b16 %v3214
    %v3385 = vunpack.c.l.b16 %v3215
    %v3386 = vunpack.c.h.b16 %v3215
    %v3387 = vunpack.c.l.b16 %v3216
    %v3388 = vunpack.c.h.b16 %v3216
    %v3389 = vunpack.c.l.b16 %v3217
    %v3390 = vunpack.c.h.b16 %v3217
    %v3391 = vunpack.c.l.b16 %v3218
    %v3392 = vunpack.c.h.b16 %v3218
    %v3393 = vunpack.c.l.b16 %v3219
    %v3394 = vunpack.c.h.b16 %v3219
    %v3395 = vunpack.c.l.b16 %v3220
    %v3396 = vunpack.c.h.b16 %v3220
    %v3397 = vunpack.c.l.b16 %v3221
    %v3398 = vunpack.c.h.b16 %v3221
    %v3399 = vunpack.c.l.b16 %v3222
    %v3400 = vunpack.c.h.b16 %v3222
    %v3401 = vunpack.c.l.b16 %v3223
    %v3402 = vunpack.c.h.b16 %v3223
    %v3403 = vunpack.c.l.b16 %v3224
    %v3404 = vunpack.c.h.b16 %v3224
    %v3405 = vunpack.c.l.b16 %v3225
    %v3406 = vunpack.c.h.b16 %v3225
    %v3407 = vunpack.c.l.b16 %v3226
    %v3408 = vunpack.c.h.b16 %v3226
    %v3409 = vunpack.c.l.b16 %v3227
    %v3410 = vunpack.c.h.b16 %v3227
    %v3411 = vunpack.c.l.b16 %v3228
    %v3412 = vunpack.c.h.b16 %v3228
    %v3413 = vunpack.c.l.b16 %v3229
    %v3414 = vunpack.c.h.b16 %v3229
    %v3415 = vunpack.c.l.b16 %v3230
    %v3416 = vunpack.c.h.b16 %v3230
    %v3417 = vunpack.c.l.b16 %v3231
    %v3418 = vunpack.c.h.b16 %v3231
    %v3419 = vunpack.c.l.b16 %v3232
    %v3420 = vunpack.c.h.b16 %v3232
    %v3421 = vunpack.c.l.b16 %v3233
    %v3422 = vunpack.c.h.b16 %v3233
    %v3423 = vunpack.c.l.b16 %v3234
    %v3424 = vunpack.c.h.b16 %v3234
    %v3425 = vunpack.c.l.b16 %v3235
    %v3426 = vunpack.c.h.b16 %v3235
    %v3427 = vunpack.c.l.b16 %v3236
    %v3428 = vunpack.c.h.b16 %v3236
    %v3429 = vunpack.c.l.b16 %v3237
    %v3430 = vunpack.c.h.b16 %v3237
    %v3431 = vunpack.c.l.b16 %v3238
    %v3432 = vunpack.c.h.b16 %v3238
    %v3433 = vunpack.c.l.b16 %v3239
    %v3434 = vunpack.c.h.b16 %v3239
    %v3435 = vunpack.c.l.b16 %v3240
    %v3436 = vunpack.c.h.b16 %v3240
    %v3437 = vunpack.c.l.b16 %v3241
    %v3438 = vunpack.c.h.b16 %v3241
    %v3439 = vunpack.c.l.b16 %v3242
    %v3440 = vunpack.c.h.b16 %v3242
    %v3441 = vunpack.c.l.b16 %v3243
    %v3442 = vunpack.c.h.b16 %v3243
    %v3443 = vunpack.c.l.b16 %v3244
    %v3444 = vunpack.c.h.b16 %v3244
    %v3445 = vunpack.c.l.b16 %v3245
    %v3446 = vunpack.c.h.b16 %v3245
    %v3447 = vunpack.c.l.b16 %v3246
    %v3448 = vunpack.c.h.b16 %v3246
    %v3449 = vunpack.c.l.b16 %v3247
    %v3450 = vunpack.c.h.b16 %v3247
    %v3451 = vunpack.c.l.b16 %v3248
    %v3452 = vunpack.c.h.b16 %v3248
    %v3453 = vunpack.c.l.b16 %v3249
    %v3454 = vunpack.c.h.b16 %v3249
    %v3455 = vunpack.c.l.b16 %v3250
    %v3456 = vunpack.c.h.b16 %v3250
    %v3457 = vunpack.c.l.b16 %v3251
    %v3458 = vunpack.c.h.b16 %v3251
    %v3459 = vunpack.c.l.b16 %v3252
    %v3460 = vunpack.c.h.b16 %v3252
    %v3461 = vunpack.c.l.b16 %v3253
    %v3462 = vunpack.c.h.b16 %v3253
    %v3463 = vunpack.c.l.b16 %v3254
    %v3464 = vunpack.c.h.b16 %v3254
    %v3465 = vunpack.c.l.b16 %v3255
    %v3466 = vunpack.c.h.b16 %v3255
    %v3467 = vunpack.c.l.b16 %v3256
    %v3468 = vunpack.c.h.b16 %v3256
    %v3469 = vunpack.c.l.b16 %v3257
    %v3470 = vunpack.c.h.b16 %v3257
    %v3471 = vunpack.c.l.b16 %v3258
    %v3472 = vunpack.c.h.b16 %v3258
    %v3473 = vunpack.c.l.b16 %v3259
    %v3474 = vunpack.c.h.b16 %v3259
    %v3475 = vunpack.c.l.b16 %v3260
    %v3476 = vunpack.c.h.b16 %v3260
    %v3477 = vunpack.c.l.b16 %v3261
    %v3478 = vunpack.c.h.b16 %v3261
    %v3479 = vunpack.c.l.b16 %v3262
    %v3480 = vunpack.c.h.b16 %v3262
    %v3481 = vunpack.c.l.b16 %v3263
    %v3482 = vunpack.c.h.b16 %v3263
    %v3483 = vunpack.c.l.b16 %v3264
    %v3484 = vunpack.c.h.b16 %v3264
    %v3485 = vunpack.c.l.b16 %v3265
    %v3486 = vunpack.c.h.b16 %v3265
    %v3487 = vunpack.c.l.b16 %v3266
    %v3488 = vunpack.c.h.b16 %v3266
    %v3489 = vunpack.c.l.b16 %v3267
    %v3490 = vunpack.c.h.b16 %v3267
    %v3491 = vunpack.c.l.b16 %v3268
    %v3492 = vunpack.c.h.b16 %v3268
    %v3493 = vunpack.c.l.b16 %v3269
    %v3494 = vunpack.c.h.b16 %v3269
    %v3495 = vpack.c.b16 %v3351, %v3345
    %v3496 = vpack.c.b16 %v3352, %v3346
    %v3497 = vpack.c.b16 %v3353, %v3347
    %v3498 = vpack.c.b16 %v3354, %v3348
    %v3499 = vpack.c.b16 %v3355, %v3349
    %v3500 = vpack.c.b16 %v3356, %v3350
    %v3501 = vpack.c.b16 %v3363, %v3357
    %v3502 = vpack.c.b16 %v3364, %v3358
    %v3503 = vpack.c.b16 %v3365, %v3359
    %v3504 = vpack.c.b16 %v3366, %v3360
    %v3505 = vpack.c.b16 %v3367, %v3361
    %v3506 = vpack.c.b16 %v3368, %v3362
    %v3507 = vpack.c.b16 %v3375, %v3369
    %v3508 = vpack.c.b16 %v3376, %v3370
    %v3509 = vpack.c.b16 %v3377, %v3371
    %v3510 = vpack.c.b16 %v3378, %v3372
    %v3511 = vpack.c.b16 %v3379, %v3373
    %v3512 = vpack.c.b16 %v3380, %v3374
    %v3513 = vpack.c.b16 %v3387, %v3381
    %v3514 = vpack.c.b16 %v3388, %v3382
    %v3515 = vpack.c.b16 %v3389, %v3383
    %v3516 = vpack.c.b16 %v3390, %v3384
    %v3517 = vpack.c.b16 %v3391, %v3385
    %v3518 = vpack.c.b16 %v3392, %v3386
    %v3519 = vpack.c.b16 %v3399, %v3393
    %v3520 = vpack.c.b16 %v3400, %v3394
    %v3521 = vpack.c.b16 %v3401, %v3395
    %v3522 = vpack.c.b16 %v3402, %v3396
    %v3523 = vpack.c.b16 %v3403, %v3397
    %v3524 = vpack.c.b16 %v3404, %v3398
    %v3525 = vpack.c.b16 %v3411, %v3405
    %v3526 = vpack.c.b16 %v3412, %v3406
    %v3527 = vpack.c.b16 %v3413, %v3407
    %v3528 = vpack.c.b16 %v3414, %v3408
    %v3529 = vpack.c.b16 %v3415, %v3409
    %v3530 = vpack.c.b16 %v3416, %v3410
    %v3531 = vpack.c.b16 %v3423, %v3417
    %v3532 = vpack.c.b16 %v3424, %v3418
    %v3533 = vpack.c.b16 %v3425, %v3419
    %v3534 = vpack.c.b16 %v3426, %v3420
    %v3535 = vpack.c.b16 %v3427, %v3421
    %v3536 = vpack.c.b16 %v3428, %v3422
    %v3537 = vpack.c.b16 %v3435, %v3429
    %v3538 = vpack.c.b16 %v3436, %v3430
    %v3539 = vpack.c.b16 %v3437, %v3431
    %v3540 = vpack.c.b16 %v3438, %v3432
    %v3541 = vpack.c.b16 %v3439, %v3433
    %v3542 = vpack.c.b16 %v3440, %v3434
    %v3543 = vpack.c.b16 %v3447, %v3441
    %v3544 = vpack.c.b16 %v3448, %v3442
    %v3545 = vpack.c.b16 %v3449, %v3443
    %v3546 = vpack.c.b16 %v3450, %v3444
    %v3547 = vpack.c.b16 %v3451, %v3445
    %v3548 = vpack.c.b16 %v3452, %v3446
    %v3549 = vpack.c.b16 %v3459, %v3453
    %v3550 = vpack.c.b16 %v3460, %v3454
    %v3551 = vpack.c.b16 %v3461, %v3455
    %v3552 = vpack.c.b16 %v3462, %v3456
    %v3553 = vpack.c.b16 %v3463, %v3457
    %v3554 = vpack.c.b16 %v3464, %v3458
    %v3555 = vpack.c.b16 %v3471, %v3465
    %v3556 = vpack.c.b16 %v3472, %v3466
    %v3557 = vpack.c.b16 %v3473, %v3467
    %v3558 = vpack.c.b16 %v3474, %v3468
    %v3559 = vpack.c.b16 %v3475, %v3469
    %v3560 = vpack.c.b16 %v3476, %v3470
    %v3561 = vpack.c.b16 %v3483, %v3477
    %v3562 = vpack.c.b16 %v3484, %v3478
    %v3563 = vpack.c.b16 %v3485, %v3479
    %v3564 = vpack.c.b16 %v3486, %v3480
    %v3565 = vpack.c.b16 %v3487, %v3481
    %v3566 = vpack.c.b16 %v3488, %v3482
    %v3567 = vpack.c.b16 %v3489, %v3489
    %v3568 = vpack.c.b16 %v3490, %v3490
    %v3569 = vpack.c.b16 %v3491, %v3491
    %v3570 = vpack.c.b16 %v3492, %v3492
    %v3571 = vpack.c.b16 %v3493, %v3493
    %v3572 = vpack.c.b16 %v3494, %v3494
    %3651 = vmatprep.subr.bf16.mxu0 0
    %3652 = vmatpush1.bf16.msra.mxu0 %v787
    %3653 = vmatprep.subr.bf16.mxu0 0
    %3654 = vmatpush1.bf16.msra.mxu0 %v788
    %3655 = vmatprep.subr.bf16.mxu0 0
    %3656 = vmatpush1.bf16.msra.mxu0 %v789
    %3657 = vmatprep.subr.bf16.mxu0 0
    %3658 = vmatpush1.bf16.msra.mxu0 %v790
    %3659 = vmatprep.subr.bf16.mxu0 0
    %3660 = vmatpush1.bf16.msra.mxu0 %v791
    %3661 = vmatprep.subr.bf16.mxu0 0
    %3662 = vmatpush1.bf16.msra.mxu0 %v792
    %3663 = vmatprep.subr.bf16.mxu0 0
    %3664 = vmatpush1.bf16.msra.mxu0 %v793
    %3665 = vmatprep.subr.bf16.mxu0 0
    %3666 = vmatpush1.bf16.msra.mxu0 %v794
    %3667 = vmatprep.subr.bf16.mxu0 0
    %3668 = vmatpush1.bf16.msra.mxu0 %v795
    %3669 = vmatprep.subr.bf16.mxu0 0
    %3670 = vmatpush1.bf16.msra.mxu0 %v796
    %3671 = vmatprep.subr.bf16.mxu0 0
    %3672 = vmatpush1.bf16.msra.mxu0 %v797
    %3673 = vmatprep.subr.bf16.mxu0 0
    %3674 = vmatpush1.bf16.msra.mxu0 %v798
    %3675 = vmatprep.subr.bf16.mxu0 0
    %3676 = vmatpush1.bf16.msra.mxu0 %v799
    %3677 = vmatprep.subr.bf16.mxu0 0
    %3678 = vmatpush1.bf16.msra.mxu0 %v800
    %3679 = vmatprep.subr.bf16.mxu0 0
    %3680 = vmatpush1.bf16.msra.mxu0 %v801
    %3681 = vmatprep.subr.bf16.mxu0 0
    %3682 = vmatpush1.bf16.msra.mxu0 %v802
    %3683 = vmatprep.mubr.bf16.mxu0 %v3496
    %3684 = vmatmul.mubr.bf16.gmra.mrb[0].mxu0 %v3495
    %v3685 = vpop.f32.mrb[0].mxu0
    %v3686 = vadd.f32 %v212, %v3685
    %v3687 = vpop.f32.mrb[0].mxu0
    %v3688 = vpop.f32.mrb[0].mxu0
    %v3689 = vadd.f32 %v212, %v3688
    %v3690 = vpop.f32.mrb[0].mxu0
    %3691 = vmatprep.mubr.bf16.mxu0 %v3502
    %3692 = vmatmul.mubr.bf16.gmra.mrb[0].mxu0 %v3501
    %v3693 = vpop.f32.mrb[0].mxu0
    %v3694 = vadd.f32 %v212, %v3693
    %v3695 = vpop.f32.mrb[0].mxu0
    %v3696 = vpop.f32.mrb[0].mxu0
    %v3697 = vadd.f32 %v212, %v3696
    %v3698 = vpop.f32.mrb[0].mxu0
    %3699 = vmatprep.mubr.bf16.mxu0 %v3508
    %3700 = vmatmul.mubr.bf16.gmra.mrb[0].mxu0 %v3507
    %v3701 = vpop.f32.mrb[0].mxu0
    %v3702 = vadd.f32 %v212, %v3701
    %v3703 = vpop.f32.mrb[0].mxu0
    %v3704 = vpop.f32.mrb[0].mxu0
    %v3705 = vadd.f32 %v212, %v3704
    %v3706 = vpop.f32.mrb[0].mxu0
    %3707 = vmatprep.mubr.bf16.mxu0 %v3514
    %3708 = vmatmul.mubr.bf16.gmra.mrb[0].mxu0 %v3513
    %v3709 = vpop.f32.mrb[0].mxu0
    %v3710 = vadd.f32 %v212, %v3709
    %v3711 = vpop.f32.mrb[0].mxu0
    %v3712 = vpop.f32.mrb[0].mxu0
    %v3713 = vadd.f32 %v212, %v3712
    %v3714 = vpop.f32.mrb[0].mxu0
    %3715 = vmatprep.mubr.bf16.mxu0 %v3520
    %3716 = vmatmul.mubr.bf16.gmra.mrb[0].mxu0 %v3519
    %v3717 = vpop.f32.mrb[0].mxu0
    %v3718 = vadd.f32 %v212, %v3717
    %v3719 = vpop.f32.mrb[0].mxu0
    %v3720 = vpop.f32.mrb[0].mxu0
    %v3721 = vadd.f32 %v212, %v3720
    %v3722 = vpop.f32.mrb[0].mxu0
    %3723 = vmatprep.mubr.bf16.mxu0 %v3526
    %3724 = vmatmul.mubr.bf16.gmra.mrb[0].mxu0 %v3525
    %v3725 = vpop.f32.mrb[0].mxu0
    %v3726 = vadd.f32 %v212, %v3725
    %v3727 = vpop.f32.mrb[0].mxu0
    %v3728 = vpop.f32.mrb[0].mxu0
    %v3729 = vadd.f32 %v212, %v3728
    %v3730 = vpop.f32.mrb[0].mxu0
    %3731 = vmatprep.mubr.bf16.mxu0 %v3532
    %3732 = vmatmul.mubr.bf16.gmra.mrb[0].mxu0 %v3531
    %v3733 = vpop.f32.mrb[0].mxu0
    %v3734 = vadd.f32 %v212, %v3733
    %v3735 = vpop.f32.mrb[0].mxu0
    %v3736 = vpop.f32.mrb[0].mxu0
    %v3737 = vadd.f32 %v212, %v3736
    %v3738 = vpop.f32.mrb[0].mxu0
    %3739 = vmatprep.mubr.bf16.mxu0 %v3538
    %3740 = vmatmul.mubr.bf16.gmra.mrb[0].mxu0 %v3537
    %v3741 = vpop.f32.mrb[0].mxu0
    %v3742 = vadd.f32 %v212, %v3741
    %v3743 = vpop.f32.mrb[0].mxu0
    %v3744 = vpop.f32.mrb[0].mxu0
    %v3745 = vadd.f32 %v212, %v3744
    %v3746 = vpop.f32.mrb[0].mxu0
    %3747 = vmatprep.mubr.bf16.mxu0 %v3544
    %3748 = vmatmul.mubr.bf16.gmra.mrb[0].mxu0 %v3543
    %v3749 = vpop.f32.mrb[0].mxu0
    %v3750 = vadd.f32 %v212, %v3749
    %v3751 = vpop.f32.mrb[0].mxu0
    %v3752 = vpop.f32.mrb[0].mxu0
    %v3753 = vadd.f32 %v212, %v3752
    %v3754 = vpop.f32.mrb[0].mxu0
    %3755 = vmatprep.mubr.bf16.mxu0 %v3550
    %3756 = vmatmul.mubr.bf16.gmra.mrb[0].mxu0 %v3549
    %v3757 = vpop.f32.mrb[0].mxu0
    %v3758 = vadd.f32 %v212, %v3757
    %v3759 = vpop.f32.mrb[0].mxu0
    %v3760 = vpop.f32.mrb[0].mxu0
    %v3761 = vadd.f32 %v212, %v3760
    %v3762 = vpop.f32.mrb[0].mxu0
    %3763 = vmatprep.mubr.bf16.mxu0 %v3556
    %3764 = vmatmul.mubr.bf16.gmra.mrb[0].mxu0 %v3555
    %v3765 = vpop.f32.mrb[0].mxu0
    %v3766 = vadd.f32 %v212, %v3765
    %v3767 = vpop.f32.mrb[0].mxu0
    %v3768 = vpop.f32.mrb[0].mxu0
    %v3769 = vadd.f32 %v212, %v3768
    %v3770 = vpop.f32.mrb[0].mxu0
    %3771 = vmatprep.mubr.bf16.mxu0 %v3562
    %3772 = vmatmul.mubr.bf16.gmra.mrb[0].mxu0 %v3561
    %v3773 = vpop.f32.mrb[0].mxu0
    %v3774 = vadd.f32 %v212, %v3773
    %v3775 = vpop.f32.mrb[0].mxu0
    %v3776 = vpop.f32.mrb[0].mxu0
    %v3777 = vadd.f32 %v212, %v3776
    %v3778 = vpop.f32.mrb[0].mxu0
    %3779 = vmatprep.mubr.bf16.mxu0 %v3568
    %3780 = vmatmul.mubr.bf16.gmra.mrb[0].mxu0 %v3567
    %v3781 = vpop.f32.mrb[0].mxu0
    %v3782 = vadd.f32 %v212, %v3781
    %v3783 = vpop.f32.mrb[0].mxu0
    %v3784 = vpop.f32.mrb[0].mxu0
    %v3785 = vpop.f32.mrb[0].mxu0
    %3786 = vdwg.mxu0
    %3787 = vmatprep.subr.bf16.mxu0 0
    %3788 = vmatpush1.bf16.msra.mxu0 %v803
    %3789 = vmatprep.subr.bf16.mxu0 0
    %3790 = vmatpush1.bf16.msra.mxu0 %v804
    %3791 = vmatprep.subr.bf16.mxu0 0
    %3792 = vmatpush1.bf16.msra.mxu0 %v805
    %3793 = vmatprep.subr.bf16.mxu0 0
    %3794 = vmatpush1.bf16.msra.mxu0 %v806
    %3795 = vmatprep.subr.bf16.mxu0 0
    %3796 = vmatpush1.bf16.msra.mxu0 %v807
    %3797 = vmatprep.subr.bf16.mxu0 0
    %3798 = vmatpush1.bf16.msra.mxu0 %v808
    %3799 = vmatprep.subr.bf16.mxu0 0
    %3800 = vmatpush1.bf16.msra.mxu0 %v809
    %3801 = vmatprep.subr.bf16.mxu0 0
    %3802 = vmatpush1.bf16.msra.mxu0 %v810
    %3803 = vmatprep.subr.bf16.mxu0 0
    %3804 = vmatpush1.bf16.msra.mxu0 %v811
    %3805 = vmatprep.subr.bf16.mxu0 0
    %3806 = vmatpush1.bf16.msra.mxu0 %v812
    %3807 = vmatprep.subr.bf16.mxu0 0
    %3808 = vmatpush1.bf16.msra.mxu0 %v813
    %3809 = vmatprep.subr.bf16.mxu0 0
    %3810 = vmatpush1.bf16.msra.mxu0 %v814
    %3811 = vmatprep.subr.bf16.mxu0 0
    %3812 = vmatpush1.bf16.msra.mxu0 %v815
    %3813 = vmatprep.subr.bf16.mxu0 0
    %3814 = vmatpush1.bf16.msra.mxu0 %v816
    %3815 = vmatprep.subr.bf16.mxu0 0
    %3816 = vmatpush1.bf16.msra.mxu0 %v817
    %3817 = vmatprep.subr.bf16.mxu0 0
    %3818 = vmatpush1.bf16.msra.mxu0 %v818
    %3819 = vmatprep.mubr.bf16.mxu0 %v3498
    %3820 = vmatmul.mubr.bf16.gmra.mrb[0].mxu0 %v3497
    %v3821 = vpop.f32.mrb[0].mxu0
    %v3822 = vadd.f32 %v3686, %v3821
    %v3823 = vpop.f32.mrb[0].mxu0
    %v3824 = vpop.f32.mrb[0].mxu0
    %v3825 = vadd.f32 %v3689, %v3824
    %v3826 = vpop.f32.mrb[0].mxu0
    %3827 = vmatprep.mubr.bf16.mxu0 %v3504
    %3828 = vmatmul.mubr.bf16.gmra.mrb[0].mxu0 %v3503
    %v3829 = vpop.f32.mrb[0].mxu0
    %v3830 = vadd.f32 %v3694, %v3829
    %v3831 = vpop.f32.mrb[0].mxu0
    %v3832 = vpop.f32.mrb[0].mxu0
    %v3833 = vadd.f32 %v3697, %v3832
    %v3834 = vpop.f32.mrb[0].mxu0
    %3835 = vmatprep.mubr.bf16.mxu0 %v3510
    %3836 = vmatmul.mubr.bf16.gmra.mrb[0].mxu0 %v3509
    %v3837 = vpop.f32.mrb[0].mxu0
    %v3838 = vadd.f32 %v3702, %v3837
    %v3839 = vpop.f32.mrb[0].mxu0
    %v3840 = vpop.f32.mrb[0].mxu0
    %v3841 = vadd.f32 %v3705, %v3840
    %v3842 = vpop.f32.mrb[0].mxu0
    %3843 = vmatprep.mubr.bf16.mxu0 %v3516
    %3844 = vmatmul.mubr.bf16.gmra.mrb[0].mxu0 %v3515
    %v3845 = vpop.f32.mrb[0].mxu0
    %v3846 = vadd.f32 %v3710, %v3845
    %v3847 = vpop.f32.mrb[0].mxu0
    %v3848 = vpop.f32.mrb[0].mxu0
    %v3849 = vadd.f32 %v3713, %v3848
    %v3850 = vpop.f32.mrb[0].mxu0
    %3851 = vmatprep.mubr.bf16.mxu0 %v3522
    %3852 = vmatmul.mubr.bf16.gmra.mrb[0].mxu0 %v3521
    %v3853 = vpop.f32.mrb[0].mxu0
    %v3854 = vadd.f32 %v3718, %v3853
    %v3855 = vpop.f32.mrb[0].mxu0
    %v3856 = vpop.f32.mrb[0].mxu0
    %v3857 = vadd.f32 %v3721, %v3856
    %v3858 = vpop.f32.mrb[0].mxu0
    %3859 = vmatprep.mubr.bf16.mxu0 %v3528
    %3860 = vmatmul.mubr.bf16.gmra.mrb[0].mxu0 %v3527
    %v3861 = vpop.f32.mrb[0].mxu0
    %v3862 = vadd.f32 %v3726, %v3861
    %v3863 = vpop.f32.mrb[0].mxu0
    %v3864 = vpop.f32.mrb[0].mxu0
    %v3865 = vadd.f32 %v3729, %v3864
    %v3866 = vpop.f32.mrb[0].mxu0
    %3867 = vmatprep.mubr.bf16.mxu0 %v3534
    %3868 = vmatmul.mubr.bf16.gmra.mrb[0].mxu0 %v3533
    %v3869 = vpop.f32.mrb[0].mxu0
    %v3870 = vadd.f32 %v3734, %v3869
    %v3871 = vpop.f32.mrb[0].mxu0
    %v3872 = vpop.f32.mrb[0].mxu0
    %v3873 = vadd.f32 %v3737, %v3872
    %v3874 = vpop.f32.mrb[0].mxu0
    %3875 = vmatprep.mubr.bf16.mxu0 %v3540
    %3876 = vmatmul.mubr.bf16.gmra.mrb[0].mxu0 %v3539
    %v3877 = vpop.f32.mrb[0].mxu0
    %v3878 = vadd.f32 %v3742, %v3877
    %v3879 = vpop.f32.mrb[0].mxu0
    %v3880 = vpop.f32.mrb[0].mxu0
    %v3881 = vadd.f32 %v3745, %v3880
    %v3882 = vpop.f32.mrb[0].mxu0
    %3883 = vmatprep.mubr.bf16.mxu0 %v3546
    %3884 = vmatmul.mubr.bf16.gmra.mrb[0].mxu0 %v3545
    %v3885 = vpop.f32.mrb[0].mxu0
    %v3886 = vadd.f32 %v3750, %v3885
    %v3887 = vpop.f32.mrb[0].mxu0
    %v3888 = vpop.f32.mrb[0].mxu0
    %v3889 = vadd.f32 %v3753, %v3888
    %v3890 = vpop.f32.mrb[0].mxu0
    %3891 = vmatprep.mubr.bf16.mxu0 %v3552
    %3892 = vmatmul.mubr.bf16.gmra.mrb[0].mxu0 %v3551
    %v3893 = vpop.f32.mrb[0].mxu0
    %v3894 = vadd.f32 %v3758, %v3893
    %v3895 = vpop.f32.mrb[0].mxu0
    %v3896 = vpop.f32.mrb[0].mxu0
    %v3897 = vadd.f32 %v3761, %v3896
    %v3898 = vpop.f32.mrb[0].mxu0
    %3899 = vmatprep.mubr.bf16.mxu0 %v3558
    %3900 = vmatmul.mubr.bf16.gmra.mrb[0].mxu0 %v3557
    %v3901 = vpop.f32.mrb[0].mxu0
    %v3902 = vadd.f32 %v3766, %v3901
    %v3903 = vpop.f32.mrb[0].mxu0
    %v3904 = vpop.f32.mrb[0].mxu0
    %v3905 = vadd.f32 %v3769, %v3904
    %v3906 = vpop.f32.mrb[0].mxu0
    %3907 = vmatprep.mubr.bf16.mxu0 %v3564
    %3908 = vmatmul.mubr.bf16.gmra.mrb[0].mxu0 %v3563
    %v3909 = vpop.f32.mrb[0].mxu0
    %v3910 = vadd.f32 %v3774, %v3909
    %v3911 = vpop.f32.mrb[0].mxu0
    %v3912 = vpop.f32.mrb[0].mxu0
    %v3913 = vadd.f32 %v3777, %v3912
    %v3914 = vpop.f32.mrb[0].mxu0
    %3915 = vmatprep.mubr.bf16.mxu0 %v3570
    %3916 = vmatmul.mubr.bf16.gmra.mrb[0].mxu0 %v3569
    %v3917 = vpop.f32.mrb[0].mxu0
    %v3918 = vadd.f32 %v3782, %v3917
    %v3919 = vpop.f32.mrb[0].mxu0
    %v3920 = vpop.f32.mrb[0].mxu0
    %v3921 = vpop.f32.mrb[0].mxu0
    %3922 = vdwg.mxu0
    %3923 = vmatprep.subr.bf16.mxu0 0
    %3924 = vmatpush1.bf16.msra.mxu0 %v819
    %3925 = vmatprep.subr.bf16.mxu0 0
    %3926 = vmatpush1.bf16.msra.mxu0 %v820
    %3927 = vmatprep.subr.bf16.mxu0 0
    %3928 = vmatpush1.bf16.msra.mxu0 %v821
    %3929 = vmatprep.subr.bf16.mxu0 0
    %3930 = vmatpush1.bf16.msra.mxu0 %v822
    %3931 = vmatprep.subr.bf16.mxu0 0
    %3932 = vmatpush1.bf16.msra.mxu0 %v823
    %3933 = vmatprep.subr.bf16.mxu0 0
    %3934 = vmatpush1.bf16.msra.mxu0 %v824
    %3935 = vmatprep.subr.bf16.mxu0 0
    %3936 = vmatpush1.bf16.msra.mxu0 %v825
    %3937 = vmatprep.subr.bf16.mxu0 0
    %3938 = vmatpush1.bf16.msra.mxu0 %v826
    %3939 = vmatprep.subr.bf16.mxu0 0
    %3940 = vmatpush1.bf16.msra.mxu0 %v827
    %3941 = vmatprep.subr.bf16.mxu0 0
    %3942 = vmatpush1.bf16.msra.mxu0 %v828
    %3943 = vmatprep.subr.bf16.mxu0 0
    %3944 = vmatpush1.bf16.msra.mxu0 %v829
    %3945 = vmatprep.subr.bf16.mxu0 0
    %3946 = vmatpush1.bf16.msra.mxu0 %v830
    %3947 = vmatprep.subr.bf16.mxu0 0
    %3948 = vmatpush1.bf16.msra.mxu0 %v831
    %3949 = vmatprep.subr.bf16.mxu0 0
    %3950 = vmatpush1.bf16.msra.mxu0 %v832
    %3951 = vmatprep.subr.bf16.mxu0 0
    %3952 = vmatpush1.bf16.msra.mxu0 %v833
    %3953 = vmatprep.subr.bf16.mxu0 0
    %3954 = vmatpush1.bf16.msra.mxu0 %v834
    %3955 = vmatprep.mubr.bf16.mxu0 %v3500
    %3956 = vmatmul.mubr.bf16.gmra.mrb[0].mxu0 %v3499
    %v3957 = vpop.f32.mrb[0].mxu0
    %v3958 = vadd.f32 %v3822, %v3957
    %v3959 = vpop.f32.mrb[0].mxu0
    %v3960 = vpop.f32.mrb[0].mxu0
    %v3961 = vadd.f32 %v3825, %v3960
    %v3962 = vpop.f32.mrb[0].mxu0
    %3963 = vmatprep.mubr.bf16.mxu0 %v3506
    %3964 = vmatmul.mubr.bf16.gmra.mrb[0].mxu0 %v3505
    %v3965 = vpop.f32.mrb[0].mxu0
    %v3966 = vadd.f32 %v3830, %v3965
    %v3967 = vpop.f32.mrb[0].mxu0
    %v3968 = vpop.f32.mrb[0].mxu0
    %v3969 = vadd.f32 %v3833, %v3968
    %v3970 = vpop.f32.mrb[0].mxu0
    %3971 = vmatprep.mubr.bf16.mxu0 %v3512
    %3972 = vmatmul.mubr.bf16.gmra.mrb[0].mxu0 %v3511
    %v3973 = vpop.f32.mrb[0].mxu0
    %v3974 = vadd.f32 %v3838, %v3973
    %v3975 = vpop.f32.mrb[0].mxu0
    %v3976 = vpop.f32.mrb[0].mxu0
    %v3977 = vadd.f32 %v3841, %v3976
    %v3978 = vpop.f32.mrb[0].mxu0
    %3979 = vmatprep.mubr.bf16.mxu0 %v3518
    %3980 = vmatmul.mubr.bf16.gmra.mrb[0].mxu0 %v3517
    %v3981 = vpop.f32.mrb[0].mxu0
    %v3982 = vadd.f32 %v3846, %v3981
    %v3983 = vpop.f32.mrb[0].mxu0
    %v3984 = vpop.f32.mrb[0].mxu0
    %v3985 = vadd.f32 %v3849, %v3984
    %v3986 = vpop.f32.mrb[0].mxu0
    %3987 = vmatprep.mubr.bf16.mxu0 %v3524
    %3988 = vmatmul.mubr.bf16.gmra.mrb[0].mxu0 %v3523
    %v3989 = vpop.f32.mrb[0].mxu0
    %v3990 = vadd.f32 %v3854, %v3989
    %v3991 = vpop.f32.mrb[0].mxu0
    %v3992 = vpop.f32.mrb[0].mxu0
    %v3993 = vadd.f32 %v3857, %v3992
    %v3994 = vpop.f32.mrb[0].mxu0
    %3995 = vmatprep.mubr.bf16.mxu0 %v3530
    %3996 = vmatmul.mubr.bf16.gmra.mrb[0].mxu0 %v3529
    %v3997 = vpop.f32.mrb[0].mxu0
    %v3998 = vadd.f32 %v3862, %v3997
    %v3999 = vpop.f32.mrb[0].mxu0
    %v4000 = vpop.f32.mrb[0].mxu0
    %v4001 = vadd.f32 %v3865, %v4000
    %v4002 = vpop.f32.mrb[0].mxu0
    %4003 = vmatprep.mubr.bf16.mxu0 %v3536
    %4004 = vmatmul.mubr.bf16.gmra.mrb[0].mxu0 %v3535
    %v4005 = vpop.f32.mrb[0].mxu0
    %v4006 = vadd.f32 %v3870, %v4005
    %v4007 = vpop.f32.mrb[0].mxu0
    %v4008 = vpop.f32.mrb[0].mxu0
    %v4009 = vadd.f32 %v3873, %v4008
    %v4010 = vpop.f32.mrb[0].mxu0
    %4011 = vmatprep.mubr.bf16.mxu0 %v3542
    %4012 = vmatmul.mubr.bf16.gmra.mrb[0].mxu0 %v3541
    %v4013 = vpop.f32.mrb[0].mxu0
    %v4014 = vadd.f32 %v3878, %v4013
    %v4015 = vpop.f32.mrb[0].mxu0
    %v4016 = vpop.f32.mrb[0].mxu0
    %v4017 = vadd.f32 %v3881, %v4016
    %v4018 = vpop.f32.mrb[0].mxu0
    %4019 = vmatprep.mubr.bf16.mxu0 %v3548
    %4020 = vmatmul.mubr.bf16.gmra.mrb[0].mxu0 %v3547
    %v4021 = vpop.f32.mrb[0].mxu0
    %v4022 = vadd.f32 %v3886, %v4021
    %v4023 = vpop.f32.mrb[0].mxu0
    %v4024 = vpop.f32.mrb[0].mxu0
    %v4025 = vadd.f32 %v3889, %v4024
    %v4026 = vpop.f32.mrb[0].mxu0
    %4027 = vmatprep.mubr.bf16.mxu0 %v3554
    %4028 = vmatmul.mubr.bf16.gmra.mrb[0].mxu0 %v3553
    %v4029 = vpop.f32.mrb[0].mxu0
    %v4030 = vadd.f32 %v3894, %v4029
    %v4031 = vpop.f32.mrb[0].mxu0
    %v4032 = vpop.f32.mrb[0].mxu0
    %v4033 = vadd.f32 %v3897, %v4032
    %v4034 = vpop.f32.mrb[0].mxu0
    %4035 = vmatprep.mubr.bf16.mxu0 %v3560
    %4036 = vmatmul.mubr.bf16.gmra.mrb[0].mxu0 %v3559
    %v4037 = vpop.f32.mrb[0].mxu0
    %v4038 = vadd.f32 %v3902, %v4037
    %v4039 = vpop.f32.mrb[0].mxu0
    %v4040 = vpop.f32.mrb[0].mxu0
    %v4041 = vadd.f32 %v3905, %v4040
    %v4042 = vpop.f32.mrb[0].mxu0
    %4043 = vmatprep.mubr.bf16.mxu0 %v3566
    %4044 = vmatmul.mubr.bf16.gmra.mrb[0].mxu0 %v3565
    %v4045 = vpop.f32.mrb[0].mxu0
    %v4046 = vadd.f32 %v3910, %v4045
    %v4047 = vpop.f32.mrb[0].mxu0
    %v4048 = vpop.f32.mrb[0].mxu0
    %v4049 = vadd.f32 %v3913, %v4048
    %v4050 = vpop.f32.mrb[0].mxu0
    %4051 = vmatprep.mubr.bf16.mxu0 %v3572
    %4052 = vmatmul.mubr.bf16.gmra.mrb[0].mxu0 %v3571
    %v4053 = vpop.f32.mrb[0].mxu0
    %v4054 = vadd.f32 %v3918, %v4053
    %v4055 = vpop.f32.mrb[0].mxu0
    %v4056 = vpop.f32.mrb[0].mxu0
    %v4057 = vpop.f32.mrb[0].mxu0
    %4058 = vdwg.mxu0
    %v4059 = vmax.f32 %v3958, 0.0
    %v4060 = vmax.f32 %v3961, 0.0
    %v4061 = vmax.f32 %v3966, 0.0
    %v4062 = vmax.f32 %v3969, 0.0
    %v4063 = vmax.f32 %v3974, 0.0
    %v4064 = vmax.f32 %v3977, 0.0
    %v4065 = vmax.f32 %v3982, 0.0
    %v4066 = vmax.f32 %v3985, 0.0
    %v4067 = vmax.f32 %v3990, 0.0
    %v4068 = vmax.f32 %v3993, 0.0
    %v4069 = vmax.f32 %v3998, 0.0
    %v4070 = vmax.f32 %v4001, 0.0
    %v4071 = vmax.f32 %v4006, 0.0
    %v4072 = vmax.f32 %v4009, 0.0
    %v4073 = vmax.f32 %v4014, 0.0
    %v4074 = vmax.f32 %v4017, 0.0
    %v4075 = vmax.f32 %v4022, 0.0
    %v4076 = vmax.f32 %v4025, 0.0
    %v4077 = vmax.f32 %v4030, 0.0
    %v4078 = vmax.f32 %v4033, 0.0
    %v4079 = vmax.f32 %v4038, 0.0
    %v4080 = vmax.f32 %v4041, 0.0
    %v4081 = vmax.f32 %v4046, 0.0
    %v4082 = vmax.f32 %v4049, 0.0
    %v4083 = vmax.f32 %v4054, 0.0
    %v4084 = vadd.f32 %v4059, %v4060
    %v4085 = vadd.f32 %v4084, %v4061
    %v4086 = vadd.f32 %v4085, %v4062
    %v4087 = vadd.f32 %v4086, %v4063
    %v4088 = vadd.f32 %v4087, %v4064
    %v4089 = vadd.f32 %v4088, %v4065
    %v4090 = vadd.f32 %v4089, %v4066
    %v4091 = vadd.f32 %v4090, %v4067
    %v4092 = vadd.f32 %v4091, %v4068
    %v4093 = vadd.f32 %v4092, %v4069
    %v4094 = vadd.f32 %v4093, %v4070
    %v4095 = vadd.f32 %v4094, %v4071
    %v4096 = vadd.f32 %v4095, %v4072
    %v4097 = vadd.f32 %v4096, %v4073
    %v4098 = vadd.f32 %v4097, %v4074
    %v4099 = vadd.f32 %v4098, %v4075
    %v4100 = vadd.f32 %v4099, %v4076
    %v4101 = vadd.f32 %v4100, %v4077
    %v4102 = vadd.f32 %v4101, %v4078
    %v4103 = vadd.f32 %v4102, %v4079
    %v4104 = vadd.f32 %v4103, %v4080
    %v4105 = vadd.f32 %v4104, %v4081
    %v4106 = vadd.f32 %v4105, %v4082
    %v4107 = vsel %vm1339, %v4083, 0.0
    %v4108 = vadd.f32 %v4106, %v4107
    %v4109 = vrot.slane %v4108, 4
    %v4110 = vadd.f32 %v4108, %v4109
    %v4111 = vrot.slane %v4110, 2
    %v4112 = vadd.f32 %v4110, %v4111
    %v4113 = vrot.slane %v4112, 1
    %v4114 = vadd.f32 %v4112, %v4113
    %v4115 = vmul.f32 %v4114, %v1348
    %vm4116 = vcmask 1040384
    %v4117 = vsel %vm4116, %v1349, %v2271
    %vm4118 = vcmask 1041408
    %v4119 = vsel %vm4118, %v4117, %v3193
    %vm4120 = vcmask 1042432
    %v4121 = vsel %vm4120, %v4119, %v4115
    %v4122 = vld [vmem:[%s3] sm:$0xff]
    %v4123 = vld [vmem:[%s3 + $0x8] sm:$0xff]
    %v4124 = vld [vmem:[%s3 + $0x10] sm:$0xff]
    %v4125 = vld [vmem:[%s3 + $0x18] sm:$0xff]
    %v4126 = vld [vmem:[%s3 + $0x20] sm:$0xff]
    %v4127 = vld [vmem:[%s3 + $0x28] sm:$0xff]
    %v4128 = vld [vmem:[%s3 + $0x30] sm:$0xff]
    %v4129 = vld [vmem:[%s3 + $0x38] sm:$0xff]
    %v4130 = vld [vmem:[%s3 + $0x40] sm:$0xff]
    %v4131 = vld [vmem:[%s3 + $0x48] sm:$0xff]
    %v4132 = vld [vmem:[%s3 + $0x50] sm:$0xff]
    %v4133 = vld [vmem:[%s3 + $0x58] sm:$0xff]
    %v4134 = vld [vmem:[%s3 + $0x60] sm:$0xff]
    %v4135 = vld [vmem:[%s3 + $0x68] sm:$0xff]
    %v4136 = vld [vmem:[%s3 + $0x70] sm:$0xff]
    %v4137 = vld [vmem:[%s3 + $0x78] sm:$0xff]
    %v4138 = vld [vmem:[%s4] sm:$0x1]
    %v4140 = vlaneseq
    %v4141 = vshrl.u32 %v4140, 7
    %v4142 = vsub.s32 0, %v4141
    %v4143 = vrot.slane %v4138, %v4142
    %4145 = vmatprep.subr.mxu0 0.0
    %4146 = vmatpush1.msra.mxu0 %v4122
    %4147 = vmatprep.subr.mxu0 0.0
    %4148 = vmatpush1.msra.mxu0 %v4123
    %4149 = vmatprep.subr.mxu0 0.0
    %4150 = vmatpush1.msra.mxu0 %v4124
    %4151 = vmatprep.subr.mxu0 0.0
    %4152 = vmatpush1.msra.mxu0 %v4125
    %4153 = vmatprep.subr.mxu0 0.0
    %4154 = vmatpush1.msra.mxu0 %v4126
    %4155 = vmatprep.subr.mxu0 0.0
    %4156 = vmatpush1.msra.mxu0 %v4127
    %4157 = vmatprep.subr.mxu0 0.0
    %4158 = vmatpush1.msra.mxu0 %v4128
    %4159 = vmatprep.subr.mxu0 0.0
    %4160 = vmatpush1.msra.mxu0 %v4129
    %4161 = vmatprep.subr.mxu0 0.0
    %4162 = vmatpush1.msra.mxu0 %v4130
    %4163 = vmatprep.subr.mxu0 0.0
    %4164 = vmatpush1.msra.mxu0 %v4131
    %4165 = vmatprep.subr.mxu0 0.0
    %4166 = vmatpush1.msra.mxu0 %v4132
    %4167 = vmatprep.subr.mxu0 0.0
    %4168 = vmatpush1.msra.mxu0 %v4133
    %4169 = vmatprep.subr.mxu0 0.0
    %4170 = vmatpush1.msra.mxu0 %v4134
    %4171 = vmatprep.subr.mxu0 0.0
    %4172 = vmatpush1.msra.mxu0 %v4135
    %4173 = vmatprep.subr.mxu0 0.0
    %4174 = vmatpush1.msra.mxu0 %v4136
    %4175 = vmatprep.subr.mxu0 0.0
    %4176 = vmatpush1.msra.mxu0 %v4137
    %4177 = vmatprep.subr.mxu0 0.0
    %4178 = vmatpush1.msra.mxu0 0.0
    %4179 = vmatprep.subr.mxu0 0.0
    %4180 = vmatpush1.msra.mxu0 0.0
    %4181 = vmatprep.subr.mxu0 0.0
    %4182 = vmatpush1.msra.mxu0 0.0
    %4183 = vmatprep.subr.mxu0 0.0
    %4184 = vmatpush1.msra.mxu0 0.0
    %4185 = vmatprep.subr.mxu0 0.0
    %4186 = vmatpush1.msra.mxu0 0.0
    %4187 = vmatprep.subr.mxu0 0.0
    %4188 = vmatpush1.msra.mxu0 0.0
    %4189 = vmatprep.subr.mxu0 0.0
    %4190 = vmatpush1.msra.mxu0 0.0
    %4191 = vmatprep.subr.mxu0 0.0
    %4192 = vmatpush1.msra.mxu0 0.0
    %4193 = vmatprep.subr.mxu0 0.0
    %4194 = vmatpush1.msra.mxu0 0.0
    %4195 = vmatprep.subr.mxu0 0.0
    %4196 = vmatpush1.msra.mxu0 0.0
    %4197 = vmatprep.subr.mxu0 0.0
    %4198 = vmatpush1.msra.mxu0 0.0
    %4199 = vmatprep.subr.mxu0 0.0
    %4200 = vmatpush1.msra.mxu0 0.0
    %4201 = vmatprep.subr.mxu0 0.0
    %4202 = vmatpush1.msra.mxu0 0.0
    %4203 = vmatprep.subr.mxu0 0.0
    %4204 = vmatpush1.msra.mxu0 0.0
    %4205 = vmatprep.subr.mxu0 0.0
    %4206 = vmatpush1.msra.mxu0 0.0
    %4207 = vmatprep.subr.mxu0 0.0
    %4208 = vmatpush1.msra.mxu0 0.0
    %4209 = vmatprep.mubr.f32.mxu0 0.0
    %4210 = vmatmul.mubr.f32.gmra.mrb[0].mxu0 %v4121
    %v4211 = vpop.f32.mrb[0].mxu0
    %v4212 = vadd.f32 %v4143, %v4211
    %v4213 = vpop.f32.mrb[0].mxu0
    %4214 = vdwg.mxu0
    %4215 = vst [vmem:[#allocation2] sm:$0xf] %v4212
    %v4216 = vld [vmem:[%s5] sm:$0xff]
    %v4217 = vld [vmem:[%s5 + $0x8] sm:$0xff]
    %v4218 = vld [vmem:[%s5 + $0x10] sm:$0xff]
    %v4219 = vld [vmem:[%s5 + $0x18] sm:$0xff]
    %v4220 = vld [vmem:[%s5 + $0x20] sm:$0xff]
    %v4221 = vld [vmem:[%s5 + $0x28] sm:$0xff]
    %v4222 = vld [vmem:[%s5 + $0x30] sm:$0xff]
    %v4223 = vld [vmem:[%s5 + $0x38] sm:$0xff]
    %v4224 = vld [vmem:[%s5 + $0x40] sm:$0xff]
    %v4225 = vld [vmem:[%s5 + $0x48] sm:$0xff]
    %v4226 = vld [vmem:[%s5 + $0x50] sm:$0xff]
    %v4227 = vld [vmem:[%s5 + $0x58] sm:$0xff]
    %v4228 = vld [vmem:[%s5 + $0x60] sm:$0xff]
    %v4229 = vld [vmem:[%s5 + $0x68] sm:$0xff]
    %v4230 = vld [vmem:[%s5 + $0x70] sm:$0xff]
    %v4231 = vld [vmem:[%s5 + $0x78] sm:$0xff]
    %v4232 = vld [vmem:[%s5 + $0x80] sm:$0xff]
    %v4233 = vld [vmem:[%s5 + $0x88] sm:$0xff]
    %v4234 = vld [vmem:[%s5 + $0x90] sm:$0xff]
    %v4235 = vld [vmem:[%s5 + $0x98] sm:$0xff]
    %v4236 = vld [vmem:[%s5 + $0xa0] sm:$0xff]
    %v4237 = vld [vmem:[%s5 + $0xa8] sm:$0xff]
    %v4238 = vld [vmem:[%s5 + $0xb0] sm:$0xff]
    %v4239 = vld [vmem:[%s5 + $0xb8] sm:$0xff]
    %v4240 = vld [vmem:[%s5 + $0xc0] sm:$0xff]
    %v4241 = vld [vmem:[%s5 + $0xc8] sm:$0xff]
    %v4242 = vld [vmem:[%s5 + $0xd0] sm:$0xff]
    %v4243 = vld [vmem:[%s5 + $0xd8] sm:$0xff]
    %v4244 = vld [vmem:[%s5 + $0xe0] sm:$0xff]
    %v4245 = vld [vmem:[%s5 + $0xe8] sm:$0xff]
    %v4246 = vld [vmem:[%s5 + $0xf0] sm:$0xff]
    %v4247 = vld [vmem:[%s5 + $0xf8] sm:$0xff]
    %v4248 = vld [vmem:[%s6] sm:$0x3]
    %v4250 = vlaneseq
    %v4251 = vshrl.u32 %v4250, 7
    %v4252 = vsub.s32 0, %v4251
    %v4253 = vrot.slane %v4248, %v4252
    %v4254 = vlaneseq
    %v4255 = vshrl.u32 %v4254, 7
    %v4256 = vsub.s32 1, %v4255
    %v4257 = vrot.slane %v4248, %v4256
    %4260 = vmatprep.subr.mxu0 %v4217
    %4261 = vmatpush1.msra.mxu0 %v4216
    %4262 = vmatprep.subr.mxu0 %v4219
    %4263 = vmatpush1.msra.mxu0 %v4218
    %4264 = vmatprep.subr.mxu0 %v4221
    %4265 = vmatpush1.msra.mxu0 %v4220
    %4266 = vmatprep.subr.mxu0 %v4223
    %4267 = vmatpush1.msra.mxu0 %v4222
    %4268 = vmatprep.subr.mxu0 %v4225
    %4269 = vmatpush1.msra.mxu0 %v4224
    %4270 = vmatprep.subr.mxu0 %v4227
    %4271 = vmatpush1.msra.mxu0 %v4226
    %4272 = vmatprep.subr.mxu0 %v4229
    %4273 = vmatpush1.msra.mxu0 %v4228
    %4274 = vmatprep.subr.mxu0 %v4231
    %4275 = vmatpush1.msra.mxu0 %v4230
    %4276 = vmatprep.subr.mxu0 %v4233
    %4277 = vmatpush1.msra.mxu0 %v4232
    %4278 = vmatprep.subr.mxu0 %v4235
    %4279 = vmatpush1.msra.mxu0 %v4234
    %4280 = vmatprep.subr.mxu0 %v4237
    %4281 = vmatpush1.msra.mxu0 %v4236
    %4282 = vmatprep.subr.mxu0 %v4239
    %4283 = vmatpush1.msra.mxu0 %v4238
    %4284 = vmatprep.subr.mxu0 %v4241
    %4285 = vmatpush1.msra.mxu0 %v4240
    %4286 = vmatprep.subr.mxu0 %v4243
    %4287 = vmatpush1.msra.mxu0 %v4242
    %4288 = vmatprep.subr.mxu0 %v4245
    %4289 = vmatpush1.msra.mxu0 %v4244
    %4290 = vmatprep.subr.mxu0 %v4247
    %4291 = vmatpush1.msra.mxu0 %v4246
    %4292 = vmatprep.subr.mxu0 0.0
    %4293 = vmatpush1.msra.mxu0 0.0
    %4294 = vmatprep.subr.mxu0 0.0
    %4295 = vmatpush1.msra.mxu0 0.0
    %4296 = vmatprep.subr.mxu0 0.0
    %4297 = vmatpush1.msra.mxu0 0.0
    %4298 = vmatprep.subr.mxu0 0.0
    %4299 = vmatpush1.msra.mxu0 0.0
    %4300 = vmatprep.subr.mxu0 0.0
    %4301 = vmatpush1.msra.mxu0 0.0
    %4302 = vmatprep.subr.mxu0 0.0
    %4303 = vmatpush1.msra.mxu0 0.0
    %4304 = vmatprep.subr.mxu0 0.0
    %4305 = vmatpush1.msra.mxu0 0.0
    %4306 = vmatprep.subr.mxu0 0.0
    %4307 = vmatpush1.msra.mxu0 0.0
    %4308 = vmatprep.subr.mxu0 0.0
    %4309 = vmatpush1.msra.mxu0 0.0
    %4310 = vmatprep.subr.mxu0 0.0
    %4311 = vmatpush1.msra.mxu0 0.0
    %4312 = vmatprep.subr.mxu0 0.0
    %4313 = vmatpush1.msra.mxu0 0.0
    %4314 = vmatprep.subr.mxu0 0.0
    %4315 = vmatpush1.msra.mxu0 0.0
    %4316 = vmatprep.subr.mxu0 0.0
    %4317 = vmatpush1.msra.mxu0 0.0
    %4318 = vmatprep.subr.mxu0 0.0
    %4319 = vmatpush1.msra.mxu0 0.0
    %4320 = vmatprep.subr.mxu0 0.0
    %4321 = vmatpush1.msra.mxu0 0.0
    %4322 = vmatprep.subr.mxu0 0.0
    %4323 = vmatpush1.msra.mxu0 0.0
    %4324 = vmatprep.mubr.f32.mxu0 0.0
    %4325 = vmatmul.mubr.f32.gmra.mrb[0].mxu0 %v4212
    %v4326 = vpop.f32.mrb[0].mxu0
    %v4327 = vadd.f32 %v4253, %v4326
    %v4328 = vpop.f32.mrb[0].mxu0
    %v4329 = vadd.f32 %v4257, %v4328
    %4330 = vdwg.mxu0
    %v4331 = vmax.f32 %v4327, 0.0
    %v4332 = vmax.f32 %v4329, 0.0
    %v4333 = vld [vmem:[%s7] sm:$0xff]
    %v4334 = vld [vmem:[%s7 + $0x8] sm:$0xff]
    %v4335 = vld [vmem:[%s7 + $0x10] sm:$0xff]
    %v4336 = vld [vmem:[%s7 + $0x18] sm:$0xff]
    %v4337 = vld [vmem:[%s7 + $0x20] sm:$0xff]
    %v4338 = vld [vmem:[%s7 + $0x28] sm:$0xff]
    %v4339 = vld [vmem:[%s7 + $0x30] sm:$0xff]
    %v4340 = vld [vmem:[%s7 + $0x38] sm:$0xff]
    %v4341 = vld [vmem:[%s7 + $0x40] sm:$0xff]
    %v4342 = vld [vmem:[%s7 + $0x48] sm:$0xff]
    %v4343 = vld [vmem:[%s7 + $0x50] sm:$0xff]
    %v4344 = vld [vmem:[%s7 + $0x58] sm:$0xff]
    %v4345 = vld [vmem:[%s7 + $0x60] sm:$0xff]
    %v4346 = vld [vmem:[%s7 + $0x68] sm:$0xff]
    %v4347 = vld [vmem:[%s7 + $0x70] sm:$0xff]
    %v4348 = vld [vmem:[%s7 + $0x78] sm:$0xff]
    %v4349 = vld [vmem:[%s7 + $0x80] sm:$0xff]
    %v4350 = vld [vmem:[%s7 + $0x88] sm:$0xff]
    %v4351 = vld [vmem:[%s7 + $0x90] sm:$0xff]
    %v4352 = vld [vmem:[%s7 + $0x98] sm:$0xff]
    %v4353 = vld [vmem:[%s7 + $0xa0] sm:$0xff]
    %v4354 = vld [vmem:[%s7 + $0xa8] sm:$0xff]
    %v4355 = vld [vmem:[%s7 + $0xb0] sm:$0xff]
    %v4356 = vld [vmem:[%s7 + $0xb8] sm:$0xff]
    %v4357 = vld [vmem:[%s7 + $0xc0] sm:$0xff]
    %v4358 = vld [vmem:[%s7 + $0xc8] sm:$0xff]
    %v4359 = vld [vmem:[%s7 + $0xd0] sm:$0xff]
    %v4360 = vld [vmem:[%s7 + $0xd8] sm:$0xff]
    %v4361 = vld [vmem:[%s7 + $0xe0] sm:$0xff]
    %v4362 = vld [vmem:[%s7 + $0xe8] sm:$0xff]
    %v4363 = vld [vmem:[%s7 + $0xf0] sm:$0xff]
    %v4364 = vld [vmem:[%s7 + $0xf8] sm:$0xff]
    %v4365 = vld [vmem:[%s7 + $0x100] sm:$0xff]
    %v4366 = vld [vmem:[%s7 + $0x108] sm:$0xff]
    %v4367 = vld [vmem:[%s7 + $0x110] sm:$0xff]
    %v4368 = vld [vmem:[%s7 + $0x118] sm:$0xff]
    %v4369 = vld [vmem:[%s7 + $0x120] sm:$0xff]
    %v4370 = vld [vmem:[%s7 + $0x128] sm:$0xff]
    %v4371 = vld [vmem:[%s7 + $0x130] sm:$0xff]
    %v4372 = vld [vmem:[%s7 + $0x138] sm:$0xff]
    %v4373 = vld [vmem:[%s7 + $0x140] sm:$0xff]
    %v4374 = vld [vmem:[%s7 + $0x148] sm:$0xff]
    %v4375 = vld [vmem:[%s7 + $0x150] sm:$0xff]
    %v4376 = vld [vmem:[%s7 + $0x158] sm:$0xff]
    %v4377 = vld [vmem:[%s7 + $0x160] sm:$0xff]
    %v4378 = vld [vmem:[%s7 + $0x168] sm:$0xff]
    %v4379 = vld [vmem:[%s7 + $0x170] sm:$0xff]
    %v4380 = vld [vmem:[%s7 + $0x178] sm:$0xff]
    %v4381 = vld [vmem:[%s7 + $0x180] sm:$0xff]
    %v4382 = vld [vmem:[%s7 + $0x188] sm:$0xff]
    %v4383 = vld [vmem:[%s7 + $0x190] sm:$0xff]
    %v4384 = vld [vmem:[%s7 + $0x198] sm:$0xff]
    %v4385 = vld [vmem:[%s7 + $0x1a0] sm:$0xff]
    %v4386 = vld [vmem:[%s7 + $0x1a8] sm:$0xff]
    %v4387 = vld [vmem:[%s7 + $0x1b0] sm:$0xff]
    %v4388 = vld [vmem:[%s7 + $0x1b8] sm:$0xff]
    %v4389 = vld [vmem:[%s7 + $0x1c0] sm:$0xff]
    %v4390 = vld [vmem:[%s7 + $0x1c8] sm:$0xff]
    %v4391 = vld [vmem:[%s7 + $0x1d0] sm:$0xff]
    %v4392 = vld [vmem:[%s7 + $0x1d8] sm:$0xff]
    %v4393 = vld [vmem:[%s7 + $0x1e0] sm:$0xff]
    %v4394 = vld [vmem:[%s7 + $0x1e8] sm:$0xff]
    %v4395 = vld [vmem:[%s7 + $0x1f0] sm:$0xff]
    %v4396 = vld [vmem:[%s7 + $0x1f8] sm:$0xff]
    %v4397 = vld [vmem:[%s7 + $0x200] sm:$0xff]
    %v4398 = vld [vmem:[%s7 + $0x208] sm:$0xff]
    %v4399 = vld [vmem:[%s7 + $0x210] sm:$0xff]
    %v4400 = vld [vmem:[%s7 + $0x218] sm:$0xff]
    %v4401 = vld [vmem:[%s7 + $0x220] sm:$0xff]
    %v4402 = vld [vmem:[%s7 + $0x228] sm:$0xff]
    %v4403 = vld [vmem:[%s7 + $0x230] sm:$0xff]
    %v4404 = vld [vmem:[%s7 + $0x238] sm:$0xff]
    %v4405 = vld [vmem:[%s7 + $0x240] sm:$0xff]
    %v4406 = vld [vmem:[%s7 + $0x248] sm:$0xff]
    %v4407 = vld [vmem:[%s7 + $0x250] sm:$0xff]
    %v4408 = vld [vmem:[%s7 + $0x258] sm:$0xff]
    %v4409 = vld [vmem:[%s7 + $0x260] sm:$0xff]
    %v4410 = vld [vmem:[%s7 + $0x268] sm:$0xff]
    %v4411 = vld [vmem:[%s7 + $0x270] sm:$0xff]
    %v4412 = vld [vmem:[%s7 + $0x278] sm:$0xff]
    %v4413 = vld [vmem:[%s7 + $0x280] sm:$0xff]
    %v4414 = vld [vmem:[%s7 + $0x288] sm:$0xff]
    %v4415 = vld [vmem:[%s7 + $0x290] sm:$0xff]
    %v4416 = vld [vmem:[%s7 + $0x298] sm:$0xff]
    %v4417 = vld [vmem:[%s7 + $0x2a0] sm:$0xff]
    %v4418 = vld [vmem:[%s7 + $0x2a8] sm:$0xff]
    %v4419 = vld [vmem:[%s7 + $0x2b0] sm:$0xff]
    %v4420 = vld [vmem:[%s7 + $0x2b8] sm:$0xff]
    %v4421 = vld [vmem:[%s7 + $0x2c0] sm:$0xff]
    %v4422 = vld [vmem:[%s7 + $0x2c8] sm:$0xff]
    %v4423 = vld [vmem:[%s7 + $0x2d0] sm:$0xff]
    %v4424 = vld [vmem:[%s7 + $0x2d8] sm:$0xff]
    %v4425 = vld [vmem:[%s7 + $0x2e0] sm:$0xff]
    %v4426 = vld [vmem:[%s7 + $0x2e8] sm:$0xff]
    %v4427 = vld [vmem:[%s7 + $0x2f0] sm:$0xff]
    %v4428 = vld [vmem:[%s7 + $0x2f8] sm:$0xff]
    %v4429 = vld [vmem:[%s7 + $0x300] sm:$0xff]
    %v4430 = vld [vmem:[%s7 + $0x308] sm:$0xff]
    %v4431 = vld [vmem:[%s7 + $0x310] sm:$0xff]
    %v4432 = vld [vmem:[%s7 + $0x318] sm:$0xff]
    %v4433 = vld [vmem:[%s7 + $0x320] sm:$0xff]
    %v4434 = vld [vmem:[%s7 + $0x328] sm:$0xff]
    %v4435 = vld [vmem:[%s7 + $0x330] sm:$0xff]
    %v4436 = vld [vmem:[%s7 + $0x338] sm:$0xff]
    %v4437 = vld [vmem:[%s7 + $0x340] sm:$0xff]
    %v4438 = vld [vmem:[%s7 + $0x348] sm:$0xff]
    %v4439 = vld [vmem:[%s7 + $0x350] sm:$0xff]
    %v4440 = vld [vmem:[%s7 + $0x358] sm:$0xff]
    %v4441 = vld [vmem:[%s7 + $0x360] sm:$0xff]
    %v4442 = vld [vmem:[%s7 + $0x368] sm:$0xff]
    %v4443 = vld [vmem:[%s7 + $0x370] sm:$0xff]
    %v4444 = vld [vmem:[%s7 + $0x378] sm:$0xff]
    %v4445 = vld [vmem:[%s7 + $0x380] sm:$0xff]
    %v4446 = vld [vmem:[%s7 + $0x388] sm:$0xff]
    %v4447 = vld [vmem:[%s7 + $0x390] sm:$0xff]
    %v4448 = vld [vmem:[%s7 + $0x398] sm:$0xff]
    %v4449 = vld [vmem:[%s7 + $0x3a0] sm:$0xff]
    %v4450 = vld [vmem:[%s7 + $0x3a8] sm:$0xff]
    %v4451 = vld [vmem:[%s7 + $0x3b0] sm:$0xff]
    %v4452 = vld [vmem:[%s7 + $0x3b8] sm:$0xff]
    %v4453 = vld [vmem:[%s7 + $0x3c0] sm:$0xff]
    %v4454 = vld [vmem:[%s7 + $0x3c8] sm:$0xff]
    %v4455 = vld [vmem:[%s7 + $0x3d0] sm:$0xff]
    %v4456 = vld [vmem:[%s7 + $0x3d8] sm:$0xff]
    %v4457 = vld [vmem:[%s7 + $0x3e0] sm:$0xff]
    %v4458 = vld [vmem:[%s7 + $0x3e8] sm:$0xff]
    %v4459 = vld [vmem:[%s7 + $0x3f0] sm:$0xff]
    %v4460 = vld [vmem:[%s7 + $0x3f8] sm:$0xff]
    %v4461 = vld [vmem:[%s7 + $0x400] sm:$0xff]
    %v4462 = vld [vmem:[%s7 + $0x408] sm:$0xff]
    %v4463 = vld [vmem:[%s7 + $0x410] sm:$0xff]
    %v4464 = vld [vmem:[%s7 + $0x418] sm:$0xff]
    %v4465 = vld [vmem:[%s7 + $0x420] sm:$0xff]
    %v4466 = vld [vmem:[%s7 + $0x428] sm:$0xff]
    %v4467 = vld [vmem:[%s7 + $0x430] sm:$0xff]
    %v4468 = vld [vmem:[%s7 + $0x438] sm:$0xff]
    %v4469 = vld [vmem:[%s7 + $0x440] sm:$0xff]
    %v4470 = vld [vmem:[%s7 + $0x448] sm:$0xff]
    %v4471 = vld [vmem:[%s7 + $0x450] sm:$0xff]
    %v4472 = vld [vmem:[%s7 + $0x458] sm:$0xff]
    %v4473 = vld [vmem:[%s7 + $0x460] sm:$0xff]
    %v4474 = vld [vmem:[%s7 + $0x468] sm:$0xff]
    %v4475 = vld [vmem:[%s7 + $0x470] sm:$0xff]
    %v4476 = vld [vmem:[%s7 + $0x478] sm:$0xff]
    %v4477 = vld [vmem:[%s7 + $0x480] sm:$0xff]
    %v4478 = vld [vmem:[%s7 + $0x488] sm:$0xff]
    %v4479 = vld [vmem:[%s7 + $0x490] sm:$0xff]
    %v4480 = vld [vmem:[%s7 + $0x498] sm:$0xff]
    %v4481 = vld [vmem:[%s7 + $0x4a0] sm:$0xff]
    %v4482 = vld [vmem:[%s7 + $0x4a8] sm:$0xff]
    %v4483 = vld [vmem:[%s7 + $0x4b0] sm:$0xff]
    %v4484 = vld [vmem:[%s7 + $0x4b8] sm:$0xff]
    %v4485 = vld [vmem:[%s7 + $0x4c0] sm:$0xff]
    %v4486 = vld [vmem:[%s7 + $0x4c8] sm:$0xff]
    %v4487 = vld [vmem:[%s7 + $0x4d0] sm:$0xff]
    %v4488 = vld [vmem:[%s7 + $0x4d8] sm:$0xff]
    %v4489 = vld [vmem:[%s7 + $0x4e0] sm:$0xff]
    %v4490 = vld [vmem:[%s7 + $0x4e8] sm:$0xff]
    %v4491 = vld [vmem:[%s7 + $0x4f0] sm:$0xff]
    %v4492 = vld [vmem:[%s7 + $0x4f8] sm:$0xff]
    %v4493 = vld [vmem:[%s7 + $0x500] sm:$0xff]
    %v4494 = vld [vmem:[%s7 + $0x508] sm:$0xff]
    %v4495 = vld [vmem:[%s7 + $0x510] sm:$0xff]
    %v4496 = vld [vmem:[%s7 + $0x518] sm:$0xff]
    %v4497 = vld [vmem:[%s7 + $0x520] sm:$0xff]
    %v4498 = vld [vmem:[%s7 + $0x528] sm:$0xff]
    %v4499 = vld [vmem:[%s7 + $0x530] sm:$0xff]
    %v4500 = vld [vmem:[%s7 + $0x538] sm:$0xff]
    %v4501 = vld [vmem:[%s7 + $0x540] sm:$0xff]
    %v4502 = vld [vmem:[%s7 + $0x548] sm:$0xff]
    %v4503 = vld [vmem:[%s7 + $0x550] sm:$0xff]
    %v4504 = vld [vmem:[%s7 + $0x558] sm:$0xff]
    %v4505 = vld [vmem:[%s7 + $0x560] sm:$0xff]
    %v4506 = vld [vmem:[%s7 + $0x568] sm:$0xff]
    %v4507 = vld [vmem:[%s7 + $0x570] sm:$0xff]
    %v4508 = vld [vmem:[%s7 + $0x578] sm:$0xff]
    %v4509 = vld [vmem:[%s7 + $0x580] sm:$0xff]
    %v4510 = vld [vmem:[%s7 + $0x588] sm:$0xff]
    %v4511 = vld [vmem:[%s7 + $0x590] sm:$0xff]
    %v4512 = vld [vmem:[%s7 + $0x598] sm:$0xff]
    %v4513 = vld [vmem:[%s7 + $0x5a0] sm:$0xff]
    %v4514 = vld [vmem:[%s7 + $0x5a8] sm:$0xff]
    %v4515 = vld [vmem:[%s7 + $0x5b0] sm:$0xff]
    %v4516 = vld [vmem:[%s7 + $0x5b8] sm:$0xff]
    %v4517 = vld [vmem:[%s7 + $0x5c0] sm:$0xff]
    %v4518 = vld [vmem:[%s7 + $0x5c8] sm:$0xff]
    %v4519 = vld [vmem:[%s7 + $0x5d0] sm:$0xff]
    %v4520 = vld [vmem:[%s7 + $0x5d8] sm:$0xff]
    %v4521 = vld [vmem:[%s7 + $0x5e0] sm:$0xff]
    %v4522 = vld [vmem:[%s7 + $0x5e8] sm:$0xff]
    %v4523 = vld [vmem:[%s7 + $0x5f0] sm:$0xff]
    %v4524 = vld [vmem:[%s7 + $0x5f8] sm:$0xff]
    %v4525 = vld [vmem:[%s8] sm:$0x3f]
    %v4527 = vlaneseq
    %v4528 = vshrl.u32 %v4527, 7
    %v4529 = vsub.s32 0, %v4528
    %v4530 = vrot.slane %v4525, %v4529
    %v4531 = vlaneseq
    %v4532 = vshrl.u32 %v4531, 7
    %v4533 = vsub.s32 1, %v4532
    %v4534 = vrot.slane %v4525, %v4533
    %v4535 = vlaneseq
    %v4536 = vshrl.u32 %v4535, 7
    %v4537 = vsub.s32 2, %v4536
    %v4538 = vrot.slane %v4525, %v4537
    %v4539 = vlaneseq
    %v4540 = vshrl.u32 %v4539, 7
    %v4541 = vsub.s32 3, %v4540
    %v4542 = vrot.slane %v4525, %v4541
    %v4543 = vlaneseq
    %v4544 = vshrl.u32 %v4543, 7
    %v4545 = vsub.s32 4, %v4544
    %v4546 = vrot.slane %v4525, %v4545
    %v4547 = vlaneseq
    %v4548 = vshrl.u32 %v4547, 7
    %v4549 = vsub.s32 5, %v4548
    %v4550 = vrot.slane %v4525, %v4549
    %4557 = vmatprep.subr.mxu0 %v4334
    %4558 = vmatpush1.msra.mxu0 %v4333
    %4559 = vmatprep.subr.mxu0 %v4340
    %4560 = vmatpush1.msra.mxu0 %v4339
    %4561 = vmatprep.subr.mxu0 %v4346
    %4562 = vmatpush1.msra.mxu0 %v4345
    %4563 = vmatprep.subr.mxu0 %v4352
    %4564 = vmatpush1.msra.mxu0 %v4351
    %4565 = vmatprep.subr.mxu0 %v4358
    %4566 = vmatpush1.msra.mxu0 %v4357
    %4567 = vmatprep.subr.mxu0 %v4364
    %4568 = vmatpush1.msra.mxu0 %v4363
    %4569 = vmatprep.subr.mxu0 %v4370
    %4570 = vmatpush1.msra.mxu0 %v4369
    %4571 = vmatprep.subr.mxu0 %v4376
    %4572 = vmatpush1.msra.mxu0 %v4375
    %4573 = vmatprep.subr.mxu0 %v4382
    %4574 = vmatpush1.msra.mxu0 %v4381
    %4575 = vmatprep.subr.mxu0 %v4388
    %4576 = vmatpush1.msra.mxu0 %v4387
    %4577 = vmatprep.subr.mxu0 %v4394
    %4578 = vmatpush1.msra.mxu0 %v4393
    %4579 = vmatprep.subr.mxu0 %v4400
    %4580 = vmatpush1.msra.mxu0 %v4399
    %4581 = vmatprep.subr.mxu0 %v4406
    %4582 = vmatpush1.msra.mxu0 %v4405
    %4583 = vmatprep.subr.mxu0 %v4412
    %4584 = vmatpush1.msra.mxu0 %v4411
    %4585 = vmatprep.subr.mxu0 %v4418
    %4586 = vmatpush1.msra.mxu0 %v4417
    %4587 = vmatprep.subr.mxu0 %v4424
    %4588 = vmatpush1.msra.mxu0 %v4423
    %4589 = vmatprep.subr.mxu0 %v4430
    %4590 = vmatpush1.msra.mxu0 %v4429
    %4591 = vmatprep.subr.mxu0 %v4436
    %4592 = vmatpush1.msra.mxu0 %v4435
    %4593 = vmatprep.subr.mxu0 %v4442
    %4594 = vmatpush1.msra.mxu0 %v4441
    %4595 = vmatprep.subr.mxu0 %v4448
    %4596 = vmatpush1.msra.mxu0 %v4447
    %4597 = vmatprep.subr.mxu0 %v4454
    %4598 = vmatpush1.msra.mxu0 %v4453
    %4599 = vmatprep.subr.mxu0 %v4460
    %4600 = vmatpush1.msra.mxu0 %v4459
    %4601 = vmatprep.subr.mxu0 %v4466
    %4602 = vmatpush1.msra.mxu0 %v4465
    %4603 = vmatprep.subr.mxu0 %v4472
    %4604 = vmatpush1.msra.mxu0 %v4471
    %4605 = vmatprep.subr.mxu0 %v4478
    %4606 = vmatpush1.msra.mxu0 %v4477
    %4607 = vmatprep.subr.mxu0 %v4484
    %4608 = vmatpush1.msra.mxu0 %v4483
    %4609 = vmatprep.subr.mxu0 %v4490
    %4610 = vmatpush1.msra.mxu0 %v4489
    %4611 = vmatprep.subr.mxu0 %v4496
    %4612 = vmatpush1.msra.mxu0 %v4495
    %4613 = vmatprep.subr.mxu0 %v4502
    %4614 = vmatpush1.msra.mxu0 %v4501
    %4615 = vmatprep.subr.mxu0 %v4508
    %4616 = vmatpush1.msra.mxu0 %v4507
    %4617 = vmatprep.subr.mxu0 %v4514
    %4618 = vmatpush1.msra.mxu0 %v4513
    %4619 = vmatprep.subr.mxu0 %v4520
    %4620 = vmatpush1.msra.mxu0 %v4519
    %4621 = vmatprep.mubr.f32.mxu0 %v4332
    %4622 = vmatmul.mubr.f32.gmra.mrb[0].mxu0 %v4331
    %v4623 = vpop.f32.mrb[0].mxu0
    %v4624 = vadd.f32 %v4530, %v4623
    %v4625 = vpop.f32.mrb[0].mxu0
    %v4626 = vadd.f32 %v4534, %v4625
    %4627 = vdwg.mxu0
    %4628 = vmatprep.subr.mxu0 %v4336
    %4629 = vmatpush1.msra.mxu0 %v4335
    %4630 = vmatprep.subr.mxu0 %v4342
    %4631 = vmatpush1.msra.mxu0 %v4341
    %4632 = vmatprep.subr.mxu0 %v4348
    %4633 = vmatpush1.msra.mxu0 %v4347
    %4634 = vmatprep.subr.mxu0 %v4354
    %4635 = vmatpush1.msra.mxu0 %v4353
    %4636 = vmatprep.subr.mxu0 %v4360
    %4637 = vmatpush1.msra.mxu0 %v4359
    %4638 = vmatprep.subr.mxu0 %v4366
    %4639 = vmatpush1.msra.mxu0 %v4365
    %4640 = vmatprep.subr.mxu0 %v4372
    %4641 = vmatpush1.msra.mxu0 %v4371
    %4642 = vmatprep.subr.mxu0 %v4378
    %4643 = vmatpush1.msra.mxu0 %v4377
    %4644 = vmatprep.subr.mxu0 %v4384
    %4645 = vmatpush1.msra.mxu0 %v4383
    %4646 = vmatprep.subr.mxu0 %v4390
    %4647 = vmatpush1.msra.mxu0 %v4389
    %4648 = vmatprep.subr.mxu0 %v4396
    %4649 = vmatpush1.msra.mxu0 %v4395
    %4650 = vmatprep.subr.mxu0 %v4402
    %4651 = vmatpush1.msra.mxu0 %v4401
    %4652 = vmatprep.subr.mxu0 %v4408
    %4653 = vmatpush1.msra.mxu0 %v4407
    %4654 = vmatprep.subr.mxu0 %v4414
    %4655 = vmatpush1.msra.mxu0 %v4413
    %4656 = vmatprep.subr.mxu0 %v4420
    %4657 = vmatpush1.msra.mxu0 %v4419
    %4658 = vmatprep.subr.mxu0 %v4426
    %4659 = vmatpush1.msra.mxu0 %v4425
    %4660 = vmatprep.subr.mxu0 %v4432
    %4661 = vmatpush1.msra.mxu0 %v4431
    %4662 = vmatprep.subr.mxu0 %v4438
    %4663 = vmatpush1.msra.mxu0 %v4437
    %4664 = vmatprep.subr.mxu0 %v4444
    %4665 = vmatpush1.msra.mxu0 %v4443
    %4666 = vmatprep.subr.mxu0 %v4450
    %4667 = vmatpush1.msra.mxu0 %v4449
    %4668 = vmatprep.subr.mxu0 %v4456
    %4669 = vmatpush1.msra.mxu0 %v4455
    %4670 = vmatprep.subr.mxu0 %v4462
    %4671 = vmatpush1.msra.mxu0 %v4461
    %4672 = vmatprep.subr.mxu0 %v4468
    %4673 = vmatpush1.msra.mxu0 %v4467
    %4674 = vmatprep.subr.mxu0 %v4474
    %4675 = vmatpush1.msra.mxu0 %v4473
    %4676 = vmatprep.subr.mxu0 %v4480
    %4677 = vmatpush1.msra.mxu0 %v4479
    %4678 = vmatprep.subr.mxu0 %v4486
    %4679 = vmatpush1.msra.mxu0 %v4485
    %4680 = vmatprep.subr.mxu0 %v4492
    %4681 = vmatpush1.msra.mxu0 %v4491
    %4682 = vmatprep.subr.mxu0 %v4498
    %4683 = vmatpush1.msra.mxu0 %v4497
    %4684 = vmatprep.subr.mxu0 %v4504
    %4685 = vmatpush1.msra.mxu0 %v4503
    %4686 = vmatprep.subr.mxu0 %v4510
    %4687 = vmatpush1.msra.mxu0 %v4509
    %4688 = vmatprep.subr.mxu0 %v4516
    %4689 = vmatpush1.msra.mxu0 %v4515
    %4690 = vmatprep.subr.mxu0 %v4522
    %4691 = vmatpush1.msra.mxu0 %v4521
    %4692 = vmatprep.mubr.f32.mxu0 %v4332
    %4693 = vmatmul.mubr.f32.gmra.mrb[0].mxu0 %v4331
    %v4694 = vpop.f32.mrb[0].mxu0
    %v4695 = vadd.f32 %v4538, %v4694
    %v4696 = vpop.f32.mrb[0].mxu0
    %v4697 = vadd.f32 %v4542, %v4696
    %4698 = vdwg.mxu0
    %4699 = vmatprep.subr.mxu0 %v4338
    %4700 = vmatpush1.msra.mxu0 %v4337
    %4701 = vmatprep.subr.mxu0 %v4344
    %4702 = vmatpush1.msra.mxu0 %v4343
    %4703 = vmatprep.subr.mxu0 %v4350
    %4704 = vmatpush1.msra.mxu0 %v4349
    %4705 = vmatprep.subr.mxu0 %v4356
    %4706 = vmatpush1.msra.mxu0 %v4355
    %4707 = vmatprep.subr.mxu0 %v4362
    %4708 = vmatpush1.msra.mxu0 %v4361
    %4709 = vmatprep.subr.mxu0 %v4368
    %4710 = vmatpush1.msra.mxu0 %v4367
    %4711 = vmatprep.subr.mxu0 %v4374
    %4712 = vmatpush1.msra.mxu0 %v4373
    %4713 = vmatprep.subr.mxu0 %v4380
    %4714 = vmatpush1.msra.mxu0 %v4379
    %4715 = vmatprep.subr.mxu0 %v4386
    %4716 = vmatpush1.msra.mxu0 %v4385
    %4717 = vmatprep.subr.mxu0 %v4392
    %4718 = vmatpush1.msra.mxu0 %v4391
    %4719 = vmatprep.subr.mxu0 %v4398
    %4720 = vmatpush1.msra.mxu0 %v4397
    %4721 = vmatprep.subr.mxu0 %v4404
    %4722 = vmatpush1.msra.mxu0 %v4403
    %4723 = vmatprep.subr.mxu0 %v4410
    %4724 = vmatpush1.msra.mxu0 %v4409
    %4725 = vmatprep.subr.mxu0 %v4416
    %4726 = vmatpush1.msra.mxu0 %v4415
    %4727 = vmatprep.subr.mxu0 %v4422
    %4728 = vmatpush1.msra.mxu0 %v4421
    %4729 = vmatprep.subr.mxu0 %v4428
    %4730 = vmatpush1.msra.mxu0 %v4427
    %4731 = vmatprep.subr.mxu0 %v4434
    %4732 = vmatpush1.msra.mxu0 %v4433
    %4733 = vmatprep.subr.mxu0 %v4440
    %4734 = vmatpush1.msra.mxu0 %v4439
    %4735 = vmatprep.subr.mxu0 %v4446
    %4736 = vmatpush1.msra.mxu0 %v4445
    %4737 = vmatprep.subr.mxu0 %v4452
    %4738 = vmatpush1.msra.mxu0 %v4451
    %4739 = vmatprep.subr.mxu0 %v4458
    %4740 = vmatpush1.msra.mxu0 %v4457
    %4741 = vmatprep.subr.mxu0 %v4464
    %4742 = vmatpush1.msra.mxu0 %v4463
    %4743 = vmatprep.subr.mxu0 %v4470
    %4744 = vmatpush1.msra.mxu0 %v4469
    %4745 = vmatprep.subr.mxu0 %v4476
    %4746 = vmatpush1.msra.mxu0 %v4475
    %4747 = vmatprep.subr.mxu0 %v4482
    %4748 = vmatpush1.msra.mxu0 %v4481
    %4749 = vmatprep.subr.mxu0 %v4488
    %4750 = vmatpush1.msra.mxu0 %v4487
    %4751 = vmatprep.subr.mxu0 %v4494
    %4752 = vmatpush1.msra.mxu0 %v4493
    %4753 = vmatprep.subr.mxu0 %v4500
    %4754 = vmatpush1.msra.mxu0 %v4499
    %4755 = vmatprep.subr.mxu0 %v4506
    %4756 = vmatpush1.msra.mxu0 %v4505
    %4757 = vmatprep.subr.mxu0 %v4512
    %4758 = vmatpush1.msra.mxu0 %v4511
    %4759 = vmatprep.subr.mxu0 %v4518
    %4760 = vmatpush1.msra.mxu0 %v4517
    %4761 = vmatprep.subr.mxu0 %v4524
    %4762 = vmatpush1.msra.mxu0 %v4523
    %4763 = vmatprep.mubr.f32.mxu0 %v4332
    %4764 = vmatmul.mubr.f32.gmra.mrb[0].mxu0 %v4331
    %v4765 = vpop.f32.mrb[0].mxu0
    %v4766 = vadd.f32 %v4546, %v4765
    %v4767 = vpop.f32.mrb[0].mxu0
    %v4768 = vadd.f32 %v4550, %v4767
    %4769 = vdwg.mxu0
    %v4776 = vcombine.low %v4624, %v4626
    %v4777 = vcombine.low %v4695, %v4697
    %v4778 = vcombine.low %v4766, %v4768
    %4782 = vst [vmem:[%s10] sm:$0xff] %v4776
    %4783 = vst [vmem:[%s10 + $0x8] sm:$0xff] %v4777
    %4784 = vst [vmem:[%s10 + $0x10] sm:$0xff] %v4778
    // Predicated region
    $region38: #{psgn_forward.2} parent=1 // pred_check
      _
    $region39: #{psgn_forward.2} parent=1 // pred_check_branch
      %4786 = sbr.rel (0) target = $region41
    $region40: #{psgn_forward.2} parent=1 // pred_region
      %s4788 = ssub.s32 64, 64
      %4789 = vsyncadd [#allocation3], %s4788
      %s4791 = sshll.u32 [#allocation2], 4
      %s4792 = int_to_ptr.vmem [resolvable:$true] %s4791
      %4794 = dma.vmem_to_hbm [thread:$0]  %s4792, 64, %s9, [#allocation3]
    $region41: #{psgn_forward.2} parent=1 // pred_fallthru
      _
    // Predicated region
    $region42: #{psgn_forward.2} parent=1 // pred_check
      _
    $region43: #{psgn_forward.2} parent=1 // pred_check_branch
      %4796 = sbr.rel (0) target = $region45
    $region44: #{psgn_forward.2} parent=1 // pred_region
      _
    $region45: #{psgn_forward.2} parent=1 // pred_fallthru
      _
    // Predicated region
    $region46: #{psgn_forward.2} parent=1 // pred_check
      _
    $region47: #{psgn_forward.2} parent=1 // pred_check_branch
      %4798 = sbr.rel (0) target = $region49
    $region48: #{psgn_forward.2} parent=1 // pred_region
      %4799 = dma.done [#allocation3], 64
    $region49: #{psgn_forward.2} parent=1 // pred_fallthru
      _
    // Predicated region
    $region50: #{psgn_forward.2} parent=1 // pred_check
      _
    $region51: #{psgn_forward.2} parent=1 // pred_check_branch
      %4801 = sbr.rel (0) target = $region53
    $region52: #{psgn_forward.2} parent=1 // pred_region
      _
    $region53: #{psgn_forward.2} parent=1 // pred_fallthru
      _
    %4802 = vsyncpa [#allocation3], 1

// kernel: psgn_forward.3
$region0: #{psgn_forward.3}
  #allocation0 [shape = 'u32[]', space=smem, size = 0x4, offset = 0x4, fixed_abs, tag = 'smem constant byte address 0x4 - core index']
  #allocation1 [shape = 'u32[144,128]{1,0:T(1,128)}', space=vmem, size = 0x12000, scoped, tag = 'internal scratch']
  %s0 = inlined_call_operand.vmem [shape: f32[2,2,3,256], index: 0, kind: input, shape index: {}]
  %s1 = inlined_call_operand.vmem [shape: f32[2,2,3,3], index: 1, kind: input, shape index: {}]
  %s2 = inlined_call_operand.vmem [shape: f32[2,2,3,1], index: 2, kind: input, shape index: {}]
  %s3 = inlined_call_operand.vmem [shape: f32[2,2,3,256], index: 3, kind: output, shape index: {0}]
  %s4 = inlined_call_operand.vmem [shape: f32[2,2,3,256], index: 4, kind: output, shape index: {1}]
  %5 = xla_tuple %s3, %s4
  %s6 = sld [smem:[#allocation0]]
  $region53: #{psgn_forward.3} parent=0
    _
  %s8 = ssub.s32 1, %s6
  %s9 = scalar_select 0, %s8, %s6
  loop: start=0, step=1, limit=4
  $region2: #{psgn_forward.3} parent=0 // loop_pre_header
    _
  $region3: #{psgn_forward.3} parent=0 // loop_header
    %s11 = sphi 0, %s15
    %p12 = scmp.ge.s32.totalorder %s11, 4
    %s21 = sphi 0, %s23
    %s24 = sphi 0, %s21
    %s25 = sphi 0, %s24
    %s41 = sphi 0, %s25
    %s47 = sphi 0, %s49
    %s50 = sphi 0, %s47
    %s51 = sphi 0, %s50
    %s67 = sphi 0, %s51
    %s73 = sphi 0, %s75
    %s76 = sphi 0, %s73
    %s77 = sphi 0, %s76
    %s93 = sphi 0, %s77
    %s99 = sphi 0, %s101
    %s102 = sphi 0, %s99
    %s103 = sphi 0, %s102
    %s119 = sphi 0, %s103
    %s125 = sphi 0, %s127
    %s128 = sphi 0, %s125
    %s129 = sphi 0, %s128
    %s145 = sphi 0, %s129
  $region4: #{psgn_forward.3} parent=0 // loop_header_branch
    %14 = sbr.rel (%p12) target = $region8
  $region5: #{psgn_forward.3} parent=0 // loop_body
    %s16 = ssub.s32 %s11, 1
    %s17 = ssub.s32 %s11, 2
    %s18 = sadd.s32 %s11, 1
    %s19 = ssub.s32 %s11, %s18
    %p20 = scmp.eq.s32.totalorder %s19, 0
    %s22 = sadd.s32 %s21, 1
    %s23 = scalar_select %p20, %s21, %s22
    %p26 = pneg %p20
    %p27 = scmp.eq.s32.totalorder %s11, 1
    %p28 = por %p26, %p27
    %p29 = scmp.ne.s32.totalorder %s21, %s24
    %p30 = scmp.eq.s32.totalorder %s11, 0
    %p31 = por %p29, %p30
    %p32 = scmp.ne.s32.totalorder %s21, %s24
    %p33 = scmp.eq.s32.totalorder %s16, 1
    %p34 = por %p32, %p33
    %p35 = scmp.ne.s32.totalorder %s24, %s25
    %p36 = scmp.eq.s32.totalorder %s16, 0
    %p37 = por %p35, %p36
    %p38 = scmp.ne.s32.totalorder %s24, %s25
    %p39 = scmp.eq.s32.totalorder %s17, 1
    %p40 = por %p38, %p39
    %p42 = scmp.ne.s32.totalorder %s25, %s41
    %p43 = scmp.eq.s32.totalorder %s17, 0
    %p44 = por %p42, %p43
    %s45 = ssub.s32 %s11, %s18
    %p46 = scmp.eq.s32.totalorder %s45, 0
    %s48 = sadd.s32 %s47, 1
    %s49 = scalar_select %p46, %s47, %s48
    %p52 = pneg %p46
    %p53 = scmp.eq.s32.totalorder %s11, 1
    %p54 = por %p52, %p53
    %p55 = scmp.ne.s32.totalorder %s47, %s50
    %p56 = scmp.eq.s32.totalorder %s11, 0
    %p57 = por %p55, %p56
    %p58 = scmp.ne.s32.totalorder %s47, %s50
    %p59 = scmp.eq.s32.totalorder %s16, 1
    %p60 = por %p58, %p59
    %p61 = scmp.ne.s32.totalorder %s50, %s51
    %p62 = scmp.eq.s32.totalorder %s16, 0
    %p63 = por %p61, %p62
    %p64 = scmp.ne.s32.totalorder %s50, %s51
    %p65 = scmp.eq.s32.totalorder %s17, 1
    %p66 = por %p64, %p65
    %p68 = scmp.ne.s32.totalorder %s51, %s67
    %p69 = scmp.eq.s32.totalorder %s17, 0
    %p70 = por %p68, %p69
    %s71 = ssub.s32 %s11, %s18
    %p72 = scmp.eq.s32.totalorder %s71, 0
    %s74 = sadd.s32 %s73, 1
    %s75 = scalar_select %p72, %s73, %s74
    %p78 = pneg %p72
    %p79 = scmp.eq.s32.totalorder %s11, 1
    %p80 = por %p78, %p79
    %p81 = scmp.ne.s32.totalorder %s73, %s76
    %p82 = scmp.eq.s32.totalorder %s11, 0
    %p83 = por %p81, %p82
    %p84 = scmp.ne.s32.totalorder %s73, %s76
    %p85 = scmp.eq.s32.totalorder %s16, 1
    %p86 = por %p84, %p85
    %p87 = scmp.ne.s32.totalorder %s76, %s77
    %p88 = scmp.eq.s32.totalorder %s16, 0
    %p89 = por %p87, %p88
    %p90 = scmp.ne.s32.totalorder %s76, %s77
    %p91 = scmp.eq.s32.totalorder %s17, 1
    %p92 = por %p90, %p91
    %p94 = scmp.ne.s32.totalorder %s77, %s93
    %p95 = scmp.eq.s32.totalorder %s17, 0
    %p96 = por %p94, %p95
    %s97 = ssub.s32 %s11, %s18
    %p98 = scmp.eq.s32.totalorder %s97, 0
    %s100 = sadd.s32 %s99, 1
    %s101 = scalar_select %p98, %s99, %s100
    %p104 = pneg %p98
    %p105 = scmp.eq.s32.totalorder %s11, 1
    %p106 = por %p104, %p105
    %p107 = scmp.ne.s32.totalorder %s99, %s102
    %p108 = scmp.eq.s32.totalorder %s11, 0
    %p109 = por %p107, %p108
    %p110 = scmp.ne.s32.totalorder %s99, %s102
    %p111 = scmp.eq.s32.totalorder %s16, 1
    %p112 = por %p110, %p111
    %p113 = scmp.ne.s32.totalorder %s102, %s103
    %p114 = scmp.eq.s32.totalorder %s16, 0
    %p115 = por %p113, %p114
    %p116 = scmp.ne.s32.totalorder %s102, %s103
    %p117 = scmp.eq.s32.totalorder %s17, 1
    %p118 = por %p116, %p117
    %p120 = scmp.ne.s32.totalorder %s103, %s119
    %p121 = scmp.eq.s32.totalorder %s17, 0
    %p122 = por %p120, %p121
    %s123 = ssub.s32 %s11, %s18
    %p124 = scmp.eq.s32.totalorder %s123, 0
    %s126 = sadd.s32 %s125, 1
    %s127 = scalar_select %p124, %s125, %s126
    %p130 = pneg %p124
    %p131 = scmp.eq.s32.totalorder %s11, 1
    %p132 = por %p130, %p131
    %p133 = scmp.ne.s32.totalorder %s125, %s128
    %p134 = scmp.eq.s32.totalorder %s11, 0
    %p135 = por %p133, %p134
    %p136 = scmp.ne.s32.totalorder %s125, %s128
    %p137 = scmp.eq.s32.totalorder %s16, 1
    %p138 = por %p136, %p137
    %p139 = scmp.ne.s32.totalorder %s128, %s129
    %p140 = scmp.eq.s32.totalorder %s16, 0
    %p141 = por %p139, %p140
    %p142 = scmp.ne.s32.totalorder %s128, %s129
    %p143 = scmp.eq.s32.totalorder %s17, 1
    %p144 = por %p142, %p143
    %p146 = scmp.ne.s32.totalorder %s129, %s145
    %p147 = scmp.eq.s32.totalorder %s17, 0
    %p148 = por %p146, %p147
    %p149 = scmp.le.s32.totalorder 1, %s11
    %p150 = scmp.lt.s32.totalorder %s11, 3
    %p151 = pnand %p149, %p150
    %p152 = pneg %p151
    // Predicated region
    $region9: #{psgn_forward.3} parent=5 // pred_check
      _
    $region10: #{psgn_forward.3} parent=5 // pred_check_branch
      %154 = sbr.rel (%p151) target = $region12
    $region11: #{psgn_forward.3} parent=5 // pred_region
      %s155 = ssub.s32 %s11, 1
    $region12: #{psgn_forward.3} parent=5 // pred_fallthru
      _
    %p156 = scmp.lt.s32.totalorder %s11, 2
    // Predicated region
    $region13: #{psgn_forward.3} parent=5 // pred_check
      %p157 = pneg %p156
    $region14: #{psgn_forward.3} parent=5 // pred_check_branch
      %159 = sbr.rel (%p157) target = $region16
    $region15: #{psgn_forward.3} parent=5 // pred_region
      // Predicated region
      $region17: #{psgn_forward.3} parent=15 // pred_check
        %p160 = pneg %p31
      $region18: #{psgn_forward.3} parent=15 // pred_check_branch
        %162 = sbr.rel (%p160) target = $region20
      $region19: #{psgn_forward.3} parent=15 // pred_region
        %p163 = scmp.lt.s32.totalorder %s11, 1
        %s164 = scalar_select %p163, %s11, 1
        %s165 = smul.addr %s164, 4
        %s166 = smul.addr %s165, 4
        %s167 = scalar_lea.vmem %s0, %s166
      $region20: #{psgn_forward.3} parent=15 // pred_fallthru
        _
      // Predicated region
      $region21: #{psgn_forward.3} parent=15 // pred_check
        %p168 = pneg %p57
      $region22: #{psgn_forward.3} parent=15 // pred_check_branch
        %170 = sbr.rel (%p168) target = $region24
      $region23: #{psgn_forward.3} parent=15 // pred_region
        %p171 = scmp.lt.s32.totalorder %s11, 1
        %s172 = scalar_select %p171, %s11, 1
        %s173 = smul.addr %s172, 2
        %s174 = smul.addr %s173, 4
        %s175 = scalar_lea.vmem %s1, %s174
      $region24: #{psgn_forward.3} parent=15 // pred_fallthru
        _
      // Predicated region
      $region25: #{psgn_forward.3} parent=15 // pred_check
        %p176 = pneg %p83
      $region26: #{psgn_forward.3} parent=15 // pred_check_branch
        %178 = sbr.rel (%p176) target = $region28
      $region27: #{psgn_forward.3} parent=15 // pred_region
        %p179 = scmp.lt.s32.totalorder %s11, 1
        %s180 = scalar_select %p179, %s11, 1
        %s181 = smul.addr %s180, 2
        %s182 = smul.addr %s181, 4
        %s183 = scalar_lea.vmem %s2, %s182
      $region28: #{psgn_forward.3} parent=15 // pred_fallthru
        _
    $region16: #{psgn_forward.3} parent=5 // pred_fallthru
      _
    %p184 = scmp.le.s32.totalorder 1, %s11
    %p185 = scmp.lt.s32.totalorder %s11, 3
    %p186 = pnand %p184, %p185
    %p187 = pneg %p186
    // Predicated region
    $region29: #{psgn_forward.3} parent=5 // pred_check
      _
    $region30: #{psgn_forward.3} parent=5 // pred_check_branch
      %189 = sbr.rel (%p186) target = $region32
    $region31: #{psgn_forward.3} parent=5 // pred_region
      %s190 = ssub.s32 %s11, 1
      %p191 = scmp.lt.s32.totalorder %s16, 1
      %s192 = scalar_select %p191, %s16, 1
      %s193 = smul.addr %s192, 4
      %s194 = smul.addr %s193, 4
      %s195 = scalar_lea.vmem %s0, %s194
      %p196 = pneg %p37
      %p197 = pneg %p34
      %p198 = scmp.lt.s32.totalorder %s16, 1
      %s199 = scalar_select %p198, %s16, 1
      %s200 = smul.addr %s199, 2
      %s201 = smul.addr %s200, 4
      %s202 = scalar_lea.vmem %s1, %s201
      %p203 = pneg %p63
      %p204 = pneg %p60
      %p205 = scmp.lt.s32.totalorder %s16, 1
      %s206 = scalar_select %p205, %s16, 1
      %s207 = smul.addr %s206, 2
      %s208 = smul.addr %s207, 4
      %s209 = scalar_lea.vmem %s2, %s208
      %p210 = pneg %p89
      %p211 = pneg %p86
      %p212 = pneg %p115
      %p213 = pneg %p112
      %p214 = scmp.lt.s32.totalorder %s16, 1
      %s215 = scalar_select %p214, %s16, 1
      %s216 = smul.addr %s215, 4
      %s217 = smul.addr %s216, 4
      %s218 = scalar_lea.vmem %s3, %s217
      %p219 = pneg %p141
      %p220 = pneg %p138
      %p221 = scmp.lt.s32.totalorder %s16, 1
      %s222 = scalar_select %p221, %s16, 1
      %s223 = smul.addr %s222, 4
      %s224 = smul.addr %s223, 4
      %s225 = scalar_lea.vmem %s4, %s224
      %p226 = scmp.lt.s32.totalorder %s16, 1
      %s227 = scalar_select %p226, %s16, 1
      %s228 = smul.addr %s227, 4
      %s229 = smul.addr %s228, 4
      %s230 = scalar_lea.vmem %s0, %s229
      %p231 = scmp.lt.s32.totalorder %s16, 1
      %s232 = scalar_select %p231, %s16, 1
      %s233 = smul.addr %s232, 2
      %s234 = smul.addr %s233, 4
      %s235 = scalar_lea.vmem %s1, %s234
      %p236 = scmp.lt.s32.totalorder %s16, 1
      %s237 = scalar_select %p236, %s16, 1
      %s238 = smul.addr %s237, 2
      %s239 = smul.addr %s238, 4
      %s240 = scalar_lea.vmem %s2, %s239
      %p241 = scmp.lt.s32.totalorder %s16, 1
      %s242 = scalar_select %p241, %s16, 1
      %s243 = smul.addr %s242, 4
      %s244 = smul.addr %s243, 4
      %s245 = scalar_lea.vmem %s3, %s244
      %p246 = scmp.lt.s32.totalorder %s16, 1
      %s247 = scalar_select %p246, %s16, 1
      %s248 = smul.addr %s247, 4
      %s249 = smul.addr %s248, 4
      %s250 = scalar_lea.vmem %s4, %s249
      %v251 = vld [vmem:[%s230] sm:$0x77]
      %v252 = vld [vmem:[%s235] sm:$0x7]
      %v253 = vld [vmem:[%s240] sm:$0x7]
      %255 = vset.pattern.permute.xlu0 0
      %256 = vperm.xlu0 %255, %v252
      %v257 = vpop.permute.xlu0 %256
      %v260 = vlaneseq
      %v261 = vshrl.u32 %v260, 7
      %v262 = vsub.s32 0, %v261
      %v263 = vrot.slane %v251, %v262
      %v264 = vlaneseq
      %v265 = vshrl.u32 %v264, 7
      %v266 = vsub.s32 4, %v265
      %v267 = vrot.slane %v251, %v266
      %v270 = vlaneseq
      %v271 = vshrl.u32 %v270, 7
      %v272 = vsub.s32 0, %v271
      %v273 = vrot.slane %v263, %v272
      %v274 = vlaneseq
      %v275 = vshrl.u32 %v274, 7
      %v276 = vsub.s32 0, %v275
      %v277 = vrot.slane %v267, %v276
      %v278 = vmul.f32 %v257, %v273
      %v279 = vmul.f32 %v257, %v277
      %280 = vset.pattern.permute.xlu0 1
      %281 = vperm.xlu0 %280, %v252
      %v282 = vpop.permute.xlu0 %281
      %v284 = vlaneseq
      %v285 = vshrl.u32 %v284, 7
      %v286 = vsub.s32 1, %v285
      %v287 = vrot.slane %v251, %v286
      %v288 = vlaneseq
      %v289 = vshrl.u32 %v288, 7
      %v290 = vsub.s32 5, %v289
      %v291 = vrot.slane %v251, %v290
      %v294 = vlaneseq
      %v295 = vshrl.u32 %v294, 7
      %v296 = vsub.s32 1, %v295
      %v297 = vrot.slane %v287, %v296
      %v298 = vlaneseq
      %v299 = vshrl.u32 %v298, 7
      %v300 = vsub.s32 1, %v299
      %v301 = vrot.slane %v291, %v300
      %v302 = vmul.f32 %v282, %v297
      %v303 = vmul.f32 %v282, %v301
      %v304 = vadd.f32 %v278, %v302
      %v305 = vadd.f32 %v279, %v303
      %306 = vset.pattern.permute.xlu0 2
      %307 = vperm.xlu0 %306, %v252
      %v308 = vpop.permute.xlu0 %307
      %v310 = vlaneseq
      %v311 = vshrl.u32 %v310, 7
      %v312 = vsub.s32 2, %v311
      %v313 = vrot.slane %v251, %v312
      %v314 = vlaneseq
      %v315 = vshrl.u32 %v314, 7
      %v316 = vsub.s32 6, %v315
      %v317 = vrot.slane %v251, %v316
      %v320 = vlaneseq
      %v321 = vshrl.u32 %v320, 7
      %v322 = vsub.s32 2, %v321
      %v323 = vrot.slane %v313, %v322
      %v324 = vlaneseq
      %v325 = vshrl.u32 %v324, 7
      %v326 = vsub.s32 2, %v325
      %v327 = vrot.slane %v317, %v326
      %v328 = vmul.f32 %v308, %v323
      %v329 = vmul.f32 %v308, %v327
      %v330 = vadd.f32 %v304, %v328
      %v331 = vadd.f32 %v305, %v329
      %333 = vset.pattern.permute.xlu0 0
      %334 = vperm.xlu0 %333, %v253
      %v335 = vpop.permute.xlu0 %334
      %v337 = vadd.f32 %v330, %v335
      %v338 = vadd.f32 %v331, %v335
      %v341 = vcombine.low %v337, %v338
      %343 = vst [vmem:[%s245] sm:$0x77] %v341
      %s344 = scalar_lea.vmem %s230, 8
      %v345 = vld [vmem:[%s344] sm:$0x77]
      %s346 = scalar_lea.vmem %s235, 4
      %v347 = vld [vmem:[%s346] sm:$0x7]
      %s348 = scalar_lea.vmem %s240, 4
      %v349 = vld [vmem:[%s348] sm:$0x7]
      %351 = vset.pattern.permute.xlu0 0
      %352 = vperm.xlu0 %351, %v347
      %v353 = vpop.permute.xlu0 %352
      %v356 = vlaneseq
      %v357 = vshrl.u32 %v356, 7
      %v358 = vsub.s32 0, %v357
      %v359 = vrot.slane %v345, %v358
      %v360 = vlaneseq
      %v361 = vshrl.u32 %v360, 7
      %v362 = vsub.s32 4, %v361
      %v363 = vrot.slane %v345, %v362
      %v366 = vlaneseq
      %v367 = vshrl.u32 %v366, 7
      %v368 = vsub.s32 0, %v367
      %v369 = vrot.slane %v359, %v368
      %v370 = vlaneseq
      %v371 = vshrl.u32 %v370, 7
      %v372 = vsub.s32 0, %v371
      %v373 = vrot.slane %v363, %v372
      %v374 = vmul.f32 %v353, %v369
      %v375 = vmul.f32 %v353, %v373
      %376 = vset.pattern.permute.xlu0 1
      %377 = vperm.xlu0 %376, %v347
      %v378 = vpop.permute.xlu0 %377
      %v380 = vlaneseq
      %v381 = vshrl.u32 %v380, 7
      %v382 = vsub.s32 1, %v381
      %v383 = vrot.slane %v345, %v382
      %v384 = vlaneseq
      %v385 = vshrl.u32 %v384, 7
      %v386 = vsub.s32 5, %v385
      %v387 = vrot.slane %v345, %v386
      %v390 = vlaneseq
      %v391 = vshrl.u32 %v390, 7
      %v392 = vsub.s32 1, %v391
      %v393 = vrot.slane %v383, %v392
      %v394 = vlaneseq
      %v395 = vshrl.u32 %v394, 7
      %v396 = vsub.s32 1, %v395
      %v397 = vrot.slane %v387, %v396
      %v398 = vmul.f32 %v378, %v393
      %v399 = vmul.f32 %v378, %v397
      %v400 = vadd.f32 %v374, %v398
      %v401 = vadd.f32 %v375, %v399
      %402 = vset.pattern.permute.xlu0 2
      %403 = vperm.xlu0 %402, %v347
      %v404 = vpop.permute.xlu0 %403
      %v406 = vlaneseq
      %v407 = vshrl.u32 %v406, 7
      %v408 = vsub.s32 2, %v407
      %v409 = vrot.slane %v345, %v408
      %v410 = vlaneseq
      %v411 = vshrl.u32 %v410, 7
      %v412 = vsub.s32 6, %v411
      %v413 = vrot.slane %v345, %v412
      %v416 = vlaneseq
      %v417 = vshrl.u32 %v416, 7
      %v418 = vsub.s32 2, %v417
      %v419 = vrot.slane %v409, %v418
      %v420 = vlaneseq
      %v421 = vshrl.u32 %v420, 7
      %v422 = vsub.s32 2, %v421
      %v423 = vrot.slane %v413, %v422
      %v424 = vmul.f32 %v404, %v419
      %v425 = vmul.f32 %v404, %v423
      %v426 = vadd.f32 %v400, %v424
      %v427 = vadd.f32 %v401, %v425
      %429 = vset.pattern.permute.xlu0 0
      %430 = vperm.xlu0 %429, %v349
      %v431 = vpop.permute.xlu0 %430
      %v433 = vadd.f32 %v426, %v431
      %v434 = vadd.f32 %v427, %v431
      %v437 = vcombine.low %v433, %v434
      %s439 = scalar_lea.vmem %s245, 8
      %440 = vst [vmem:[%s439] sm:$0x77] %v437
      %vm441 = vcmask 1042432
      %v442 = vsel %vm441, %v337, 0.0
      %v443 = vsel %vm441, %v338, 0.0
      %v444 = vadd.f32 %v442, %v443
      %445 = vadd.xlane.f32.xlu0 %v444
      %v446 = vpop.xlane.xlu0 %445
      %v447 = vsel %vm441, %v433, 0.0
      %v448 = vsel %vm441, %v434, 0.0
      %v449 = vadd.f32 %v447, %v448
      %450 = vadd.xlane.f32.xlu0 %v449
      %v451 = vpop.xlane.xlu0 %450
      %v452 = vrcp.pop 256.0
      %v453 = vmul.f32 %v446, %v452
      %v454 = vmul.f32 %v451, %v452
      %v455 = vsel %vm441, %v453, 0.0
      %v456 = vsel %vm441, %v454, 0.0
      %v457 = vadd.f32 %v455, %v456
      %v458 = vrcp.pop 2.0
      %v459 = vmul.f32 %v457, %v458
      %v460 = vsub.f32 %v337, %v453
      %v461 = vsub.f32 %v338, %v453
      %v462 = vsub.f32 %v433, %v454
      %v463 = vsub.f32 %v434, %v454
      %v464 = vadd.f32 %v460, %v459
      %v465 = vadd.f32 %v461, %v459
      %v466 = vadd.f32 %v462, %v459
      %v467 = vadd.f32 %v463, %v459
      %v472 = vcombine.low %v464, %v465
      %v473 = vcombine.low %v466, %v467
      %476 = vst [vmem:[%s250] sm:$0x77] %v472
      %477 = vst [vmem:[%s250 + $0x8] sm:$0x77] %v473
      %p478 = scmp.lt.s32.totalorder %s16, 1
      %s479 = scalar_select %p478, %s16, 1
      %s480 = smul.addr %s479, 4
      %s481 = smul.addr %s480, 4
      %s482 = scalar_lea.vmem %s3, %s481
      %p483 = scmp.lt.s32.totalorder %s16, 1
      %s484 = scalar_select %p483, %s16, 1
      %s485 = smul.addr %s484, 4
      %s486 = smul.addr %s485, 4
      %s487 = scalar_lea.vmem %s4, %s486
      // Predicated region
      $region33: #{psgn_forward.3} parent=31 // pred_check
        %p488 = pneg %p112
      $region34: #{psgn_forward.3} parent=31 // pred_check_branch
        %490 = sbr.rel (%p488) target = $region36
      $region35: #{psgn_forward.3} parent=31 // pred_region
        _
      $region36: #{psgn_forward.3} parent=31 // pred_fallthru
        _
      // Predicated region
      $region37: #{psgn_forward.3} parent=31 // pred_check
        %p491 = pneg %p138
      $region38: #{psgn_forward.3} parent=31 // pred_check_branch
        %493 = sbr.rel (%p491) target = $region40
      $region39: #{psgn_forward.3} parent=31 // pred_region
        _
      $region40: #{psgn_forward.3} parent=31 // pred_fallthru
        _
    $region32: #{psgn_forward.3} parent=5 // pred_fallthru
      _
    %p494 = scmp.le.s32.totalorder 2, %s11
    // Predicated region
    $region41: #{psgn_forward.3} parent=5 // pred_check
      %p495 = pneg %p494
    $region42: #{psgn_forward.3} parent=5 // pred_check_branch
      %497 = sbr.rel (%p495) target = $region44
    $region43: #{psgn_forward.3} parent=5 // pred_region
      %s498 = ssub.s32 %s11, 2
      // Predicated region
      $region45: #{psgn_forward.3} parent=43 // pred_check
        %p499 = pneg %p118
      $region46: #{psgn_forward.3} parent=43 // pred_check_branch
        %501 = sbr.rel (%p499) target = $region48
      $region47: #{psgn_forward.3} parent=43 // pred_region
        %p502 = scmp.lt.s32.totalorder %s17, 1
        %s503 = scalar_select %p502, %s17, 1
        %s504 = smul.addr %s503, 4
        %s505 = smul.addr %s504, 4
        %s506 = scalar_lea.vmem %s3, %s505
      $region48: #{psgn_forward.3} parent=43 // pred_fallthru
        _
      // Predicated region
      $region49: #{psgn_forward.3} parent=43 // pred_check
        %p507 = pneg %p144
      $region50: #{psgn_forward.3} parent=43 // pred_check_branch
        %509 = sbr.rel (%p507) target = $region52
      $region51: #{psgn_forward.3} parent=43 // pred_region
        %p510 = scmp.lt.s32.totalorder %s17, 1
        %s511 = scalar_select %p510, %s17, 1
        %s512 = smul.addr %s511, 4
        %s513 = smul.addr %s512, 4
        %s514 = scalar_lea.vmem %s4, %s513
      $region52: #{psgn_forward.3} parent=43 // pred_fallthru
        _
    $region44: #{psgn_forward.3} parent=5 // pred_fallthru
      _
  $region6: #{psgn_forward.3} parent=0 // loop_footer
    %s15 = sadd.s32 1, %s11
  $region7: #{psgn_forward.3} parent=0 // loop_footer_branch
    %10 = sbr.rel target = $region3
  $region8: #{psgn_forward.3} parent=0 // loop_exit
    _

</llo_original>
